<compile_context>
chip_gen: v7x
topology: tpu7x:2x2x1
jax: 0.10.0
libtpu: 0.0.40
codegen_flags: <defaults>
</compile_context>

<pallas_src>
import numpy as np
import jax
import jax.numpy as jnp
from jax.experimental import pallas as pl
from jax.experimental.pallas import tpu as pltpu


# ----------------------------------------------------------------------------
# Kernel: per-token 3-layer MLP (exact CNN-collapse), tiled over tokens.
# ----------------------------------------------------------------------------
def _ddcnn_kernel(x_ref, w1_ref, b1_ref, w2_ref, b2_ref, w3_ref, b3_ref, o_ref):
    # Layer 1: conv_1 (1->32, width 7) as banded matmul, + ReLU.
    h1 = jnp.dot(x_ref[...], w1_ref[...], preferred_element_type=jnp.float32)
    h1 = jnp.maximum(h1 + b1_ref[...], 0.0)
    # Layer 2: AvgPool2d((1,2)) folded into conv_2 (32->16, width 5), + ReLU.
    h2 = jnp.dot(h1.astype(w2_ref.dtype), w2_ref[...],
                 preferred_element_type=jnp.float32)
    h2 = jnp.maximum(h2 + b2_ref[...], 0.0)
    # Layer 3: conv_3 (16->C, width 5) -> (TM, C), + sigmoid.
    y = jnp.dot(h2.astype(w3_ref.dtype), w3_ref[...],
                preferred_element_type=jnp.float32)
    # TODO(synk): only the default 'sigmoid' activation is implemented; the
    # 'softmax' variant normalizes over the sequence axis (crosses tiles) and
    # would need a second pass.
    o_ref[...] = jax.nn.sigmoid(y + b3_ref[...]).astype(o_ref.dtype)


# ----------------------------------------------------------------------------
# One-time host glue: fold the three convs + avg-pool into dense matrices.
# Conv weights use the PyTorch layout: (out_ch, in_ch, 1, kw), bias (out_ch,).
# Flattened feature ordering is position-major, channel-minor.
# ----------------------------------------------------------------------------
def _fold_conv_params(conv_params):
    w1, b1, w2, b2, w3, b3 = (np.asarray(p, np.float32) for p in conv_params)
    C = w3.shape[0]
    D, K1, H1 = 24, 7, 32
    P1 = D - K1 + 1            # 18
    Q = P1 // 2                # 9  (after AvgPool (1,2))
    K2, H2 = 5, 16
    P2 = Q - K2 + 1            # 5
    K3 = 5                     # conv_3 width -> output width 1

    # Layer 1: (24, 18*32);  W1_big[p+j, p*32+o] = w1[o,0,0,j]
    W1_big = np.zeros((D, P1 * H1), np.float32)
    for p in range(P1):
        for j in range(K1):
            W1_big[p + j, p * H1:(p + 1) * H1] = w1[:, 0, 0, j]
    b1_big = np.tile(b1, P1)[None, :]                         # (1, 576)

    # Avg-pool matrix (576, 288): pooled[q,c] = 0.5*(h1[2q,c] + h1[2q+1,c])
    P = np.zeros((P1 * H1, Q * H1), np.float32)
    for q in range(Q):
        for c in range(H1):
            P[(2 * q) * H1 + c, q * H1 + c] = 0.5
            P[(2 * q + 1) * H1 + c, q * H1 + c] = 0.5

    # Layer 2 over pooled input: (288, 80); W2_big[(t+k)*32+c, t*16+o]=w2[o,c,0,k]
    W2_big = np.zeros((Q * H1, P2 * H2), np.float32)
    for t in range(P2):
        for k in range(K2):
            W2_big[(t + k) * H1:(t + k + 1) * H1,
                   t * H2:(t + 1) * H2] = w2[:, :, 0, k].T    # (32, 16)
    W2_eff = P @ W2_big                                       # pool folded in
    b2_big = np.tile(b2, P2)[None, :]                         # (1, 80)

    # Layer 3: (80, C);  W3_big[k*16+c, o] = w3[o,c,0,k]
    W3_big = np.zeros((P2 * H2, C), np.float32)
    for k in range(K3):
        W3_big[k * H2:(k + 1) * H2, :] = w3[:, :, 0, k].T     # (16, C)
    b3_big = b3[None, :]                                      # (1, C)

    return (jnp.asarray(W1_big, jnp.bfloat16), jnp.asarray(b1_big, jnp.float32),
            jnp.asarray(W2_eff, jnp.bfloat16), jnp.asarray(b2_big, jnp.float32),
            jnp.asarray(W3_big, jnp.bfloat16), jnp.asarray(b3_big, jnp.float32))


# ----------------------------------------------------------------------------
# Wrapper
# ----------------------------------------------------------------------------
def degree_days_cnn(temperature, conv_params, num_out_channels=1, tm_max=512):
    """temperature: (B, S, 24).  Returns (B, S) if C==1 else (B, C, S)."""
    B, S, D = temperature.shape
    assert D == 24, "DegreeDaysCNN expects 24 measurements per day"
    w1, b1, w2, b2, w3, b3 = _fold_conv_params(conv_params)
    C = w3.shape[1]
    assert C == num_out_channels

    # Token-tile size: multiple of 128, capped at tm_max, padded M sliced off.
    M = B * S
    n_tiles = -(-M // tm_max)
    TM = ((-(-M // n_tiles) + 127) // 128) * 128
    M_pad = n_tiles * TM

    # Single fused cast+pad pass of the dominant stream (bf16 halves HBM read).
    x = temperature.reshape(M, D).astype(jnp.bfloat16)
    x = jnp.pad(x, ((0, M_pad - M), (0, 0)))

    out = pl.pallas_call(
        _ddcnn_kernel,
        out_shape=jax.ShapeDtypeStruct((M_pad, C), jnp.float32),
        grid=(n_tiles,),
        in_specs=[
            pl.BlockSpec((TM, D), lambda i: (i, 0)),          # streamed tokens
            pl.BlockSpec(w1.shape, lambda i: (0, 0)),         # VMEM-resident
            pl.BlockSpec(b1.shape, lambda i: (0, 0)),
            pl.BlockSpec(w2.shape, lambda i: (0, 0)),
            pl.BlockSpec(b2.shape, lambda i: (0, 0)),
            pl.BlockSpec(w3.shape, lambda i: (0, 0)),
            pl.BlockSpec(b3.shape, lambda i: (0, 0)),
        ],
        out_specs=pl.BlockSpec((TM, C), lambda i: (i, 0)),
        compiler_params=pltpu.CompilerParams(
            dimension_semantics=("parallel",)),               # megacore on v7x
    )(x, w1, b1, w2, b2, w3, b3)

    units = out[:M].reshape(B, S, C).transpose(0, 2, 1)       # (B, C, S)
    if num_out_channels == 1:
        units = units[:, 0, :]                                # (B, S)
    return units


# ----------------------------------------------------------------------------
# Synthetic PyTorch-layout conv parameters (Conv2d default-style init).
# ----------------------------------------------------------------------------
def init_conv_params(key, num_out_channels=1):
    C = num_out_channels
    ks = jax.random.split(key, 6)

    def u(k, shape, fan_in):
        bound = 1.0 / float(np.sqrt(fan_in))
        return jax.random.uniform(k, shape, jnp.float32, -bound, bound)

    w1 = u(ks[0], (32, 1, 1, 7), 1 * 7)       # conv_1
    b1 = u(ks[1], (32,), 1 * 7)
    w2 = u(ks[2], (16, 32, 1, 5), 32 * 5)     # conv_2
    b2 = u(ks[3], (16,), 32 * 5)
    w3 = u(ks[4], (C, 16, 1, 5), 16 * 5)      # conv_3
    b3 = u(ks[5], (C,), 16 * 5)
    return (w1, b1, w2, b2, w3, b3)


# ----------------------------------------------------------------------------
# Pure-JAX reference of the original CNN (f32 throughout), for sanity check.
# ----------------------------------------------------------------------------
def _reference(temperature, conv_params, num_out_channels=1):
    w1, b1, w2, b2, w3, b3 = conv_params
    x = temperature                                            # (B, S, 24)
    w1m = w1[:, 0, 0, :]                                       # (32, 7)
    h1 = jnp.stack([x[..., p:p + 7] @ w1m.T for p in range(18)], axis=2)
    h1 = jax.nn.relu(h1 + b1)                                  # (B, S, 18, 32)
    pooled = 0.5 * (h1[:, :, 0::2, :] + h1[:, :, 1::2, :])     # (B, S, 9, 32)
    w2m = w2[:, :, 0, :]                                       # (16, 32, 5)
    h2 = jnp.stack([jnp.einsum('bskc,ock->bso', pooled[:, :, t:t + 5, :], w2m)
                    for t in range(5)], axis=2)
    h2 = jax.nn.relu(h2 + b2)                                  # (B, S, 5, 16)
    w3m = w3[:, :, 0, :]                                       # (C, 16, 5)
    y = jax.nn.sigmoid(jnp.einsum('bskc,ock->bso', h2, w3m) + b3)  # (B, S, C)
    y = jnp.transpose(y, (0, 2, 1))                            # (B, C, S)
    if num_out_channels == 1:
        y = y[:, 0, :]
    return y


if __name__ == "__main__":
    B, S, C = 2, 274, 1        # season length 274, 24 measurements per day
    key = jax.random.PRNGKey(0)
    kp, kt = jax.random.split(key)

    conv_params = init_conv_params(kp, num_out_channels=C)
    temperature = jax.random.normal(kt, (B, S, 24), jnp.float32)

    out = degree_days_cnn(temperature, conv_params, num_out_channels=C)
    out = jax.block_until_ready(out)

    ref = _reference(temperature, conv_params, num_out_channels=C)
    assert out.shape == (B, S), out.shape
    max_err = float(jnp.max(jnp.abs(out - ref)))
    assert max_err < 2e-2, f"max abs err {max_err}"
    print("KERNEL_OK")
</pallas_src>

<mosaic_0001>
module attributes {stable_mosaic.version = 11 : i64} {
  func.func @_ddcnn_kernel(%arg0: i32, %arg1: memref<384x24xbf16, #tpu.memory_space<vmem>>, %arg2: memref<24x576xbf16, #tpu.memory_space<vmem>>, %arg3: memref<1x576xf32, #tpu.memory_space<vmem>>, %arg4: memref<576x80xbf16, #tpu.memory_space<vmem>>, %arg5: memref<1x80xf32, #tpu.memory_space<vmem>>, %arg6: memref<80x1xbf16, #tpu.memory_space<vmem>>, %arg7: memref<1x1xf32, #tpu.memory_space<vmem>>, %arg8: memref<384x1xf32, #tpu.memory_space<vmem>>) attributes {dimension_semantics = [#tpu.dimension_semantics<parallel>], iteration_bounds = array<i64: 2>, scalar_prefetch = 0 : i64, scratch_operands = 0 : i64, tpu.core_type = #tpu.core_type<tc>, window_params = [{transform_indices = @transform_0, window_bounds = array<i64: 384, 24>}, {pipeline_mode = #tpu.pipeline_mode<synchronous>, transform_indices = @transform_1, window_bounds = array<i64: 24, 576>}, {pipeline_mode = #tpu.pipeline_mode<synchronous>, transform_indices = @transform_2, window_bounds = array<i64: 1, 576>}, {pipeline_mode = #tpu.pipeline_mode<synchronous>, transform_indices = @transform_3, window_bounds = array<i64: 576, 80>}, {pipeline_mode = #tpu.pipeline_mode<synchronous>, transform_indices = @transform_4, window_bounds = array<i64: 1, 80>}, {pipeline_mode = #tpu.pipeline_mode<synchronous>, transform_indices = @transform_5, window_bounds = array<i64: 80, 1>}, {pipeline_mode = #tpu.pipeline_mode<synchronous>, transform_indices = @transform_6, window_bounds = array<i64: 1, 1>}, {transform_indices = @transform_7, window_bounds = array<i64: 384, 1>}]} {
    %c0 = arith.constant 0 : index
    %c0_0 = arith.constant 0 : index
    %0 = vector.load %arg1[%c0, %c0_0] : memref<384x24xbf16, #tpu.memory_space<vmem>>, vector<384x24xbf16>
    %c0_1 = arith.constant 0 : index
    %c0_2 = arith.constant 0 : index
    %1 = vector.load %arg2[%c0_1, %c0_2] : memref<24x576xbf16, #tpu.memory_space<vmem>>, vector<24x576xbf16>
    %cst = arith.constant dense<0.000000e+00> : vector<384x576xf32>
    %2 = tpu.matmul %0, %1, %cst {dimension_numbers = #tpu.dot_dimension_numbers<[1], [0], [0], [1], [0, 0, 1, 1], [], []>} : vector<384x24xbf16>, vector<24x576xbf16>, vector<384x576xf32> -> vector<384x576xf32>
    %c0_3 = arith.constant 0 : index
    %c0_4 = arith.constant 0 : index
    %3 = vector.load %arg3[%c0_3, %c0_4] : memref<1x576xf32, #tpu.memory_space<vmem>>, vector<1x576xf32>
    %4 = vector.broadcast %3 : vector<1x576xf32> to vector<384x576xf32>
    %5 = arith.addf %2, %4 : vector<384x576xf32>
    %cst_5 = arith.constant 0.000000e+00 : f32
    %6 = vector.broadcast %cst_5 : f32 to vector<384x576xf32>
    %7 = arith.maximumf %5, %6 : vector<384x576xf32>
    %8 = arith.truncf %7 : vector<384x576xf32> to vector<384x576xbf16>
    %c0_6 = arith.constant 0 : index
    %c0_7 = arith.constant 0 : index
    %9 = vector.load %arg4[%c0_6, %c0_7] : memref<576x80xbf16, #tpu.memory_space<vmem>>, vector<576x80xbf16>
    %cst_8 = arith.constant dense<0.000000e+00> : vector<384x80xf32>
    %10 = tpu.matmul %8, %9, %cst_8 {dimension_numbers = #tpu.dot_dimension_numbers<[1], [0], [0], [1], [0, 0, 1, 1], [], []>} : vector<384x576xbf16>, vector<576x80xbf16>, vector<384x80xf32> -> vector<384x80xf32>
    %c0_9 = arith.constant 0 : index
    %c0_10 = arith.constant 0 : index
    %11 = vector.load %arg5[%c0_9, %c0_10] : memref<1x80xf32, #tpu.memory_space<vmem>>, vector<1x80xf32>
    %12 = vector.broadcast %11 : vector<1x80xf32> to vector<384x80xf32>
    %13 = arith.addf %10, %12 : vector<384x80xf32>
    %cst_11 = arith.constant 0.000000e+00 : f32
    %14 = vector.broadcast %cst_11 : f32 to vector<384x80xf32>
    %15 = arith.maximumf %13, %14 : vector<384x80xf32>
    %16 = arith.truncf %15 : vector<384x80xf32> to vector<384x80xbf16>
    %c0_12 = arith.constant 0 : index
    %c0_13 = arith.constant 0 : index
    %17 = vector.load %arg6[%c0_12, %c0_13] : memref<80x1xbf16, #tpu.memory_space<vmem>>, vector<80x1xbf16>
    %cst_14 = arith.constant dense<0.000000e+00> : vector<384x1xf32>
    %18 = tpu.matmul %16, %17, %cst_14 {dimension_numbers = #tpu.dot_dimension_numbers<[1], [0], [0], [1], [0, 0, 1, 1], [], []>} : vector<384x80xbf16>, vector<80x1xbf16>, vector<384x1xf32> -> vector<384x1xf32>
    %c0_15 = arith.constant 0 : index
    %c0_16 = arith.constant 0 : index
    %19 = vector.load %arg7[%c0_15, %c0_16] : memref<1x1xf32, #tpu.memory_space<vmem>>, vector<1x1xf32>
    %20 = vector.broadcast %19 : vector<1x1xf32> to vector<384x1xf32>
    %21 = arith.addf %18, %20 : vector<384x1xf32>
    %22 = arith.negf %21 : vector<384x1xf32>
    %23 = math.exp %22 : vector<384x1xf32>
    %cst_17 = arith.constant 1.000000e+00 : f32
    %24 = vector.broadcast %cst_17 : f32 to vector<384x1xf32>
    %25 = arith.addf %24, %23 : vector<384x1xf32>
    %26 = arith.divf %24, %25 : vector<384x1xf32>
    %c0_18 = arith.constant 0 : index
    %c0_19 = arith.constant 0 : index
    %27 = vector.load %arg8[%c0_18, %c0_19] : memref<384x1xf32, #tpu.memory_space<vmem>>, vector<384x1xf32>
    tpu.vector_store %arg8[%c0_18, %c0_19], %26 {strides = array<i32>} : memref<384x1xf32, #tpu.memory_space<vmem>>, vector<384x1xf32>,
    return
  }
  func.func @transform_0(%arg0: i32) -> (i32, i32) {
    %c0_i32 = arith.constant 0 : i32
    %c0_i32_0 = arith.constant 0 : i32
    return %arg0, %c0_i32 : i32, i32
  }
  func.func @transform_1(%arg0: i32) -> (i32, i32) {
    %c0_i32 = arith.constant 0 : i32
    %c0_i32_0 = arith.constant 0 : i32
    %c0_i32_1 = arith.constant 0 : i32
    return %c0_i32, %c0_i32_0 : i32, i32
  }
  func.func @transform_2(%arg0: i32) -> (i32, i32) {
    %c0_i32 = arith.constant 0 : i32
    %c0_i32_0 = arith.constant 0 : i32
    %c0_i32_1 = arith.constant 0 : i32
    return %c0_i32, %c0_i32_0 : i32, i32
  }
  func.func @transform_3(%arg0: i32) -> (i32, i32) {
    %c0_i32 = arith.constant 0 : i32
    %c0_i32_0 = arith.constant 0 : i32
    %c0_i32_1 = arith.constant 0 : i32
    return %c0_i32, %c0_i32_0 : i32, i32
  }
  func.func @transform_4(%arg0: i32) -> (i32, i32) {
    %c0_i32 = arith.constant 0 : i32
    %c0_i32_0 = arith.constant 0 : i32
    %c0_i32_1 = arith.constant 0 : i32
    return %c0_i32, %c0_i32_0 : i32, i32
  }
  func.func @transform_5(%arg0: i32) -> (i32, i32) {
    %c0_i32 = arith.constant 0 : i32
    %c0_i32_0 = arith.constant 0 : i32
    %c0_i32_1 = arith.constant 0 : i32
    return %c0_i32, %c0_i32_0 : i32, i32
  }
  func.func @transform_6(%arg0: i32) -> (i32, i32) {
    %c0_i32 = arith.constant 0 : i32
    %c0_i32_0 = arith.constant 0 : i32
    %c0_i32_1 = arith.constant 0 : i32
    return %c0_i32, %c0_i32_0 : i32, i32
  }
  func.func @transform_7(%arg0: i32) -> (i32, i32) {
    %c0_i32 = arith.constant 0 : i32
    %c0_i32_0 = arith.constant 0 : i32
    return %arg0, %c0_i32 : i32, i32
  }
}

</mosaic_0001>

<llo_original>
// kernel: tpu_custom_call.1
$region0: #{tpu_custom_call.1}
  #allocation0 [shape = 'u32[]', space=smem, size = 0x4, offset = 0x4, fixed_abs, tag = 'smem constant byte address 0x4 - core index']
  #allocation1 [shape = 'u32[144,128]{1,0:T(1,128)}', space=vmem, size = 0x12000, scoped, tag = 'internal scratch']
  #allocation2 [shape = 'f32[1,1]{1,0:T(1,128)S(1)}', space=vmem, size = 0x200, scoped, tag = 'scoped memory for tpu_custom_call.1']
  %s0 = inlined_call_operand.vmem [shape: bf16[768,24], index: 0, kind: input, shape index: {}]
  %s1 = inlined_call_operand.vmem [shape: bf16[24,576], index: 1, kind: input, shape index: {}]
  %s2 = inlined_call_operand.vmem [shape: f32[1,576], index: 2, kind: input, shape index: {}]
  %s3 = inlined_call_operand.vmem [shape: bf16[576,80], index: 3, kind: input, shape index: {}]
  %s4 = inlined_call_operand.vmem [shape: f32[1,80], index: 4, kind: input, shape index: {}]
  %s5 = inlined_call_operand.vmem [shape: bf16[80,1], index: 5, kind: input, shape index: {}]
  %s6 = inlined_call_operand.<no memory space> [shape: f32[1,1], index: 6, kind: input, shape index: {}]
  %s7 = inlined_call_operand.vmem [shape: f32[768,1], index: 7, kind: output, shape index: {}]
  %s8 = sld [smem:[#allocation0]]
  $region61: #{tpu_custom_call.1} parent=0
    _
  %s10 = ssub.s32 1, %s8
  %s11 = scalar_select 0, %s10, %s8
  %v12 = vstv %s6
  %13 = vst [vmem:[#allocation2] sm:$0x1] %v12
  loop: start=0, step=1, limit=4
  $region2: #{tpu_custom_call.1} parent=0 // loop_pre_header
    _
  $region3: #{tpu_custom_call.1} parent=0 // loop_header
    %s15 = sphi 0, %s19
    %p16 = scmp.ge.s32.totalorder %s15, 4
    %s25 = sphi 0, %s27
    %s28 = sphi 0, %s25
    %s29 = sphi 0, %s28
    %s45 = sphi 0, %s29
    %s49 = sphi 0, %s49
    %s51 = sphi 0, %s49
    %s52 = sphi 0, %s51
    %s66 = sphi 0, %s52
    %s70 = sphi 0, %s70
    %s72 = sphi 0, %s70
    %s73 = sphi 0, %s72
    %s87 = sphi 0, %s73
    %s91 = sphi 0, %s91
    %s93 = sphi 0, %s91
    %s94 = sphi 0, %s93
    %s108 = sphi 0, %s94
    %s112 = sphi 0, %s112
    %s114 = sphi 0, %s112
    %s115 = sphi 0, %s114
    %s129 = sphi 0, %s115
    %s133 = sphi 0, %s133
    %s135 = sphi 0, %s133
    %s136 = sphi 0, %s135
    %s150 = sphi 0, %s136
    %s154 = sphi 0, %s154
    %s156 = sphi 0, %s154
    %s157 = sphi 0, %s156
    %s171 = sphi 0, %s157
    %s177 = sphi 0, %s179
    %s180 = sphi 0, %s177
    %s181 = sphi 0, %s180
    %s197 = sphi 0, %s181
  $region4: #{tpu_custom_call.1} parent=0 // loop_header_branch
    %18 = sbr.rel (%p16) target = $region8
  $region5: #{tpu_custom_call.1} parent=0 // loop_body
    %s20 = ssub.s32 %s15, 1
    %s21 = ssub.s32 %s15, 2
    %s22 = sadd.s32 %s15, 1
    %s23 = ssub.s32 %s15, %s22
    %p24 = scmp.eq.s32.totalorder %s23, 0
    %s26 = sadd.s32 %s25, 1
    %s27 = scalar_select %p24, %s25, %s26
    %p30 = pneg %p24
    %p31 = scmp.eq.s32.totalorder %s15, 1
    %p32 = por %p30, %p31
    %p33 = scmp.ne.s32.totalorder %s25, %s28
    %p34 = scmp.eq.s32.totalorder %s15, 0
    %p35 = por %p33, %p34
    %p36 = scmp.ne.s32.totalorder %s25, %s28
    %p37 = scmp.eq.s32.totalorder %s20, 1
    %p38 = por %p36, %p37
    %p39 = scmp.ne.s32.totalorder %s28, %s29
    %p40 = scmp.eq.s32.totalorder %s20, 0
    %p41 = por %p39, %p40
    %p42 = scmp.ne.s32.totalorder %s28, %s29
    %p43 = scmp.eq.s32.totalorder %s21, 1
    %p44 = por %p42, %p43
    %p46 = scmp.ne.s32.totalorder %s29, %s45
    %p47 = scmp.eq.s32.totalorder %s21, 0
    %p48 = por %p46, %p47
    %s50 = sadd.s32 %s49, 1
    %p53 = scmp.eq.s32.totalorder %s15, 1
    %p54 = scmp.ne.s32.totalorder %s49, %s51
    %p55 = scmp.eq.s32.totalorder %s15, 0
    %p56 = por %p54, %p55
    %p57 = scmp.ne.s32.totalorder %s49, %s51
    %p58 = scmp.eq.s32.totalorder %s20, 1
    %p59 = por %p57, %p58
    %p60 = scmp.ne.s32.totalorder %s51, %s52
    %p61 = scmp.eq.s32.totalorder %s20, 0
    %p62 = por %p60, %p61
    %p63 = scmp.ne.s32.totalorder %s51, %s52
    %p64 = scmp.eq.s32.totalorder %s21, 1
    %p65 = por %p63, %p64
    %p67 = scmp.ne.s32.totalorder %s52, %s66
    %p68 = scmp.eq.s32.totalorder %s21, 0
    %p69 = por %p67, %p68
    %s71 = sadd.s32 %s70, 1
    %p74 = scmp.eq.s32.totalorder %s15, 1
    %p75 = scmp.ne.s32.totalorder %s70, %s72
    %p76 = scmp.eq.s32.totalorder %s15, 0
    %p77 = por %p75, %p76
    %p78 = scmp.ne.s32.totalorder %s70, %s72
    %p79 = scmp.eq.s32.totalorder %s20, 1
    %p80 = por %p78, %p79
    %p81 = scmp.ne.s32.totalorder %s72, %s73
    %p82 = scmp.eq.s32.totalorder %s20, 0
    %p83 = por %p81, %p82
    %p84 = scmp.ne.s32.totalorder %s72, %s73
    %p85 = scmp.eq.s32.totalorder %s21, 1
    %p86 = por %p84, %p85
    %p88 = scmp.ne.s32.totalorder %s73, %s87
    %p89 = scmp.eq.s32.totalorder %s21, 0
    %p90 = por %p88, %p89
    %s92 = sadd.s32 %s91, 1
    %p95 = scmp.eq.s32.totalorder %s15, 1
    %p96 = scmp.ne.s32.totalorder %s91, %s93
    %p97 = scmp.eq.s32.totalorder %s15, 0
    %p98 = por %p96, %p97
    %p99 = scmp.ne.s32.totalorder %s91, %s93
    %p100 = scmp.eq.s32.totalorder %s20, 1
    %p101 = por %p99, %p100
    %p102 = scmp.ne.s32.totalorder %s93, %s94
    %p103 = scmp.eq.s32.totalorder %s20, 0
    %p104 = por %p102, %p103
    %p105 = scmp.ne.s32.totalorder %s93, %s94
    %p106 = scmp.eq.s32.totalorder %s21, 1
    %p107 = por %p105, %p106
    %p109 = scmp.ne.s32.totalorder %s94, %s108
    %p110 = scmp.eq.s32.totalorder %s21, 0
    %p111 = por %p109, %p110
    %s113 = sadd.s32 %s112, 1
    %p116 = scmp.eq.s32.totalorder %s15, 1
    %p117 = scmp.ne.s32.totalorder %s112, %s114
    %p118 = scmp.eq.s32.totalorder %s15, 0
    %p119 = por %p117, %p118
    %p120 = scmp.ne.s32.totalorder %s112, %s114
    %p121 = scmp.eq.s32.totalorder %s20, 1
    %p122 = por %p120, %p121
    %p123 = scmp.ne.s32.totalorder %s114, %s115
    %p124 = scmp.eq.s32.totalorder %s20, 0
    %p125 = por %p123, %p124
    %p126 = scmp.ne.s32.totalorder %s114, %s115
    %p127 = scmp.eq.s32.totalorder %s21, 1
    %p128 = por %p126, %p127
    %p130 = scmp.ne.s32.totalorder %s115, %s129
    %p131 = scmp.eq.s32.totalorder %s21, 0
    %p132 = por %p130, %p131
    %s134 = sadd.s32 %s133, 1
    %p137 = scmp.eq.s32.totalorder %s15, 1
    %p138 = scmp.ne.s32.totalorder %s133, %s135
    %p139 = scmp.eq.s32.totalorder %s15, 0
    %p140 = por %p138, %p139
    %p141 = scmp.ne.s32.totalorder %s133, %s135
    %p142 = scmp.eq.s32.totalorder %s20, 1
    %p143 = por %p141, %p142
    %p144 = scmp.ne.s32.totalorder %s135, %s136
    %p145 = scmp.eq.s32.totalorder %s20, 0
    %p146 = por %p144, %p145
    %p147 = scmp.ne.s32.totalorder %s135, %s136
    %p148 = scmp.eq.s32.totalorder %s21, 1
    %p149 = por %p147, %p148
    %p151 = scmp.ne.s32.totalorder %s136, %s150
    %p152 = scmp.eq.s32.totalorder %s21, 0
    %p153 = por %p151, %p152
    %s155 = sadd.s32 %s154, 1
    %p158 = scmp.eq.s32.totalorder %s15, 1
    %p159 = scmp.ne.s32.totalorder %s154, %s156
    %p160 = scmp.eq.s32.totalorder %s15, 0
    %p161 = por %p159, %p160
    %p162 = scmp.ne.s32.totalorder %s154, %s156
    %p163 = scmp.eq.s32.totalorder %s20, 1
    %p164 = por %p162, %p163
    %p165 = scmp.ne.s32.totalorder %s156, %s157
    %p166 = scmp.eq.s32.totalorder %s20, 0
    %p167 = por %p165, %p166
    %p168 = scmp.ne.s32.totalorder %s156, %s157
    %p169 = scmp.eq.s32.totalorder %s21, 1
    %p170 = por %p168, %p169
    %p172 = scmp.ne.s32.totalorder %s157, %s171
    %p173 = scmp.eq.s32.totalorder %s21, 0
    %p174 = por %p172, %p173
    %s175 = ssub.s32 %s15, %s22
    %p176 = scmp.eq.s32.totalorder %s175, 0
    %s178 = sadd.s32 %s177, 1
    %s179 = scalar_select %p176, %s177, %s178
    %p182 = pneg %p176
    %p183 = scmp.eq.s32.totalorder %s15, 1
    %p184 = por %p182, %p183
    %p185 = scmp.ne.s32.totalorder %s177, %s180
    %p186 = scmp.eq.s32.totalorder %s15, 0
    %p187 = por %p185, %p186
    %p188 = scmp.ne.s32.totalorder %s177, %s180
    %p189 = scmp.eq.s32.totalorder %s20, 1
    %p190 = por %p188, %p189
    %p191 = scmp.ne.s32.totalorder %s180, %s181
    %p192 = scmp.eq.s32.totalorder %s20, 0
    %p193 = por %p191, %p192
    %p194 = scmp.ne.s32.totalorder %s180, %s181
    %p195 = scmp.eq.s32.totalorder %s21, 1
    %p196 = por %p194, %p195
    %p198 = scmp.ne.s32.totalorder %s181, %s197
    %p199 = scmp.eq.s32.totalorder %s21, 0
    %p200 = por %p198, %p199
    %p201 = scmp.le.s32.totalorder 1, %s15
    %p202 = scmp.lt.s32.totalorder %s15, 3
    %p203 = pnand %p201, %p202
    %p204 = pneg %p203
    // Predicated region
    $region9: #{tpu_custom_call.1} parent=5 // pred_check
      _
    $region10: #{tpu_custom_call.1} parent=5 // pred_check_branch
      %206 = sbr.rel (%p203) target = $region12
    $region11: #{tpu_custom_call.1} parent=5 // pred_region
      %s207 = ssub.s32 %s15, 1
      // Predicated region
      $region13: #{tpu_custom_call.1} parent=11 // pred_check
        %p208 = pneg %p62
      $region14: #{tpu_custom_call.1} parent=11 // pred_check_branch
        %210 = sbr.rel (%p208) target = $region16
      $region15: #{tpu_custom_call.1} parent=11 // pred_region
        _
      $region16: #{tpu_custom_call.1} parent=11 // pred_fallthru
        _
      // Predicated region
      $region17: #{tpu_custom_call.1} parent=11 // pred_check
        %p211 = pneg %p83
      $region18: #{tpu_custom_call.1} parent=11 // pred_check_branch
        %213 = sbr.rel (%p211) target = $region20
      $region19: #{tpu_custom_call.1} parent=11 // pred_region
        _
      $region20: #{tpu_custom_call.1} parent=11 // pred_fallthru
        _
      // Predicated region
      $region21: #{tpu_custom_call.1} parent=11 // pred_check
        %p214 = pneg %p104
      $region22: #{tpu_custom_call.1} parent=11 // pred_check_branch
        %216 = sbr.rel (%p214) target = $region24
      $region23: #{tpu_custom_call.1} parent=11 // pred_region
        _
      $region24: #{tpu_custom_call.1} parent=11 // pred_fallthru
        _
      // Predicated region
      $region25: #{tpu_custom_call.1} parent=11 // pred_check
        %p217 = pneg %p125
      $region26: #{tpu_custom_call.1} parent=11 // pred_check_branch
        %219 = sbr.rel (%p217) target = $region28
      $region27: #{tpu_custom_call.1} parent=11 // pred_region
        _
      $region28: #{tpu_custom_call.1} parent=11 // pred_fallthru
        _
      // Predicated region
      $region29: #{tpu_custom_call.1} parent=11 // pred_check
        %p220 = pneg %p146
      $region30: #{tpu_custom_call.1} parent=11 // pred_check_branch
        %222 = sbr.rel (%p220) target = $region32
      $region31: #{tpu_custom_call.1} parent=11 // pred_region
        _
      $region32: #{tpu_custom_call.1} parent=11 // pred_fallthru
        _
      // Predicated region
      $region33: #{tpu_custom_call.1} parent=11 // pred_check
        %p223 = pneg %p167
      $region34: #{tpu_custom_call.1} parent=11 // pred_check_branch
        %225 = sbr.rel (%p223) target = $region36
      $region35: #{tpu_custom_call.1} parent=11 // pred_region
        _
      $region36: #{tpu_custom_call.1} parent=11 // pred_fallthru
        _
    $region12: #{tpu_custom_call.1} parent=5 // pred_fallthru
      _
    %p226 = scmp.lt.s32.totalorder %s15, 2
    // Predicated region
    $region37: #{tpu_custom_call.1} parent=5 // pred_check
      %p227 = pneg %p226
    $region38: #{tpu_custom_call.1} parent=5 // pred_check_branch
      %229 = sbr.rel (%p227) target = $region40
    $region39: #{tpu_custom_call.1} parent=5 // pred_region
      // Predicated region
      $region41: #{tpu_custom_call.1} parent=39 // pred_check
        %p230 = pneg %p35
      $region42: #{tpu_custom_call.1} parent=39 // pred_check_branch
        %232 = sbr.rel (%p230) target = $region44
      $region43: #{tpu_custom_call.1} parent=39 // pred_region
        %s233 = smul.u32 48, %s15
        %p234 = scmp.lt.s32.totalorder %s233, 95
        %s235 = scalar_select %p234, %s233, 95
        %s236 = smul.addr %s235, 4
        %s237 = scalar_lea.vmem %s0, %s236
        %s238 = smul.u32 48, %s15
      $region44: #{tpu_custom_call.1} parent=39 // pred_fallthru
        _
    $region40: #{tpu_custom_call.1} parent=5 // pred_fallthru
      _
    %p239 = scmp.le.s32.totalorder 1, %s15
    %p240 = scmp.lt.s32.totalorder %s15, 3
    %p241 = pnand %p239, %p240
    %p242 = pneg %p241
    // Predicated region
    $region45: #{tpu_custom_call.1} parent=5 // pred_check
      _
    $region46: #{tpu_custom_call.1} parent=5 // pred_check_branch
      %244 = sbr.rel (%p241) target = $region48
    $region47: #{tpu_custom_call.1} parent=5 // pred_region
      %s245 = ssub.s32 %s15, 1
      %s246 = smul.u32 48, %s20
      %p247 = scmp.lt.s32.totalorder %s246, 95
      %s248 = scalar_select %p247, %s246, 95
      %s249 = smul.addr %s248, 4
      %s250 = scalar_lea.vmem %s0, %s249
      %p251 = pneg %p41
      %p252 = pneg %p38
      %p253 = pneg %p62
      %p254 = pneg %p59
      %p255 = pneg %p83
      %p256 = pneg %p80
      %p257 = pneg %p104
      %p258 = pneg %p101
      %p259 = pneg %p125
      %p260 = pneg %p122
      %p261 = pneg %p146
      %p262 = pneg %p143
      %p263 = pneg %p167
      %p264 = pneg %p164
      %p265 = pneg %p193
      %p266 = pneg %p190
      %s267 = smul.u32 48, %s20
      %p268 = scmp.lt.s32.totalorder %s267, 95
      %s269 = scalar_select %p268, %s267, 95
      %s270 = smul.addr %s269, 8
      %s271 = scalar_lea.vmem %s7, %s270
      %s272 = smul.u32 48, %s20
      %p273 = scmp.lt.s32.totalorder %s272, 95
      %s274 = scalar_select %p273, %s272, 95
      %s275 = smul.addr %s274, 4
      %s276 = scalar_lea.vmem %s0, %s275
      %s277 = smul.u32 48, %s20
      %s278 = smul.u32 48, %s20
      %p279 = scmp.lt.s32.totalorder %s278, 95
      %s280 = scalar_select %p279, %s278, 95
      %s281 = smul.addr %s280, 8
      %s282 = scalar_lea.vmem %s7, %s281
      %s283 = smul.u32 48, %s20
      %v285 = vld [vmem:[%s276] sm:$0xf]
      %v286 = vld [vmem:[%s276 + $0x4] sm:$0xf]
      %v287 = vld [vmem:[%s276 + $0x8] sm:$0xf]
      %v288 = vld [vmem:[%s276 + $0xc] sm:$0xf]
      %v289 = vld [vmem:[%s276 + $0x10] sm:$0xf]
      %v290 = vld [vmem:[%s276 + $0x14] sm:$0xf]
      %v291 = vld [vmem:[%s276 + $0x18] sm:$0xf]
      %v292 = vld [vmem:[%s276 + $0x1c] sm:$0xf]
      %v293 = vld [vmem:[%s276 + $0x20] sm:$0xf]
      %v294 = vld [vmem:[%s276 + $0x24] sm:$0xf]
      %v295 = vld [vmem:[%s276 + $0x28] sm:$0xf]
      %v296 = vld [vmem:[%s276 + $0x2c] sm:$0xf]
      %v297 = vld [vmem:[%s276 + $0x30] sm:$0xf]
      %v298 = vld [vmem:[%s276 + $0x34] sm:$0xf]
      %v299 = vld [vmem:[%s276 + $0x38] sm:$0xf]
      %v300 = vld [vmem:[%s276 + $0x3c] sm:$0xf]
      %v301 = vld [vmem:[%s276 + $0x40] sm:$0xf]
      %v302 = vld [vmem:[%s276 + $0x44] sm:$0xf]
      %v303 = vld [vmem:[%s276 + $0x48] sm:$0xf]
      %v304 = vld [vmem:[%s276 + $0x4c] sm:$0xf]
      %v305 = vld [vmem:[%s276 + $0x50] sm:$0xf]
      %v306 = vld [vmem:[%s276 + $0x54] sm:$0xf]
      %v307 = vld [vmem:[%s276 + $0x58] sm:$0xf]
      %v308 = vld [vmem:[%s276 + $0x5c] sm:$0xf]
      %v309 = vld [vmem:[%s276 + $0x60] sm:$0xf]
      %v310 = vld [vmem:[%s276 + $0x64] sm:$0xf]
      %v311 = vld [vmem:[%s276 + $0x68] sm:$0xf]
      %v312 = vld [vmem:[%s276 + $0x6c] sm:$0xf]
      %v313 = vld [vmem:[%s276 + $0x70] sm:$0xf]
      %v314 = vld [vmem:[%s276 + $0x74] sm:$0xf]
      %v315 = vld [vmem:[%s276 + $0x78] sm:$0xf]
      %v316 = vld [vmem:[%s276 + $0x7c] sm:$0xf]
      %v317 = vld [vmem:[%s276 + $0x80] sm:$0xf]
      %v318 = vld [vmem:[%s276 + $0x84] sm:$0xf]
      %v319 = vld [vmem:[%s276 + $0x88] sm:$0xf]
      %v320 = vld [vmem:[%s276 + $0x8c] sm:$0xf]
      %v321 = vld [vmem:[%s276 + $0x90] sm:$0xf]
      %v322 = vld [vmem:[%s276 + $0x94] sm:$0xf]
      %v323 = vld [vmem:[%s276 + $0x98] sm:$0xf]
      %v324 = vld [vmem:[%s276 + $0x9c] sm:$0xf]
      %v325 = vld [vmem:[%s276 + $0xa0] sm:$0xf]
      %v326 = vld [vmem:[%s276 + $0xa4] sm:$0xf]
      %v327 = vld [vmem:[%s276 + $0xa8] sm:$0xf]
      %v328 = vld [vmem:[%s276 + $0xac] sm:$0xf]
      %v329 = vld [vmem:[%s276 + $0xb0] sm:$0xf]
      %v330 = vld [vmem:[%s276 + $0xb4] sm:$0xf]
      %v331 = vld [vmem:[%s276 + $0xb8] sm:$0xf]
      %v332 = vld [vmem:[%s276 + $0xbc] sm:$0xf]
      %v333 = vld [vmem:[%s1] sm:$0xff]
      %v334 = vld [vmem:[%s1 + $0x8] sm:$0xff]
      %v335 = vld [vmem:[%s1 + $0x10] sm:$0xf]
      %v336 = vld [vmem:[%s1 + $0x14] sm:$0xff]
      %v337 = vld [vmem:[%s1 + $0x1c] sm:$0xff]
      %v338 = vld [vmem:[%s1 + $0x24] sm:$0xf]
      %v339 = vld [vmem:[%s1 + $0x28] sm:$0xff]
      %v340 = vld [vmem:[%s1 + $0x30] sm:$0xff]
      %v341 = vld [vmem:[%s1 + $0x38] sm:$0xf]
      %v342 = vld [vmem:[%s2] sm:$0x1f]
      %v344 = vlaneseq
      %v345 = vshrl.u32 %v344, 7
      %v346 = vsub.s32 0, %v345
      %v347 = vrot.slane %v342, %v346
      %v348 = vlaneseq
      %v349 = vshrl.u32 %v348, 7
      %v350 = vsub.s32 1, %v349
      %v351 = vrot.slane %v342, %v350
      %v352 = vlaneseq
      %v353 = vshrl.u32 %v352, 7
      %v354 = vsub.s32 2, %v353
      %v355 = vrot.slane %v342, %v354
      %v356 = vlaneseq
      %v357 = vshrl.u32 %v356, 7
      %v358 = vsub.s32 3, %v357
      %v359 = vrot.slane %v342, %v358
      %v360 = vlaneseq
      %v361 = vshrl.u32 %v360, 7
      %v362 = vsub.s32 4, %v361
      %v363 = vrot.slane %v342, %v362
      %v417 = vunpack.c.l.b16 %v285
      %v418 = vunpack.c.l.b16 %v286
      %v419 = vunpack.c.l.b16 %v287
      %v420 = vunpack.c.l.b16 %v288
      %v421 = vunpack.c.l.b16 %v289
      %v422 = vunpack.c.l.b16 %v290
      %v423 = vunpack.c.l.b16 %v291
      %v424 = vunpack.c.l.b16 %v292
      %v425 = vunpack.c.l.b16 %v293
      %v426 = vunpack.c.l.b16 %v294
      %v427 = vunpack.c.l.b16 %v295
      %v428 = vunpack.c.l.b16 %v296
      %v429 = vunpack.c.l.b16 %v297
      %v430 = vunpack.c.l.b16 %v298
      %v431 = vunpack.c.l.b16 %v299
      %v432 = vunpack.c.l.b16 %v300
      %v433 = vunpack.c.l.b16 %v301
      %v434 = vunpack.c.l.b16 %v302
      %v435 = vunpack.c.l.b16 %v303
      %v436 = vunpack.c.l.b16 %v304
      %v437 = vunpack.c.l.b16 %v305
      %v438 = vunpack.c.l.b16 %v306
      %v439 = vunpack.c.l.b16 %v307
      %v440 = vunpack.c.l.b16 %v308
      %v441 = vunpack.c.l.b16 %v309
      %v442 = vunpack.c.l.b16 %v310
      %v443 = vunpack.c.l.b16 %v311
      %v444 = vunpack.c.l.b16 %v312
      %v445 = vunpack.c.l.b16 %v313
      %v446 = vunpack.c.l.b16 %v314
      %v447 = vunpack.c.l.b16 %v315
      %v448 = vunpack.c.l.b16 %v316
      %v449 = vunpack.c.l.b16 %v317
      %v450 = vunpack.c.l.b16 %v318
      %v451 = vunpack.c.l.b16 %v319
      %v452 = vunpack.c.l.b16 %v320
      %v453 = vunpack.c.l.b16 %v321
      %v454 = vunpack.c.l.b16 %v322
      %v455 = vunpack.c.l.b16 %v323
      %v456 = vunpack.c.l.b16 %v324
      %v457 = vunpack.c.l.b16 %v325
      %v458 = vunpack.c.l.b16 %v326
      %v459 = vunpack.c.l.b16 %v327
      %v460 = vunpack.c.l.b16 %v328
      %v461 = vunpack.c.l.b16 %v329
      %v462 = vunpack.c.l.b16 %v330
      %v463 = vunpack.c.l.b16 %v331
      %v464 = vunpack.c.l.b16 %v332
      %v465 = vpack.c.b16 %v418, %v417
      %v466 = vpack.c.b16 %v420, %v419
      %v467 = vpack.c.b16 %v422, %v421
      %v468 = vpack.c.b16 %v424, %v423
      %v469 = vpack.c.b16 %v426, %v425
      %v470 = vpack.c.b16 %v428, %v427
      %v471 = vpack.c.b16 %v430, %v429
      %v472 = vpack.c.b16 %v432, %v431
      %v473 = vpack.c.b16 %v434, %v433
      %v474 = vpack.c.b16 %v436, %v435
      %v475 = vpack.c.b16 %v438, %v437
      %v476 = vpack.c.b16 %v440, %v439
      %v477 = vpack.c.b16 %v442, %v441
      %v478 = vpack.c.b16 %v444, %v443
      %v479 = vpack.c.b16 %v446, %v445
      %v480 = vpack.c.b16 %v448, %v447
      %v481 = vpack.c.b16 %v450, %v449
      %v482 = vpack.c.b16 %v452, %v451
      %v483 = vpack.c.b16 %v454, %v453
      %v484 = vpack.c.b16 %v456, %v455
      %v485 = vpack.c.b16 %v458, %v457
      %v486 = vpack.c.b16 %v460, %v459
      %v487 = vpack.c.b16 %v462, %v461
      %v488 = vpack.c.b16 %v464, %v463
      %v498 = vunpack.c.l.b16 %v333
      %v499 = vunpack.c.h.b16 %v333
      %v500 = vunpack.c.l.b16 %v334
      %v501 = vunpack.c.h.b16 %v334
      %v502 = vunpack.c.l.b16 %v335
      %v503 = vunpack.c.l.b16 %v336
      %v504 = vunpack.c.h.b16 %v336
      %v505 = vunpack.c.l.b16 %v337
      %v506 = vunpack.c.h.b16 %v337
      %v507 = vunpack.c.l.b16 %v338
      %v508 = vunpack.c.l.b16 %v339
      %v509 = vunpack.c.h.b16 %v339
      %v510 = vunpack.c.l.b16 %v340
      %v511 = vunpack.c.h.b16 %v340
      %v512 = vunpack.c.l.b16 %v341
      %v513 = vpack.c.b16 %v503, %v498
      %v514 = vpack.c.b16 %v504, %v499
      %v515 = vpack.c.b16 %v505, %v500
      %v516 = vpack.c.b16 %v506, %v501
      %v517 = vpack.c.b16 %v507, %v502
      %v518 = vpack.c.b16 %v508, %v508
      %v519 = vpack.c.b16 %v509, %v509
      %v520 = vpack.c.b16 %v510, %v510
      %v521 = vpack.c.b16 %v511, %v511
      %v522 = vpack.c.b16 %v512, %v512
      %vm528 = vcmask 195584
      %v530 = vsel %vm528, %v465, 0
      %v533 = vsel %vm528, %v466, 0
      %v536 = vsel %vm528, %v467, 0
      %v539 = vsel %vm528, %v468, 0
      %v542 = vsel %vm528, %v469, 0
      %v545 = vsel %vm528, %v470, 0
      %v548 = vsel %vm528, %v471, 0
      %v551 = vsel %vm528, %v472, 0
      %v554 = vsel %vm528, %v473, 0
      %v557 = vsel %vm528, %v474, 0
      %v560 = vsel %vm528, %v475, 0
      %v563 = vsel %vm528, %v476, 0
      %v566 = vsel %vm528, %v477, 0
      %v569 = vsel %vm528, %v478, 0
      %v572 = vsel %vm528, %v479, 0
      %v575 = vsel %vm528, %v480, 0
      %v578 = vsel %vm528, %v481, 0
      %v581 = vsel %vm528, %v482, 0
      %v584 = vsel %vm528, %v483, 0
      %v587 = vsel %vm528, %v484, 0
      %v590 = vsel %vm528, %v485, 0
      %v593 = vsel %vm528, %v486, 0
      %v596 = vsel %vm528, %v487, 0
      %v599 = vsel %vm528, %v488, 0
      %vm601 = vcmask 1043456
      %v603 = vsel %vm601, %v518, 0
      %v606 = vsel %vm601, %v519, 0
      %v609 = vsel %vm601, %v520, 0
      %v612 = vsel %vm601, %v521, 0
      %v615 = vsel %vm601, %v522, 0
      %617 = vmatprep.subr.bf16.mxu0 %v514
      %618 = vmatpush1.bf16.msra.mxu0 %v513
      %619 = vmatprep.subr.bf16.mxu0 %v606
      %620 = vmatpush1.bf16.msra.mxu0 %v603
      %621 = vmatprep.subr.bf16.mxu0 0
      %622 = vmatpush1.bf16.msra.mxu0 0
      %623 = vmatprep.subr.bf16.mxu0 0
      %624 = vmatpush1.bf16.msra.mxu0 0
      %625 = vmatprep.subr.bf16.mxu0 0
      %626 = vmatpush1.bf16.msra.mxu0 0
      %627 = vmatprep.subr.bf16.mxu0 0
      %628 = vmatpush1.bf16.msra.mxu0 0
      %629 = vmatprep.subr.bf16.mxu0 0
      %630 = vmatpush1.bf16.msra.mxu0 0
      %631 = vmatprep.subr.bf16.mxu0 0
      %632 = vmatpush1.bf16.msra.mxu0 0
      %633 = vmatprep.subr.bf16.mxu0 0
      %634 = vmatpush1.bf16.msra.mxu0 0
      %635 = vmatprep.subr.bf16.mxu0 0
      %636 = vmatpush1.bf16.msra.mxu0 0
      %637 = vmatprep.subr.bf16.mxu0 0
      %638 = vmatpush1.bf16.msra.mxu0 0
      %639 = vmatprep.subr.bf16.mxu0 0
      %640 = vmatpush1.bf16.msra.mxu0 0
      %641 = vmatprep.subr.bf16.mxu0 0
      %642 = vmatpush1.bf16.msra.mxu0 0
      %643 = vmatprep.subr.bf16.mxu0 0
      %644 = vmatpush1.bf16.msra.mxu0 0
      %645 = vmatprep.subr.bf16.mxu0 0
      %646 = vmatpush1.bf16.msra.mxu0 0
      %647 = vmatprep.subr.bf16.mxu0 0
      %648 = vmatpush1.bf16.msra.mxu0 0
      %649 = vmatprep.mubr.bf16.mxu0 0
      %650 = vmatmul.mubr.bf16.gmra.mrb[0].mxu0 %v530
      %v651 = vpop.f32.mrb[0].mxu0
      %v652 = vadd.f32 %v347, %v651
      %v653 = vpop.f32.mrb[0].mxu0
      %v654 = vadd.f32 %v351, %v653
      %v655 = vpop.f32.mrb[0].mxu0
      %v656 = vadd.f32 %v347, %v655
      %v657 = vpop.f32.mrb[0].mxu0
      %v658 = vadd.f32 %v351, %v657
      %659 = vmatprep.mubr.bf16.mxu0 0
      %660 = vmatmul.mubr.bf16.gmra.mrb[0].mxu0 %v533
      %v661 = vpop.f32.mrb[0].mxu0
      %v662 = vadd.f32 %v347, %v661
      %v663 = vpop.f32.mrb[0].mxu0
      %v664 = vadd.f32 %v351, %v663
      %v665 = vpop.f32.mrb[0].mxu0
      %v666 = vadd.f32 %v347, %v665
      %v667 = vpop.f32.mrb[0].mxu0
      %v668 = vadd.f32 %v351, %v667
      %669 = vmatprep.mubr.bf16.mxu0 0
      %670 = vmatmul.mubr.bf16.gmra.mrb[0].mxu0 %v536
      %v671 = vpop.f32.mrb[0].mxu0
      %v672 = vadd.f32 %v347, %v671
      %v673 = vpop.f32.mrb[0].mxu0
      %v674 = vadd.f32 %v351, %v673
      %v675 = vpop.f32.mrb[0].mxu0
      %v676 = vadd.f32 %v347, %v675
      %v677 = vpop.f32.mrb[0].mxu0
      %v678 = vadd.f32 %v351, %v677
      %679 = vmatprep.mubr.bf16.mxu0 0
      %680 = vmatmul.mubr.bf16.gmra.mrb[0].mxu0 %v539
      %v681 = vpop.f32.mrb[0].mxu0
      %v682 = vadd.f32 %v347, %v681
      %v683 = vpop.f32.mrb[0].mxu0
      %v684 = vadd.f32 %v351, %v683
      %v685 = vpop.f32.mrb[0].mxu0
      %v686 = vadd.f32 %v347, %v685
      %v687 = vpop.f32.mrb[0].mxu0
      %v688 = vadd.f32 %v351, %v687
      %689 = vmatprep.mubr.bf16.mxu0 0
      %690 = vmatmul.mubr.bf16.gmra.mrb[0].mxu0 %v542
      %v691 = vpop.f32.mrb[0].mxu0
      %v692 = vadd.f32 %v347, %v691
      %v693 = vpop.f32.mrb[0].mxu0
      %v694 = vadd.f32 %v351, %v693
      %v695 = vpop.f32.mrb[0].mxu0
      %v696 = vadd.f32 %v347, %v695
      %v697 = vpop.f32.mrb[0].mxu0
      %v698 = vadd.f32 %v351, %v697
      %699 = vmatprep.mubr.bf16.mxu0 0
      %700 = vmatmul.mubr.bf16.gmra.mrb[0].mxu0 %v545
      %v701 = vpop.f32.mrb[0].mxu0
      %v702 = vadd.f32 %v347, %v701
      %v703 = vpop.f32.mrb[0].mxu0
      %v704 = vadd.f32 %v351, %v703
      %v705 = vpop.f32.mrb[0].mxu0
      %v706 = vadd.f32 %v347, %v705
      %v707 = vpop.f32.mrb[0].mxu0
      %v708 = vadd.f32 %v351, %v707
      %709 = vmatprep.mubr.bf16.mxu0 0
      %710 = vmatmul.mubr.bf16.gmra.mrb[0].mxu0 %v548
      %v711 = vpop.f32.mrb[0].mxu0
      %v712 = vadd.f32 %v347, %v711
      %v713 = vpop.f32.mrb[0].mxu0
      %v714 = vadd.f32 %v351, %v713
      %v715 = vpop.f32.mrb[0].mxu0
      %v716 = vadd.f32 %v347, %v715
      %v717 = vpop.f32.mrb[0].mxu0
      %v718 = vadd.f32 %v351, %v717
      %719 = vmatprep.mubr.bf16.mxu0 0
      %720 = vmatmul.mubr.bf16.gmra.mrb[0].mxu0 %v551
      %v721 = vpop.f32.mrb[0].mxu0
      %v722 = vadd.f32 %v347, %v721
      %v723 = vpop.f32.mrb[0].mxu0
      %v724 = vadd.f32 %v351, %v723
      %v725 = vpop.f32.mrb[0].mxu0
      %v726 = vadd.f32 %v347, %v725
      %v727 = vpop.f32.mrb[0].mxu0
      %v728 = vadd.f32 %v351, %v727
      %729 = vmatprep.mubr.bf16.mxu0 0
      %730 = vmatmul.mubr.bf16.gmra.mrb[0].mxu0 %v554
      %v731 = vpop.f32.mrb[0].mxu0
      %v732 = vadd.f32 %v347, %v731
      %v733 = vpop.f32.mrb[0].mxu0
      %v734 = vadd.f32 %v351, %v733
      %v735 = vpop.f32.mrb[0].mxu0
      %v736 = vadd.f32 %v347, %v735
      %v737 = vpop.f32.mrb[0].mxu0
      %v738 = vadd.f32 %v351, %v737
      %739 = vmatprep.mubr.bf16.mxu0 0
      %740 = vmatmul.mubr.bf16.gmra.mrb[0].mxu0 %v557
      %v741 = vpop.f32.mrb[0].mxu0
      %v742 = vadd.f32 %v347, %v741
      %v743 = vpop.f32.mrb[0].mxu0
      %v744 = vadd.f32 %v351, %v743
      %v745 = vpop.f32.mrb[0].mxu0
      %v746 = vadd.f32 %v347, %v745
      %v747 = vpop.f32.mrb[0].mxu0
      %v748 = vadd.f32 %v351, %v747
      %749 = vmatprep.mubr.bf16.mxu0 0
      %750 = vmatmul.mubr.bf16.gmra.mrb[0].mxu0 %v560
      %v751 = vpop.f32.mrb[0].mxu0
      %v752 = vadd.f32 %v347, %v751
      %v753 = vpop.f32.mrb[0].mxu0
      %v754 = vadd.f32 %v351, %v753
      %v755 = vpop.f32.mrb[0].mxu0
      %v756 = vadd.f32 %v347, %v755
      %v757 = vpop.f32.mrb[0].mxu0
      %v758 = vadd.f32 %v351, %v757
      %759 = vmatprep.mubr.bf16.mxu0 0
      %760 = vmatmul.mubr.bf16.gmra.mrb[0].mxu0 %v563
      %v761 = vpop.f32.mrb[0].mxu0
      %v762 = vadd.f32 %v347, %v761
      %v763 = vpop.f32.mrb[0].mxu0
      %v764 = vadd.f32 %v351, %v763
      %v765 = vpop.f32.mrb[0].mxu0
      %v766 = vadd.f32 %v347, %v765
      %v767 = vpop.f32.mrb[0].mxu0
      %v768 = vadd.f32 %v351, %v767
      %769 = vmatprep.mubr.bf16.mxu0 0
      %770 = vmatmul.mubr.bf16.gmra.mrb[0].mxu0 %v566
      %v771 = vpop.f32.mrb[0].mxu0
      %v772 = vadd.f32 %v347, %v771
      %v773 = vpop.f32.mrb[0].mxu0
      %v774 = vadd.f32 %v351, %v773
      %v775 = vpop.f32.mrb[0].mxu0
      %v776 = vadd.f32 %v347, %v775
      %v777 = vpop.f32.mrb[0].mxu0
      %v778 = vadd.f32 %v351, %v777
      %779 = vmatprep.mubr.bf16.mxu0 0
      %780 = vmatmul.mubr.bf16.gmra.mrb[0].mxu0 %v569
      %v781 = vpop.f32.mrb[0].mxu0
      %v782 = vadd.f32 %v347, %v781
      %v783 = vpop.f32.mrb[0].mxu0
      %v784 = vadd.f32 %v351, %v783
      %v785 = vpop.f32.mrb[0].mxu0
      %v786 = vadd.f32 %v347, %v785
      %v787 = vpop.f32.mrb[0].mxu0
      %v788 = vadd.f32 %v351, %v787
      %789 = vmatprep.mubr.bf16.mxu0 0
      %790 = vmatmul.mubr.bf16.gmra.mrb[0].mxu0 %v572
      %v791 = vpop.f32.mrb[0].mxu0
      %v792 = vadd.f32 %v347, %v791
      %v793 = vpop.f32.mrb[0].mxu0
      %v794 = vadd.f32 %v351, %v793
      %v795 = vpop.f32.mrb[0].mxu0
      %v796 = vadd.f32 %v347, %v795
      %v797 = vpop.f32.mrb[0].mxu0
      %v798 = vadd.f32 %v351, %v797
      %799 = vmatprep.mubr.bf16.mxu0 0
      %800 = vmatmul.mubr.bf16.gmra.mrb[0].mxu0 %v575
      %v801 = vpop.f32.mrb[0].mxu0
      %v802 = vadd.f32 %v347, %v801
      %v803 = vpop.f32.mrb[0].mxu0
      %v804 = vadd.f32 %v351, %v803
      %v805 = vpop.f32.mrb[0].mxu0
      %v806 = vadd.f32 %v347, %v805
      %v807 = vpop.f32.mrb[0].mxu0
      %v808 = vadd.f32 %v351, %v807
      %809 = vmatprep.mubr.bf16.mxu0 0
      %810 = vmatmul.mubr.bf16.gmra.mrb[0].mxu0 %v578
      %v811 = vpop.f32.mrb[0].mxu0
      %v812 = vadd.f32 %v347, %v811
      %v813 = vpop.f32.mrb[0].mxu0
      %v814 = vadd.f32 %v351, %v813
      %v815 = vpop.f32.mrb[0].mxu0
      %v816 = vadd.f32 %v347, %v815
      %v817 = vpop.f32.mrb[0].mxu0
      %v818 = vadd.f32 %v351, %v817
      %819 = vmatprep.mubr.bf16.mxu0 0
      %820 = vmatmul.mubr.bf16.gmra.mrb[0].mxu0 %v581
      %v821 = vpop.f32.mrb[0].mxu0
      %v822 = vadd.f32 %v347, %v821
      %v823 = vpop.f32.mrb[0].mxu0
      %v824 = vadd.f32 %v351, %v823
      %v825 = vpop.f32.mrb[0].mxu0
      %v826 = vadd.f32 %v347, %v825
      %v827 = vpop.f32.mrb[0].mxu0
      %v828 = vadd.f32 %v351, %v827
      %829 = vmatprep.mubr.bf16.mxu0 0
      %830 = vmatmul.mubr.bf16.gmra.mrb[0].mxu0 %v584
      %v831 = vpop.f32.mrb[0].mxu0
      %v832 = vadd.f32 %v347, %v831
      %v833 = vpop.f32.mrb[0].mxu0
      %v834 = vadd.f32 %v351, %v833
      %v835 = vpop.f32.mrb[0].mxu0
      %v836 = vadd.f32 %v347, %v835
      %v837 = vpop.f32.mrb[0].mxu0
      %v838 = vadd.f32 %v351, %v837
      %839 = vmatprep.mubr.bf16.mxu0 0
      %840 = vmatmul.mubr.bf16.gmra.mrb[0].mxu0 %v587
      %v841 = vpop.f32.mrb[0].mxu0
      %v842 = vadd.f32 %v347, %v841
      %v843 = vpop.f32.mrb[0].mxu0
      %v844 = vadd.f32 %v351, %v843
      %v845 = vpop.f32.mrb[0].mxu0
      %v846 = vadd.f32 %v347, %v845
      %v847 = vpop.f32.mrb[0].mxu0
      %v848 = vadd.f32 %v351, %v847
      %849 = vmatprep.mubr.bf16.mxu0 0
      %850 = vmatmul.mubr.bf16.gmra.mrb[0].mxu0 %v590
      %v851 = vpop.f32.mrb[0].mxu0
      %v852 = vadd.f32 %v347, %v851
      %v853 = vpop.f32.mrb[0].mxu0
      %v854 = vadd.f32 %v351, %v853
      %v855 = vpop.f32.mrb[0].mxu0
      %v856 = vadd.f32 %v347, %v855
      %v857 = vpop.f32.mrb[0].mxu0
      %v858 = vadd.f32 %v351, %v857
      %859 = vmatprep.mubr.bf16.mxu0 0
      %860 = vmatmul.mubr.bf16.gmra.mrb[0].mxu0 %v593
      %v861 = vpop.f32.mrb[0].mxu0
      %v862 = vadd.f32 %v347, %v861
      %v863 = vpop.f32.mrb[0].mxu0
      %v864 = vadd.f32 %v351, %v863
      %v865 = vpop.f32.mrb[0].mxu0
      %v866 = vadd.f32 %v347, %v865
      %v867 = vpop.f32.mrb[0].mxu0
      %v868 = vadd.f32 %v351, %v867
      %869 = vmatprep.mubr.bf16.mxu0 0
      %870 = vmatmul.mubr.bf16.gmra.mrb[0].mxu0 %v596
      %v871 = vpop.f32.mrb[0].mxu0
      %v872 = vadd.f32 %v347, %v871
      %v873 = vpop.f32.mrb[0].mxu0
      %v874 = vadd.f32 %v351, %v873
      %v875 = vpop.f32.mrb[0].mxu0
      %v876 = vadd.f32 %v347, %v875
      %v877 = vpop.f32.mrb[0].mxu0
      %v878 = vadd.f32 %v351, %v877
      %879 = vmatprep.mubr.bf16.mxu0 0
      %880 = vmatmul.mubr.bf16.gmra.mrb[0].mxu0 %v599
      %v881 = vpop.f32.mrb[0].mxu0
      %v882 = vadd.f32 %v347, %v881
      %v883 = vpop.f32.mrb[0].mxu0
      %v884 = vadd.f32 %v351, %v883
      %v885 = vpop.f32.mrb[0].mxu0
      %v886 = vadd.f32 %v347, %v885
      %v887 = vpop.f32.mrb[0].mxu0
      %v888 = vadd.f32 %v351, %v887
      %889 = vdwg.mxu0
      %890 = vmatprep.subr.bf16.mxu0 %v516
      %891 = vmatpush1.bf16.msra.mxu0 %v515
      %892 = vmatprep.subr.bf16.mxu0 %v612
      %893 = vmatpush1.bf16.msra.mxu0 %v609
      %894 = vmatprep.subr.bf16.mxu0 0
      %895 = vmatpush1.bf16.msra.mxu0 0
      %896 = vmatprep.subr.bf16.mxu0 0
      %897 = vmatpush1.bf16.msra.mxu0 0
      %898 = vmatprep.subr.bf16.mxu0 0
      %899 = vmatpush1.bf16.msra.mxu0 0
      %900 = vmatprep.subr.bf16.mxu0 0
      %901 = vmatpush1.bf16.msra.mxu0 0
      %902 = vmatprep.subr.bf16.mxu0 0
      %903 = vmatpush1.bf16.msra.mxu0 0
      %904 = vmatprep.subr.bf16.mxu0 0
      %905 = vmatpush1.bf16.msra.mxu0 0
      %906 = vmatprep.subr.bf16.mxu0 0
      %907 = vmatpush1.bf16.msra.mxu0 0
      %908 = vmatprep.subr.bf16.mxu0 0
      %909 = vmatpush1.bf16.msra.mxu0 0
      %910 = vmatprep.subr.bf16.mxu0 0
      %911 = vmatpush1.bf16.msra.mxu0 0
      %912 = vmatprep.subr.bf16.mxu0 0
      %913 = vmatpush1.bf16.msra.mxu0 0
      %914 = vmatprep.subr.bf16.mxu0 0
      %915 = vmatpush1.bf16.msra.mxu0 0
      %916 = vmatprep.subr.bf16.mxu0 0
      %917 = vmatpush1.bf16.msra.mxu0 0
      %918 = vmatprep.subr.bf16.mxu0 0
      %919 = vmatpush1.bf16.msra.mxu0 0
      %920 = vmatprep.subr.bf16.mxu0 0
      %921 = vmatpush1.bf16.msra.mxu0 0
      %922 = vmatprep.mubr.bf16.mxu0 0
      %923 = vmatmul.mubr.bf16.gmra.mrb[0].mxu0 %v530
      %v924 = vpop.f32.mrb[0].mxu0
      %v925 = vadd.f32 %v355, %v924
      %v926 = vpop.f32.mrb[0].mxu0
      %v927 = vadd.f32 %v359, %v926
      %v928 = vpop.f32.mrb[0].mxu0
      %v929 = vadd.f32 %v355, %v928
      %v930 = vpop.f32.mrb[0].mxu0
      %v931 = vadd.f32 %v359, %v930
      %932 = vmatprep.mubr.bf16.mxu0 0
      %933 = vmatmul.mubr.bf16.gmra.mrb[0].mxu0 %v533
      %v934 = vpop.f32.mrb[0].mxu0
      %v935 = vadd.f32 %v355, %v934
      %v936 = vpop.f32.mrb[0].mxu0
      %v937 = vadd.f32 %v359, %v936
      %v938 = vpop.f32.mrb[0].mxu0
      %v939 = vadd.f32 %v355, %v938
      %v940 = vpop.f32.mrb[0].mxu0
      %v941 = vadd.f32 %v359, %v940
      %942 = vmatprep.mubr.bf16.mxu0 0
      %943 = vmatmul.mubr.bf16.gmra.mrb[0].mxu0 %v536
      %v944 = vpop.f32.mrb[0].mxu0
      %v945 = vadd.f32 %v355, %v944
      %v946 = vpop.f32.mrb[0].mxu0
      %v947 = vadd.f32 %v359, %v946
      %v948 = vpop.f32.mrb[0].mxu0
      %v949 = vadd.f32 %v355, %v948
      %v950 = vpop.f32.mrb[0].mxu0
      %v951 = vadd.f32 %v359, %v950
      %952 = vmatprep.mubr.bf16.mxu0 0
      %953 = vmatmul.mubr.bf16.gmra.mrb[0].mxu0 %v539
      %v954 = vpop.f32.mrb[0].mxu0
      %v955 = vadd.f32 %v355, %v954
      %v956 = vpop.f32.mrb[0].mxu0
      %v957 = vadd.f32 %v359, %v956
      %v958 = vpop.f32.mrb[0].mxu0
      %v959 = vadd.f32 %v355, %v958
      %v960 = vpop.f32.mrb[0].mxu0
      %v961 = vadd.f32 %v359, %v960
      %962 = vmatprep.mubr.bf16.mxu0 0
      %963 = vmatmul.mubr.bf16.gmra.mrb[0].mxu0 %v542
      %v964 = vpop.f32.mrb[0].mxu0
      %v965 = vadd.f32 %v355, %v964
      %v966 = vpop.f32.mrb[0].mxu0
      %v967 = vadd.f32 %v359, %v966
      %v968 = vpop.f32.mrb[0].mxu0
      %v969 = vadd.f32 %v355, %v968
      %v970 = vpop.f32.mrb[0].mxu0
      %v971 = vadd.f32 %v359, %v970
      %972 = vmatprep.mubr.bf16.mxu0 0
      %973 = vmatmul.mubr.bf16.gmra.mrb[0].mxu0 %v545
      %v974 = vpop.f32.mrb[0].mxu0
      %v975 = vadd.f32 %v355, %v974
      %v976 = vpop.f32.mrb[0].mxu0
      %v977 = vadd.f32 %v359, %v976
      %v978 = vpop.f32.mrb[0].mxu0
      %v979 = vadd.f32 %v355, %v978
      %v980 = vpop.f32.mrb[0].mxu0
      %v981 = vadd.f32 %v359, %v980
      %982 = vmatprep.mubr.bf16.mxu0 0
      %983 = vmatmul.mubr.bf16.gmra.mrb[0].mxu0 %v548
      %v984 = vpop.f32.mrb[0].mxu0
      %v985 = vadd.f32 %v355, %v984
      %v986 = vpop.f32.mrb[0].mxu0
      %v987 = vadd.f32 %v359, %v986
      %v988 = vpop.f32.mrb[0].mxu0
      %v989 = vadd.f32 %v355, %v988
      %v990 = vpop.f32.mrb[0].mxu0
      %v991 = vadd.f32 %v359, %v990
      %992 = vmatprep.mubr.bf16.mxu0 0
      %993 = vmatmul.mubr.bf16.gmra.mrb[0].mxu0 %v551
      %v994 = vpop.f32.mrb[0].mxu0
      %v995 = vadd.f32 %v355, %v994
      %v996 = vpop.f32.mrb[0].mxu0
      %v997 = vadd.f32 %v359, %v996
      %v998 = vpop.f32.mrb[0].mxu0
      %v999 = vadd.f32 %v355, %v998
      %v1000 = vpop.f32.mrb[0].mxu0
      %v1001 = vadd.f32 %v359, %v1000
      %1002 = vmatprep.mubr.bf16.mxu0 0
      %1003 = vmatmul.mubr.bf16.gmra.mrb[0].mxu0 %v554
      %v1004 = vpop.f32.mrb[0].mxu0
      %v1005 = vadd.f32 %v355, %v1004
      %v1006 = vpop.f32.mrb[0].mxu0
      %v1007 = vadd.f32 %v359, %v1006
      %v1008 = vpop.f32.mrb[0].mxu0
      %v1009 = vadd.f32 %v355, %v1008
      %v1010 = vpop.f32.mrb[0].mxu0
      %v1011 = vadd.f32 %v359, %v1010
      %1012 = vmatprep.mubr.bf16.mxu0 0
      %1013 = vmatmul.mubr.bf16.gmra.mrb[0].mxu0 %v557
      %v1014 = vpop.f32.mrb[0].mxu0
      %v1015 = vadd.f32 %v355, %v1014
      %v1016 = vpop.f32.mrb[0].mxu0
      %v1017 = vadd.f32 %v359, %v1016
      %v1018 = vpop.f32.mrb[0].mxu0
      %v1019 = vadd.f32 %v355, %v1018
      %v1020 = vpop.f32.mrb[0].mxu0
      %v1021 = vadd.f32 %v359, %v1020
      %1022 = vmatprep.mubr.bf16.mxu0 0
      %1023 = vmatmul.mubr.bf16.gmra.mrb[0].mxu0 %v560
      %v1024 = vpop.f32.mrb[0].mxu0
      %v1025 = vadd.f32 %v355, %v1024
      %v1026 = vpop.f32.mrb[0].mxu0
      %v1027 = vadd.f32 %v359, %v1026
      %v1028 = vpop.f32.mrb[0].mxu0
      %v1029 = vadd.f32 %v355, %v1028
      %v1030 = vpop.f32.mrb[0].mxu0
      %v1031 = vadd.f32 %v359, %v1030
      %1032 = vmatprep.mubr.bf16.mxu0 0
      %1033 = vmatmul.mubr.bf16.gmra.mrb[0].mxu0 %v563
      %v1034 = vpop.f32.mrb[0].mxu0
      %v1035 = vadd.f32 %v355, %v1034
      %v1036 = vpop.f32.mrb[0].mxu0
      %v1037 = vadd.f32 %v359, %v1036
      %v1038 = vpop.f32.mrb[0].mxu0
      %v1039 = vadd.f32 %v355, %v1038
      %v1040 = vpop.f32.mrb[0].mxu0
      %v1041 = vadd.f32 %v359, %v1040
      %1042 = vmatprep.mubr.bf16.mxu0 0
      %1043 = vmatmul.mubr.bf16.gmra.mrb[0].mxu0 %v566
      %v1044 = vpop.f32.mrb[0].mxu0
      %v1045 = vadd.f32 %v355, %v1044
      %v1046 = vpop.f32.mrb[0].mxu0
      %v1047 = vadd.f32 %v359, %v1046
      %v1048 = vpop.f32.mrb[0].mxu0
      %v1049 = vadd.f32 %v355, %v1048
      %v1050 = vpop.f32.mrb[0].mxu0
      %v1051 = vadd.f32 %v359, %v1050
      %1052 = vmatprep.mubr.bf16.mxu0 0
      %1053 = vmatmul.mubr.bf16.gmra.mrb[0].mxu0 %v569
      %v1054 = vpop.f32.mrb[0].mxu0
      %v1055 = vadd.f32 %v355, %v1054
      %v1056 = vpop.f32.mrb[0].mxu0
      %v1057 = vadd.f32 %v359, %v1056
      %v1058 = vpop.f32.mrb[0].mxu0
      %v1059 = vadd.f32 %v355, %v1058
      %v1060 = vpop.f32.mrb[0].mxu0
      %v1061 = vadd.f32 %v359, %v1060
      %1062 = vmatprep.mubr.bf16.mxu0 0
      %1063 = vmatmul.mubr.bf16.gmra.mrb[0].mxu0 %v572
      %v1064 = vpop.f32.mrb[0].mxu0
      %v1065 = vadd.f32 %v355, %v1064
      %v1066 = vpop.f32.mrb[0].mxu0
      %v1067 = vadd.f32 %v359, %v1066
      %v1068 = vpop.f32.mrb[0].mxu0
      %v1069 = vadd.f32 %v355, %v1068
      %v1070 = vpop.f32.mrb[0].mxu0
      %v1071 = vadd.f32 %v359, %v1070
      %1072 = vmatprep.mubr.bf16.mxu0 0
      %1073 = vmatmul.mubr.bf16.gmra.mrb[0].mxu0 %v575
      %v1074 = vpop.f32.mrb[0].mxu0
      %v1075 = vadd.f32 %v355, %v1074
      %v1076 = vpop.f32.mrb[0].mxu0
      %v1077 = vadd.f32 %v359, %v1076
      %v1078 = vpop.f32.mrb[0].mxu0
      %v1079 = vadd.f32 %v355, %v1078
      %v1080 = vpop.f32.mrb[0].mxu0
      %v1081 = vadd.f32 %v359, %v1080
      %1082 = vmatprep.mubr.bf16.mxu0 0
      %1083 = vmatmul.mubr.bf16.gmra.mrb[0].mxu0 %v578
      %v1084 = vpop.f32.mrb[0].mxu0
      %v1085 = vadd.f32 %v355, %v1084
      %v1086 = vpop.f32.mrb[0].mxu0
      %v1087 = vadd.f32 %v359, %v1086
      %v1088 = vpop.f32.mrb[0].mxu0
      %v1089 = vadd.f32 %v355, %v1088
      %v1090 = vpop.f32.mrb[0].mxu0
      %v1091 = vadd.f32 %v359, %v1090
      %1092 = vmatprep.mubr.bf16.mxu0 0
      %1093 = vmatmul.mubr.bf16.gmra.mrb[0].mxu0 %v581
      %v1094 = vpop.f32.mrb[0].mxu0
      %v1095 = vadd.f32 %v355, %v1094
      %v1096 = vpop.f32.mrb[0].mxu0
      %v1097 = vadd.f32 %v359, %v1096
      %v1098 = vpop.f32.mrb[0].mxu0
      %v1099 = vadd.f32 %v355, %v1098
      %v1100 = vpop.f32.mrb[0].mxu0
      %v1101 = vadd.f32 %v359, %v1100
      %1102 = vmatprep.mubr.bf16.mxu0 0
      %1103 = vmatmul.mubr.bf16.gmra.mrb[0].mxu0 %v584
      %v1104 = vpop.f32.mrb[0].mxu0
      %v1105 = vadd.f32 %v355, %v1104
      %v1106 = vpop.f32.mrb[0].mxu0
      %v1107 = vadd.f32 %v359, %v1106
      %v1108 = vpop.f32.mrb[0].mxu0
      %v1109 = vadd.f32 %v355, %v1108
      %v1110 = vpop.f32.mrb[0].mxu0
      %v1111 = vadd.f32 %v359, %v1110
      %1112 = vmatprep.mubr.bf16.mxu0 0
      %1113 = vmatmul.mubr.bf16.gmra.mrb[0].mxu0 %v587
      %v1114 = vpop.f32.mrb[0].mxu0
      %v1115 = vadd.f32 %v355, %v1114
      %v1116 = vpop.f32.mrb[0].mxu0
      %v1117 = vadd.f32 %v359, %v1116
      %v1118 = vpop.f32.mrb[0].mxu0
      %v1119 = vadd.f32 %v355, %v1118
      %v1120 = vpop.f32.mrb[0].mxu0
      %v1121 = vadd.f32 %v359, %v1120
      %1122 = vmatprep.mubr.bf16.mxu0 0
      %1123 = vmatmul.mubr.bf16.gmra.mrb[0].mxu0 %v590
      %v1124 = vpop.f32.mrb[0].mxu0
      %v1125 = vadd.f32 %v355, %v1124
      %v1126 = vpop.f32.mrb[0].mxu0
      %v1127 = vadd.f32 %v359, %v1126
      %v1128 = vpop.f32.mrb[0].mxu0
      %v1129 = vadd.f32 %v355, %v1128
      %v1130 = vpop.f32.mrb[0].mxu0
      %v1131 = vadd.f32 %v359, %v1130
      %1132 = vmatprep.mubr.bf16.mxu0 0
      %1133 = vmatmul.mubr.bf16.gmra.mrb[0].mxu0 %v593
      %v1134 = vpop.f32.mrb[0].mxu0
      %v1135 = vadd.f32 %v355, %v1134
      %v1136 = vpop.f32.mrb[0].mxu0
      %v1137 = vadd.f32 %v359, %v1136
      %v1138 = vpop.f32.mrb[0].mxu0
      %v1139 = vadd.f32 %v355, %v1138
      %v1140 = vpop.f32.mrb[0].mxu0
      %v1141 = vadd.f32 %v359, %v1140
      %1142 = vmatprep.mubr.bf16.mxu0 0
      %1143 = vmatmul.mubr.bf16.gmra.mrb[0].mxu0 %v596
      %v1144 = vpop.f32.mrb[0].mxu0
      %v1145 = vadd.f32 %v355, %v1144
      %v1146 = vpop.f32.mrb[0].mxu0
      %v1147 = vadd.f32 %v359, %v1146
      %v1148 = vpop.f32.mrb[0].mxu0
      %v1149 = vadd.f32 %v355, %v1148
      %v1150 = vpop.f32.mrb[0].mxu0
      %v1151 = vadd.f32 %v359, %v1150
      %1152 = vmatprep.mubr.bf16.mxu0 0
      %1153 = vmatmul.mubr.bf16.gmra.mrb[0].mxu0 %v599
      %v1154 = vpop.f32.mrb[0].mxu0
      %v1155 = vadd.f32 %v355, %v1154
      %v1156 = vpop.f32.mrb[0].mxu0
      %v1157 = vadd.f32 %v359, %v1156
      %v1158 = vpop.f32.mrb[0].mxu0
      %v1159 = vadd.f32 %v355, %v1158
      %v1160 = vpop.f32.mrb[0].mxu0
      %v1161 = vadd.f32 %v359, %v1160
      %1162 = vdwg.mxu0
      %1163 = vmatprep.subr.bf16.mxu0 0
      %1164 = vmatpush1.bf16.msra.mxu0 %v517
      %1165 = vmatprep.subr.bf16.mxu0 0
      %1166 = vmatpush1.bf16.msra.mxu0 %v615
      %1167 = vmatprep.subr.bf16.mxu0 0
      %1168 = vmatpush1.bf16.msra.mxu0 0
      %1169 = vmatprep.subr.bf16.mxu0 0
      %1170 = vmatpush1.bf16.msra.mxu0 0
      %1171 = vmatprep.subr.bf16.mxu0 0
      %1172 = vmatpush1.bf16.msra.mxu0 0
      %1173 = vmatprep.subr.bf16.mxu0 0
      %1174 = vmatpush1.bf16.msra.mxu0 0
      %1175 = vmatprep.subr.bf16.mxu0 0
      %1176 = vmatpush1.bf16.msra.mxu0 0
      %1177 = vmatprep.subr.bf16.mxu0 0
      %1178 = vmatpush1.bf16.msra.mxu0 0
      %1179 = vmatprep.subr.bf16.mxu0 0
      %1180 = vmatpush1.bf16.msra.mxu0 0
      %1181 = vmatprep.subr.bf16.mxu0 0
      %1182 = vmatpush1.bf16.msra.mxu0 0
      %1183 = vmatprep.subr.bf16.mxu0 0
      %1184 = vmatpush1.bf16.msra.mxu0 0
      %1185 = vmatprep.subr.bf16.mxu0 0
      %1186 = vmatpush1.bf16.msra.mxu0 0
      %1187 = vmatprep.subr.bf16.mxu0 0
      %1188 = vmatpush1.bf16.msra.mxu0 0
      %1189 = vmatprep.subr.bf16.mxu0 0
      %1190 = vmatpush1.bf16.msra.mxu0 0
      %1191 = vmatprep.subr.bf16.mxu0 0
      %1192 = vmatpush1.bf16.msra.mxu0 0
      %1193 = vmatprep.subr.bf16.mxu0 0
      %1194 = vmatpush1.bf16.msra.mxu0 0
      %1195 = vmatprep.mubr.bf16.mxu0 0
      %1196 = vmatmul.mubr.bf16.gmra.mrb[0].mxu0 %v530
      %v1197 = vpop.f32.mrb[0].mxu0
      %v1198 = vadd.f32 %v363, %v1197
      %v1199 = vpop.f32.mrb[0].mxu0
      %v1200 = vpop.f32.mrb[0].mxu0
      %v1201 = vadd.f32 %v363, %v1200
      %v1202 = vpop.f32.mrb[0].mxu0
      %1203 = vmatprep.mubr.bf16.mxu0 0
      %1204 = vmatmul.mubr.bf16.gmra.mrb[0].mxu0 %v533
      %v1205 = vpop.f32.mrb[0].mxu0
      %v1206 = vadd.f32 %v363, %v1205
      %v1207 = vpop.f32.mrb[0].mxu0
      %v1208 = vpop.f32.mrb[0].mxu0
      %v1209 = vadd.f32 %v363, %v1208
      %v1210 = vpop.f32.mrb[0].mxu0
      %1211 = vmatprep.mubr.bf16.mxu0 0
      %1212 = vmatmul.mubr.bf16.gmra.mrb[0].mxu0 %v536
      %v1213 = vpop.f32.mrb[0].mxu0
      %v1214 = vadd.f32 %v363, %v1213
      %v1215 = vpop.f32.mrb[0].mxu0
      %v1216 = vpop.f32.mrb[0].mxu0
      %v1217 = vadd.f32 %v363, %v1216
      %v1218 = vpop.f32.mrb[0].mxu0
      %1219 = vmatprep.mubr.bf16.mxu0 0
      %1220 = vmatmul.mubr.bf16.gmra.mrb[0].mxu0 %v539
      %v1221 = vpop.f32.mrb[0].mxu0
      %v1222 = vadd.f32 %v363, %v1221
      %v1223 = vpop.f32.mrb[0].mxu0
      %v1224 = vpop.f32.mrb[0].mxu0
      %v1225 = vadd.f32 %v363, %v1224
      %v1226 = vpop.f32.mrb[0].mxu0
      %1227 = vmatprep.mubr.bf16.mxu0 0
      %1228 = vmatmul.mubr.bf16.gmra.mrb[0].mxu0 %v542
      %v1229 = vpop.f32.mrb[0].mxu0
      %v1230 = vadd.f32 %v363, %v1229
      %v1231 = vpop.f32.mrb[0].mxu0
      %v1232 = vpop.f32.mrb[0].mxu0
      %v1233 = vadd.f32 %v363, %v1232
      %v1234 = vpop.f32.mrb[0].mxu0
      %1235 = vmatprep.mubr.bf16.mxu0 0
      %1236 = vmatmul.mubr.bf16.gmra.mrb[0].mxu0 %v545
      %v1237 = vpop.f32.mrb[0].mxu0
      %v1238 = vadd.f32 %v363, %v1237
      %v1239 = vpop.f32.mrb[0].mxu0
      %v1240 = vpop.f32.mrb[0].mxu0
      %v1241 = vadd.f32 %v363, %v1240
      %v1242 = vpop.f32.mrb[0].mxu0
      %1243 = vmatprep.mubr.bf16.mxu0 0
      %1244 = vmatmul.mubr.bf16.gmra.mrb[0].mxu0 %v548
      %v1245 = vpop.f32.mrb[0].mxu0
      %v1246 = vadd.f32 %v363, %v1245
      %v1247 = vpop.f32.mrb[0].mxu0
      %v1248 = vpop.f32.mrb[0].mxu0
      %v1249 = vadd.f32 %v363, %v1248
      %v1250 = vpop.f32.mrb[0].mxu0
      %1251 = vmatprep.mubr.bf16.mxu0 0
      %1252 = vmatmul.mubr.bf16.gmra.mrb[0].mxu0 %v551
      %v1253 = vpop.f32.mrb[0].mxu0
      %v1254 = vadd.f32 %v363, %v1253
      %v1255 = vpop.f32.mrb[0].mxu0
      %v1256 = vpop.f32.mrb[0].mxu0
      %v1257 = vadd.f32 %v363, %v1256
      %v1258 = vpop.f32.mrb[0].mxu0
      %1259 = vmatprep.mubr.bf16.mxu0 0
      %1260 = vmatmul.mubr.bf16.gmra.mrb[0].mxu0 %v554
      %v1261 = vpop.f32.mrb[0].mxu0
      %v1262 = vadd.f32 %v363, %v1261
      %v1263 = vpop.f32.mrb[0].mxu0
      %v1264 = vpop.f32.mrb[0].mxu0
      %v1265 = vadd.f32 %v363, %v1264
      %v1266 = vpop.f32.mrb[0].mxu0
      %1267 = vmatprep.mubr.bf16.mxu0 0
      %1268 = vmatmul.mubr.bf16.gmra.mrb[0].mxu0 %v557
      %v1269 = vpop.f32.mrb[0].mxu0
      %v1270 = vadd.f32 %v363, %v1269
      %v1271 = vpop.f32.mrb[0].mxu0
      %v1272 = vpop.f32.mrb[0].mxu0
      %v1273 = vadd.f32 %v363, %v1272
      %v1274 = vpop.f32.mrb[0].mxu0
      %1275 = vmatprep.mubr.bf16.mxu0 0
      %1276 = vmatmul.mubr.bf16.gmra.mrb[0].mxu0 %v560
      %v1277 = vpop.f32.mrb[0].mxu0
      %v1278 = vadd.f32 %v363, %v1277
      %v1279 = vpop.f32.mrb[0].mxu0
      %v1280 = vpop.f32.mrb[0].mxu0
      %v1281 = vadd.f32 %v363, %v1280
      %v1282 = vpop.f32.mrb[0].mxu0
      %1283 = vmatprep.mubr.bf16.mxu0 0
      %1284 = vmatmul.mubr.bf16.gmra.mrb[0].mxu0 %v563
      %v1285 = vpop.f32.mrb[0].mxu0
      %v1286 = vadd.f32 %v363, %v1285
      %v1287 = vpop.f32.mrb[0].mxu0
      %v1288 = vpop.f32.mrb[0].mxu0
      %v1289 = vadd.f32 %v363, %v1288
      %v1290 = vpop.f32.mrb[0].mxu0
      %1291 = vmatprep.mubr.bf16.mxu0 0
      %1292 = vmatmul.mubr.bf16.gmra.mrb[0].mxu0 %v566
      %v1293 = vpop.f32.mrb[0].mxu0
      %v1294 = vadd.f32 %v363, %v1293
      %v1295 = vpop.f32.mrb[0].mxu0
      %v1296 = vpop.f32.mrb[0].mxu0
      %v1297 = vadd.f32 %v363, %v1296
      %v1298 = vpop.f32.mrb[0].mxu0
      %1299 = vmatprep.mubr.bf16.mxu0 0
      %1300 = vmatmul.mubr.bf16.gmra.mrb[0].mxu0 %v569
      %v1301 = vpop.f32.mrb[0].mxu0
      %v1302 = vadd.f32 %v363, %v1301
      %v1303 = vpop.f32.mrb[0].mxu0
      %v1304 = vpop.f32.mrb[0].mxu0
      %v1305 = vadd.f32 %v363, %v1304
      %v1306 = vpop.f32.mrb[0].mxu0
      %1307 = vmatprep.mubr.bf16.mxu0 0
      %1308 = vmatmul.mubr.bf16.gmra.mrb[0].mxu0 %v572
      %v1309 = vpop.f32.mrb[0].mxu0
      %v1310 = vadd.f32 %v363, %v1309
      %v1311 = vpop.f32.mrb[0].mxu0
      %v1312 = vpop.f32.mrb[0].mxu0
      %v1313 = vadd.f32 %v363, %v1312
      %v1314 = vpop.f32.mrb[0].mxu0
      %1315 = vmatprep.mubr.bf16.mxu0 0
      %1316 = vmatmul.mubr.bf16.gmra.mrb[0].mxu0 %v575
      %v1317 = vpop.f32.mrb[0].mxu0
      %v1318 = vadd.f32 %v363, %v1317
      %v1319 = vpop.f32.mrb[0].mxu0
      %v1320 = vpop.f32.mrb[0].mxu0
      %v1321 = vadd.f32 %v363, %v1320
      %v1322 = vpop.f32.mrb[0].mxu0
      %1323 = vmatprep.mubr.bf16.mxu0 0
      %1324 = vmatmul.mubr.bf16.gmra.mrb[0].mxu0 %v578
      %v1325 = vpop.f32.mrb[0].mxu0
      %v1326 = vadd.f32 %v363, %v1325
      %v1327 = vpop.f32.mrb[0].mxu0
      %v1328 = vpop.f32.mrb[0].mxu0
      %v1329 = vadd.f32 %v363, %v1328
      %v1330 = vpop.f32.mrb[0].mxu0
      %1331 = vmatprep.mubr.bf16.mxu0 0
      %1332 = vmatmul.mubr.bf16.gmra.mrb[0].mxu0 %v581
      %v1333 = vpop.f32.mrb[0].mxu0
      %v1334 = vadd.f32 %v363, %v1333
      %v1335 = vpop.f32.mrb[0].mxu0
      %v1336 = vpop.f32.mrb[0].mxu0
      %v1337 = vadd.f32 %v363, %v1336
      %v1338 = vpop.f32.mrb[0].mxu0
      %1339 = vmatprep.mubr.bf16.mxu0 0
      %1340 = vmatmul.mubr.bf16.gmra.mrb[0].mxu0 %v584
      %v1341 = vpop.f32.mrb[0].mxu0
      %v1342 = vadd.f32 %v363, %v1341
      %v1343 = vpop.f32.mrb[0].mxu0
      %v1344 = vpop.f32.mrb[0].mxu0
      %v1345 = vadd.f32 %v363, %v1344
      %v1346 = vpop.f32.mrb[0].mxu0
      %1347 = vmatprep.mubr.bf16.mxu0 0
      %1348 = vmatmul.mubr.bf16.gmra.mrb[0].mxu0 %v587
      %v1349 = vpop.f32.mrb[0].mxu0
      %v1350 = vadd.f32 %v363, %v1349
      %v1351 = vpop.f32.mrb[0].mxu0
      %v1352 = vpop.f32.mrb[0].mxu0
      %v1353 = vadd.f32 %v363, %v1352
      %v1354 = vpop.f32.mrb[0].mxu0
      %1355 = vmatprep.mubr.bf16.mxu0 0
      %1356 = vmatmul.mubr.bf16.gmra.mrb[0].mxu0 %v590
      %v1357 = vpop.f32.mrb[0].mxu0
      %v1358 = vadd.f32 %v363, %v1357
      %v1359 = vpop.f32.mrb[0].mxu0
      %v1360 = vpop.f32.mrb[0].mxu0
      %v1361 = vadd.f32 %v363, %v1360
      %v1362 = vpop.f32.mrb[0].mxu0
      %1363 = vmatprep.mubr.bf16.mxu0 0
      %1364 = vmatmul.mubr.bf16.gmra.mrb[0].mxu0 %v593
      %v1365 = vpop.f32.mrb[0].mxu0
      %v1366 = vadd.f32 %v363, %v1365
      %v1367 = vpop.f32.mrb[0].mxu0
      %v1368 = vpop.f32.mrb[0].mxu0
      %v1369 = vadd.f32 %v363, %v1368
      %v1370 = vpop.f32.mrb[0].mxu0
      %1371 = vmatprep.mubr.bf16.mxu0 0
      %1372 = vmatmul.mubr.bf16.gmra.mrb[0].mxu0 %v596
      %v1373 = vpop.f32.mrb[0].mxu0
      %v1374 = vadd.f32 %v363, %v1373
      %v1375 = vpop.f32.mrb[0].mxu0
      %v1376 = vpop.f32.mrb[0].mxu0
      %v1377 = vadd.f32 %v363, %v1376
      %v1378 = vpop.f32.mrb[0].mxu0
      %1379 = vmatprep.mubr.bf16.mxu0 0
      %1380 = vmatmul.mubr.bf16.gmra.mrb[0].mxu0 %v599
      %v1381 = vpop.f32.mrb[0].mxu0
      %v1382 = vadd.f32 %v363, %v1381
      %v1383 = vpop.f32.mrb[0].mxu0
      %v1384 = vpop.f32.mrb[0].mxu0
      %v1385 = vadd.f32 %v363, %v1384
      %v1386 = vpop.f32.mrb[0].mxu0
      %1387 = vdwg.mxu0
      %v1388 = vmax.f32 %v652, 0.0
      %v1389 = vmax.f32 %v654, 0.0
      %v1390 = vmax.f32 %v925, 0.0
      %v1391 = vmax.f32 %v927, 0.0
      %v1392 = vmax.f32 %v1198, 0.0
      %v1393 = vmax.f32 %v656, 0.0
      %v1394 = vmax.f32 %v658, 0.0
      %v1395 = vmax.f32 %v929, 0.0
      %v1396 = vmax.f32 %v931, 0.0
      %v1397 = vmax.f32 %v1201, 0.0
      %v1398 = vmax.f32 %v662, 0.0
      %v1399 = vmax.f32 %v664, 0.0
      %v1400 = vmax.f32 %v935, 0.0
      %v1401 = vmax.f32 %v937, 0.0
      %v1402 = vmax.f32 %v1206, 0.0
      %v1403 = vmax.f32 %v666, 0.0
      %v1404 = vmax.f32 %v668, 0.0
      %v1405 = vmax.f32 %v939, 0.0
      %v1406 = vmax.f32 %v941, 0.0
      %v1407 = vmax.f32 %v1209, 0.0
      %v1408 = vmax.f32 %v672, 0.0
      %v1409 = vmax.f32 %v674, 0.0
      %v1410 = vmax.f32 %v945, 0.0
      %v1411 = vmax.f32 %v947, 0.0
      %v1412 = vmax.f32 %v1214, 0.0
      %v1413 = vmax.f32 %v676, 0.0
      %v1414 = vmax.f32 %v678, 0.0
      %v1415 = vmax.f32 %v949, 0.0
      %v1416 = vmax.f32 %v951, 0.0
      %v1417 = vmax.f32 %v1217, 0.0
      %v1418 = vmax.f32 %v682, 0.0
      %v1419 = vmax.f32 %v684, 0.0
      %v1420 = vmax.f32 %v955, 0.0
      %v1421 = vmax.f32 %v957, 0.0
      %v1422 = vmax.f32 %v1222, 0.0
      %v1423 = vmax.f32 %v686, 0.0
      %v1424 = vmax.f32 %v688, 0.0
      %v1425 = vmax.f32 %v959, 0.0
      %v1426 = vmax.f32 %v961, 0.0
      %v1427 = vmax.f32 %v1225, 0.0
      %v1428 = vmax.f32 %v692, 0.0
      %v1429 = vmax.f32 %v694, 0.0
      %v1430 = vmax.f32 %v965, 0.0
      %v1431 = vmax.f32 %v967, 0.0
      %v1432 = vmax.f32 %v1230, 0.0
      %v1433 = vmax.f32 %v696, 0.0
      %v1434 = vmax.f32 %v698, 0.0
      %v1435 = vmax.f32 %v969, 0.0
      %v1436 = vmax.f32 %v971, 0.0
      %v1437 = vmax.f32 %v1233, 0.0
      %v1438 = vmax.f32 %v702, 0.0
      %v1439 = vmax.f32 %v704, 0.0
      %v1440 = vmax.f32 %v975, 0.0
      %v1441 = vmax.f32 %v977, 0.0
      %v1442 = vmax.f32 %v1238, 0.0
      %v1443 = vmax.f32 %v706, 0.0
      %v1444 = vmax.f32 %v708, 0.0
      %v1445 = vmax.f32 %v979, 0.0
      %v1446 = vmax.f32 %v981, 0.0
      %v1447 = vmax.f32 %v1241, 0.0
      %v1448 = vmax.f32 %v712, 0.0
      %v1449 = vmax.f32 %v714, 0.0
      %v1450 = vmax.f32 %v985, 0.0
      %v1451 = vmax.f32 %v987, 0.0
      %v1452 = vmax.f32 %v1246, 0.0
      %v1453 = vmax.f32 %v716, 0.0
      %v1454 = vmax.f32 %v718, 0.0
      %v1455 = vmax.f32 %v989, 0.0
      %v1456 = vmax.f32 %v991, 0.0
      %v1457 = vmax.f32 %v1249, 0.0
      %v1458 = vmax.f32 %v722, 0.0
      %v1459 = vmax.f32 %v724, 0.0
      %v1460 = vmax.f32 %v995, 0.0
      %v1461 = vmax.f32 %v997, 0.0
      %v1462 = vmax.f32 %v1254, 0.0
      %v1463 = vmax.f32 %v726, 0.0
      %v1464 = vmax.f32 %v728, 0.0
      %v1465 = vmax.f32 %v999, 0.0
      %v1466 = vmax.f32 %v1001, 0.0
      %v1467 = vmax.f32 %v1257, 0.0
      %v1468 = vmax.f32 %v732, 0.0
      %v1469 = vmax.f32 %v734, 0.0
      %v1470 = vmax.f32 %v1005, 0.0
      %v1471 = vmax.f32 %v1007, 0.0
      %v1472 = vmax.f32 %v1262, 0.0
      %v1473 = vmax.f32 %v736, 0.0
      %v1474 = vmax.f32 %v738, 0.0
      %v1475 = vmax.f32 %v1009, 0.0
      %v1476 = vmax.f32 %v1011, 0.0
      %v1477 = vmax.f32 %v1265, 0.0
      %v1478 = vmax.f32 %v742, 0.0
      %v1479 = vmax.f32 %v744, 0.0
      %v1480 = vmax.f32 %v1015, 0.0
      %v1481 = vmax.f32 %v1017, 0.0
      %v1482 = vmax.f32 %v1270, 0.0
      %v1483 = vmax.f32 %v746, 0.0
      %v1484 = vmax.f32 %v748, 0.0
      %v1485 = vmax.f32 %v1019, 0.0
      %v1486 = vmax.f32 %v1021, 0.0
      %v1487 = vmax.f32 %v1273, 0.0
      %v1488 = vmax.f32 %v752, 0.0
      %v1489 = vmax.f32 %v754, 0.0
      %v1490 = vmax.f32 %v1025, 0.0
      %v1491 = vmax.f32 %v1027, 0.0
      %v1492 = vmax.f32 %v1278, 0.0
      %v1493 = vmax.f32 %v756, 0.0
      %v1494 = vmax.f32 %v758, 0.0
      %v1495 = vmax.f32 %v1029, 0.0
      %v1496 = vmax.f32 %v1031, 0.0
      %v1497 = vmax.f32 %v1281, 0.0
      %v1498 = vmax.f32 %v762, 0.0
      %v1499 = vmax.f32 %v764, 0.0
      %v1500 = vmax.f32 %v1035, 0.0
      %v1501 = vmax.f32 %v1037, 0.0
      %v1502 = vmax.f32 %v1286, 0.0
      %v1503 = vmax.f32 %v766, 0.0
      %v1504 = vmax.f32 %v768, 0.0
      %v1505 = vmax.f32 %v1039, 0.0
      %v1506 = vmax.f32 %v1041, 0.0
      %v1507 = vmax.f32 %v1289, 0.0
      %v1508 = vmax.f32 %v772, 0.0
      %v1509 = vmax.f32 %v774, 0.0
      %v1510 = vmax.f32 %v1045, 0.0
      %v1511 = vmax.f32 %v1047, 0.0
      %v1512 = vmax.f32 %v1294, 0.0
      %v1513 = vmax.f32 %v776, 0.0
      %v1514 = vmax.f32 %v778, 0.0
      %v1515 = vmax.f32 %v1049, 0.0
      %v1516 = vmax.f32 %v1051, 0.0
      %v1517 = vmax.f32 %v1297, 0.0
      %v1518 = vmax.f32 %v782, 0.0
      %v1519 = vmax.f32 %v784, 0.0
      %v1520 = vmax.f32 %v1055, 0.0
      %v1521 = vmax.f32 %v1057, 0.0
      %v1522 = vmax.f32 %v1302, 0.0
      %v1523 = vmax.f32 %v786, 0.0
      %v1524 = vmax.f32 %v788, 0.0
      %v1525 = vmax.f32 %v1059, 0.0
      %v1526 = vmax.f32 %v1061, 0.0
      %v1527 = vmax.f32 %v1305, 0.0
      %v1528 = vmax.f32 %v792, 0.0
      %v1529 = vmax.f32 %v794, 0.0
      %v1530 = vmax.f32 %v1065, 0.0
      %v1531 = vmax.f32 %v1067, 0.0
      %v1532 = vmax.f32 %v1310, 0.0
      %v1533 = vmax.f32 %v796, 0.0
      %v1534 = vmax.f32 %v798, 0.0
      %v1535 = vmax.f32 %v1069, 0.0
      %v1536 = vmax.f32 %v1071, 0.0
      %v1537 = vmax.f32 %v1313, 0.0
      %v1538 = vmax.f32 %v802, 0.0
      %v1539 = vmax.f32 %v804, 0.0
      %v1540 = vmax.f32 %v1075, 0.0
      %v1541 = vmax.f32 %v1077, 0.0
      %v1542 = vmax.f32 %v1318, 0.0
      %v1543 = vmax.f32 %v806, 0.0
      %v1544 = vmax.f32 %v808, 0.0
      %v1545 = vmax.f32 %v1079, 0.0
      %v1546 = vmax.f32 %v1081, 0.0
      %v1547 = vmax.f32 %v1321, 0.0
      %v1548 = vmax.f32 %v812, 0.0
      %v1549 = vmax.f32 %v814, 0.0
      %v1550 = vmax.f32 %v1085, 0.0
      %v1551 = vmax.f32 %v1087, 0.0
      %v1552 = vmax.f32 %v1326, 0.0
      %v1553 = vmax.f32 %v816, 0.0
      %v1554 = vmax.f32 %v818, 0.0
      %v1555 = vmax.f32 %v1089, 0.0
      %v1556 = vmax.f32 %v1091, 0.0
      %v1557 = vmax.f32 %v1329, 0.0
      %v1558 = vmax.f32 %v822, 0.0
      %v1559 = vmax.f32 %v824, 0.0
      %v1560 = vmax.f32 %v1095, 0.0
      %v1561 = vmax.f32 %v1097, 0.0
      %v1562 = vmax.f32 %v1334, 0.0
      %v1563 = vmax.f32 %v826, 0.0
      %v1564 = vmax.f32 %v828, 0.0
      %v1565 = vmax.f32 %v1099, 0.0
      %v1566 = vmax.f32 %v1101, 0.0
      %v1567 = vmax.f32 %v1337, 0.0
      %v1568 = vmax.f32 %v832, 0.0
      %v1569 = vmax.f32 %v834, 0.0
      %v1570 = vmax.f32 %v1105, 0.0
      %v1571 = vmax.f32 %v1107, 0.0
      %v1572 = vmax.f32 %v1342, 0.0
      %v1573 = vmax.f32 %v836, 0.0
      %v1574 = vmax.f32 %v838, 0.0
      %v1575 = vmax.f32 %v1109, 0.0
      %v1576 = vmax.f32 %v1111, 0.0
      %v1577 = vmax.f32 %v1345, 0.0
      %v1578 = vmax.f32 %v842, 0.0
      %v1579 = vmax.f32 %v844, 0.0
      %v1580 = vmax.f32 %v1115, 0.0
      %v1581 = vmax.f32 %v1117, 0.0
      %v1582 = vmax.f32 %v1350, 0.0
      %v1583 = vmax.f32 %v846, 0.0
      %v1584 = vmax.f32 %v848, 0.0
      %v1585 = vmax.f32 %v1119, 0.0
      %v1586 = vmax.f32 %v1121, 0.0
      %v1587 = vmax.f32 %v1353, 0.0
      %v1588 = vmax.f32 %v852, 0.0
      %v1589 = vmax.f32 %v854, 0.0
      %v1590 = vmax.f32 %v1125, 0.0
      %v1591 = vmax.f32 %v1127, 0.0
      %v1592 = vmax.f32 %v1358, 0.0
      %v1593 = vmax.f32 %v856, 0.0
      %v1594 = vmax.f32 %v858, 0.0
      %v1595 = vmax.f32 %v1129, 0.0
      %v1596 = vmax.f32 %v1131, 0.0
      %v1597 = vmax.f32 %v1361, 0.0
      %v1598 = vmax.f32 %v862, 0.0
      %v1599 = vmax.f32 %v864, 0.0
      %v1600 = vmax.f32 %v1135, 0.0
      %v1601 = vmax.f32 %v1137, 0.0
      %v1602 = vmax.f32 %v1366, 0.0
      %v1603 = vmax.f32 %v866, 0.0
      %v1604 = vmax.f32 %v868, 0.0
      %v1605 = vmax.f32 %v1139, 0.0
      %v1606 = vmax.f32 %v1141, 0.0
      %v1607 = vmax.f32 %v1369, 0.0
      %v1608 = vmax.f32 %v872, 0.0
      %v1609 = vmax.f32 %v874, 0.0
      %v1610 = vmax.f32 %v1145, 0.0
      %v1611 = vmax.f32 %v1147, 0.0
      %v1612 = vmax.f32 %v1374, 0.0
      %v1613 = vmax.f32 %v876, 0.0
      %v1614 = vmax.f32 %v878, 0.0
      %v1615 = vmax.f32 %v1149, 0.0
      %v1616 = vmax.f32 %v1151, 0.0
      %v1617 = vmax.f32 %v1377, 0.0
      %v1618 = vmax.f32 %v882, 0.0
      %v1619 = vmax.f32 %v884, 0.0
      %v1620 = vmax.f32 %v1155, 0.0
      %v1621 = vmax.f32 %v1157, 0.0
      %v1622 = vmax.f32 %v1382, 0.0
      %v1623 = vmax.f32 %v886, 0.0
      %v1624 = vmax.f32 %v888, 0.0
      %v1625 = vmax.f32 %v1159, 0.0
      %v1626 = vmax.f32 %v1161, 0.0
      %v1627 = vmax.f32 %v1385, 0.0
      %v1628 = vpack.c.bf16 %v1393, %v1388
      %v1629 = vpack.c.bf16 %v1394, %v1389
      %v1630 = vpack.c.bf16 %v1395, %v1390
      %v1631 = vpack.c.bf16 %v1396, %v1391
      %v1632 = vpack.c.bf16 %v1397, %v1392
      %v1633 = vpack.c.bf16 %v1403, %v1398
      %v1634 = vpack.c.bf16 %v1404, %v1399
      %v1635 = vpack.c.bf16 %v1405, %v1400
      %v1636 = vpack.c.bf16 %v1406, %v1401
      %v1637 = vpack.c.bf16 %v1407, %v1402
      %v1638 = vpack.c.bf16 %v1413, %v1408
      %v1639 = vpack.c.bf16 %v1414, %v1409
      %v1640 = vpack.c.bf16 %v1415, %v1410
      %v1641 = vpack.c.bf16 %v1416, %v1411
      %v1642 = vpack.c.bf16 %v1417, %v1412
      %v1643 = vpack.c.bf16 %v1423, %v1418
      %v1644 = vpack.c.bf16 %v1424, %v1419
      %v1645 = vpack.c.bf16 %v1425, %v1420
      %v1646 = vpack.c.bf16 %v1426, %v1421
      %v1647 = vpack.c.bf16 %v1427, %v1422
      %v1648 = vpack.c.bf16 %v1433, %v1428
      %v1649 = vpack.c.bf16 %v1434, %v1429
      %v1650 = vpack.c.bf16 %v1435, %v1430
      %v1651 = vpack.c.bf16 %v1436, %v1431
      %v1652 = vpack.c.bf16 %v1437, %v1432
      %v1653 = vpack.c.bf16 %v1443, %v1438
      %v1654 = vpack.c.bf16 %v1444, %v1439
      %v1655 = vpack.c.bf16 %v1445, %v1440
      %v1656 = vpack.c.bf16 %v1446, %v1441
      %v1657 = vpack.c.bf16 %v1447, %v1442
      %v1658 = vpack.c.bf16 %v1453, %v1448
      %v1659 = vpack.c.bf16 %v1454, %v1449
      %v1660 = vpack.c.bf16 %v1455, %v1450
      %v1661 = vpack.c.bf16 %v1456, %v1451
      %v1662 = vpack.c.bf16 %v1457, %v1452
      %v1663 = vpack.c.bf16 %v1463, %v1458
      %v1664 = vpack.c.bf16 %v1464, %v1459
      %v1665 = vpack.c.bf16 %v1465, %v1460
      %v1666 = vpack.c.bf16 %v1466, %v1461
      %v1667 = vpack.c.bf16 %v1467, %v1462
      %v1668 = vpack.c.bf16 %v1473, %v1468
      %v1669 = vpack.c.bf16 %v1474, %v1469
      %v1670 = vpack.c.bf16 %v1475, %v1470
      %v1671 = vpack.c.bf16 %v1476, %v1471
      %v1672 = vpack.c.bf16 %v1477, %v1472
      %v1673 = vpack.c.bf16 %v1483, %v1478
      %v1674 = vpack.c.bf16 %v1484, %v1479
      %v1675 = vpack.c.bf16 %v1485, %v1480
      %v1676 = vpack.c.bf16 %v1486, %v1481
      %v1677 = vpack.c.bf16 %v1487, %v1482
      %v1678 = vpack.c.bf16 %v1493, %v1488
      %v1679 = vpack.c.bf16 %v1494, %v1489
      %v1680 = vpack.c.bf16 %v1495, %v1490
      %v1681 = vpack.c.bf16 %v1496, %v1491
      %v1682 = vpack.c.bf16 %v1497, %v1492
      %v1683 = vpack.c.bf16 %v1503, %v1498
      %v1684 = vpack.c.bf16 %v1504, %v1499
      %v1685 = vpack.c.bf16 %v1505, %v1500
      %v1686 = vpack.c.bf16 %v1506, %v1501
      %v1687 = vpack.c.bf16 %v1507, %v1502
      %v1688 = vpack.c.bf16 %v1513, %v1508
      %v1689 = vpack.c.bf16 %v1514, %v1509
      %v1690 = vpack.c.bf16 %v1515, %v1510
      %v1691 = vpack.c.bf16 %v1516, %v1511
      %v1692 = vpack.c.bf16 %v1517, %v1512
      %v1693 = vpack.c.bf16 %v1523, %v1518
      %v1694 = vpack.c.bf16 %v1524, %v1519
      %v1695 = vpack.c.bf16 %v1525, %v1520
      %v1696 = vpack.c.bf16 %v1526, %v1521
      %v1697 = vpack.c.bf16 %v1527, %v1522
      %v1698 = vpack.c.bf16 %v1533, %v1528
      %v1699 = vpack.c.bf16 %v1534, %v1529
      %v1700 = vpack.c.bf16 %v1535, %v1530
      %v1701 = vpack.c.bf16 %v1536, %v1531
      %v1702 = vpack.c.bf16 %v1537, %v1532
      %v1703 = vpack.c.bf16 %v1543, %v1538
      %v1704 = vpack.c.bf16 %v1544, %v1539
      %v1705 = vpack.c.bf16 %v1545, %v1540
      %v1706 = vpack.c.bf16 %v1546, %v1541
      %v1707 = vpack.c.bf16 %v1547, %v1542
      %v1708 = vpack.c.bf16 %v1553, %v1548
      %v1709 = vpack.c.bf16 %v1554, %v1549
      %v1710 = vpack.c.bf16 %v1555, %v1550
      %v1711 = vpack.c.bf16 %v1556, %v1551
      %v1712 = vpack.c.bf16 %v1557, %v1552
      %v1713 = vpack.c.bf16 %v1563, %v1558
      %v1714 = vpack.c.bf16 %v1564, %v1559
      %v1715 = vpack.c.bf16 %v1565, %v1560
      %v1716 = vpack.c.bf16 %v1566, %v1561
      %v1717 = vpack.c.bf16 %v1567, %v1562
      %v1718 = vpack.c.bf16 %v1573, %v1568
      %v1719 = vpack.c.bf16 %v1574, %v1569
      %v1720 = vpack.c.bf16 %v1575, %v1570
      %v1721 = vpack.c.bf16 %v1576, %v1571
      %v1722 = vpack.c.bf16 %v1577, %v1572
      %v1723 = vpack.c.bf16 %v1583, %v1578
      %v1724 = vpack.c.bf16 %v1584, %v1579
      %v1725 = vpack.c.bf16 %v1585, %v1580
      %v1726 = vpack.c.bf16 %v1586, %v1581
      %v1727 = vpack.c.bf16 %v1587, %v1582
      %v1728 = vpack.c.bf16 %v1593, %v1588
      %v1729 = vpack.c.bf16 %v1594, %v1589
      %v1730 = vpack.c.bf16 %v1595, %v1590
      %v1731 = vpack.c.bf16 %v1596, %v1591
      %v1732 = vpack.c.bf16 %v1597, %v1592
      %v1733 = vpack.c.bf16 %v1603, %v1598
      %v1734 = vpack.c.bf16 %v1604, %v1599
      %v1735 = vpack.c.bf16 %v1605, %v1600
      %v1736 = vpack.c.bf16 %v1606, %v1601
      %v1737 = vpack.c.bf16 %v1607, %v1602
      %v1738 = vpack.c.bf16 %v1613, %v1608
      %v1739 = vpack.c.bf16 %v1614, %v1609
      %v1740 = vpack.c.bf16 %v1615, %v1610
      %v1741 = vpack.c.bf16 %v1616, %v1611
      %v1742 = vpack.c.bf16 %v1617, %v1612
      %v1743 = vpack.c.bf16 %v1623, %v1618
      %v1744 = vpack.c.bf16 %v1624, %v1619
      %v1745 = vpack.c.bf16 %v1625, %v1620
      %v1746 = vpack.c.bf16 %v1626, %v1621
      %v1747 = vpack.c.bf16 %v1627, %v1622
      %v1748 = vld [vmem:[%s3] sm:$0xf]
      %v1749 = vld [vmem:[%s3 + $0x4] sm:$0xf]
      %v1750 = vld [vmem:[%s3 + $0x8] sm:$0xf]
      %v1751 = vld [vmem:[%s3 + $0xc] sm:$0xf]
      %v1752 = vld [vmem:[%s3 + $0x10] sm:$0xf]
      %v1753 = vld [vmem:[%s3 + $0x14] sm:$0xf]
      %v1754 = vld [vmem:[%s3 + $0x18] sm:$0xf]
      %v1755 = vld [vmem:[%s3 + $0x1c] sm:$0xf]
      %v1756 = vld [vmem:[%s3 + $0x20] sm:$0xf]
      %v1757 = vld [vmem:[%s3 + $0x24] sm:$0xf]
      %v1758 = vld [vmem:[%s3 + $0x28] sm:$0xf]
      %v1759 = vld [vmem:[%s3 + $0x2c] sm:$0xf]
      %v1760 = vld [vmem:[%s3 + $0x30] sm:$0xf]
      %v1761 = vld [vmem:[%s3 + $0x34] sm:$0xf]
      %v1762 = vld [vmem:[%s3 + $0x38] sm:$0xf]
      %v1763 = vld [vmem:[%s3 + $0x3c] sm:$0xf]
      %v1764 = vld [vmem:[%s3 + $0x40] sm:$0xf]
      %v1765 = vld [vmem:[%s3 + $0x44] sm:$0xf]
      %v1766 = vld [vmem:[%s3 + $0x48] sm:$0xf]
      %v1767 = vld [vmem:[%s3 + $0x4c] sm:$0xf]
      %v1768 = vld [vmem:[%s3 + $0x50] sm:$0xf]
      %v1769 = vld [vmem:[%s3 + $0x54] sm:$0xf]
      %v1770 = vld [vmem:[%s3 + $0x58] sm:$0xf]
      %v1771 = vld [vmem:[%s3 + $0x5c] sm:$0xf]
      %v1772 = vld [vmem:[%s3 + $0x60] sm:$0xf]
      %v1773 = vld [vmem:[%s3 + $0x64] sm:$0xf]
      %v1774 = vld [vmem:[%s3 + $0x68] sm:$0xf]
      %v1775 = vld [vmem:[%s3 + $0x6c] sm:$0xf]
      %v1776 = vld [vmem:[%s3 + $0x70] sm:$0xf]
      %v1777 = vld [vmem:[%s3 + $0x74] sm:$0xf]
      %v1778 = vld [vmem:[%s3 + $0x78] sm:$0xf]
      %v1779 = vld [vmem:[%s3 + $0x7c] sm:$0xf]
      %v1780 = vld [vmem:[%s3 + $0x80] sm:$0xf]
      %v1781 = vld [vmem:[%s3 + $0x84] sm:$0xf]
      %v1782 = vld [vmem:[%s3 + $0x88] sm:$0xf]
      %v1783 = vld [vmem:[%s3 + $0x8c] sm:$0xf]
      %v1784 = vld [vmem:[%s3 + $0x90] sm:$0xf]
      %v1785 = vld [vmem:[%s3 + $0x94] sm:$0xf]
      %v1786 = vld [vmem:[%s3 + $0x98] sm:$0xf]
      %v1787 = vld [vmem:[%s3 + $0x9c] sm:$0xf]
      %v1788 = vld [vmem:[%s3 + $0xa0] sm:$0xf]
      %v1789 = vld [vmem:[%s3 + $0xa4] sm:$0xf]
      %v1790 = vld [vmem:[%s3 + $0xa8] sm:$0xf]
      %v1791 = vld [vmem:[%s3 + $0xac] sm:$0xf]
      %v1792 = vld [vmem:[%s3 + $0xb0] sm:$0xf]
      %v1793 = vld [vmem:[%s3 + $0xb4] sm:$0xf]
      %v1794 = vld [vmem:[%s3 + $0xb8] sm:$0xf]
      %v1795 = vld [vmem:[%s3 + $0xbc] sm:$0xf]
      %v1796 = vld [vmem:[%s3 + $0xc0] sm:$0xf]
      %v1797 = vld [vmem:[%s3 + $0xc4] sm:$0xf]
      %v1798 = vld [vmem:[%s3 + $0xc8] sm:$0xf]
      %v1799 = vld [vmem:[%s3 + $0xcc] sm:$0xf]
      %v1800 = vld [vmem:[%s3 + $0xd0] sm:$0xf]
      %v1801 = vld [vmem:[%s3 + $0xd4] sm:$0xf]
      %v1802 = vld [vmem:[%s3 + $0xd8] sm:$0xf]
      %v1803 = vld [vmem:[%s3 + $0xdc] sm:$0xf]
      %v1804 = vld [vmem:[%s3 + $0xe0] sm:$0xf]
      %v1805 = vld [vmem:[%s3 + $0xe4] sm:$0xf]
      %v1806 = vld [vmem:[%s3 + $0xe8] sm:$0xf]
      %v1807 = vld [vmem:[%s3 + $0xec] sm:$0xf]
      %v1808 = vld [vmem:[%s3 + $0xf0] sm:$0xf]
      %v1809 = vld [vmem:[%s3 + $0xf4] sm:$0xf]
      %v1810 = vld [vmem:[%s3 + $0xf8] sm:$0xf]
      %v1811 = vld [vmem:[%s3 + $0xfc] sm:$0xf]
      %v1812 = vld [vmem:[%s3 + $0x100] sm:$0xf]
      %v1813 = vld [vmem:[%s3 + $0x104] sm:$0xf]
      %v1814 = vld [vmem:[%s3 + $0x108] sm:$0xf]
      %v1815 = vld [vmem:[%s3 + $0x10c] sm:$0xf]
      %v1816 = vld [vmem:[%s3 + $0x110] sm:$0xf]
      %v1817 = vld [vmem:[%s3 + $0x114] sm:$0xf]
      %v1818 = vld [vmem:[%s3 + $0x118] sm:$0xf]
      %v1819 = vld [vmem:[%s3 + $0x11c] sm:$0xf]
      %v1820 = vld [vmem:[%s4] sm:$0x1]
      %v1822 = vlaneseq
      %v1823 = vshrl.u32 %v1822, 7
      %v1824 = vsub.s32 0, %v1823
      %v1825 = vrot.slane %v1820, %v1824
      %v1899 = vunpack.c.l.b16 %v1748
      %v1900 = vunpack.c.l.b16 %v1749
      %v1901 = vunpack.c.l.b16 %v1750
      %v1902 = vunpack.c.l.b16 %v1751
      %v1903 = vunpack.c.l.b16 %v1752
      %v1904 = vunpack.c.l.b16 %v1753
      %v1905 = vunpack.c.l.b16 %v1754
      %v1906 = vunpack.c.l.b16 %v1755
      %v1907 = vunpack.c.l.b16 %v1756
      %v1908 = vunpack.c.l.b16 %v1757
      %v1909 = vunpack.c.l.b16 %v1758
      %v1910 = vunpack.c.l.b16 %v1759
      %v1911 = vunpack.c.l.b16 %v1760
      %v1912 = vunpack.c.l.b16 %v1761
      %v1913 = vunpack.c.l.b16 %v1762
      %v1914 = vunpack.c.l.b16 %v1763
      %v1915 = vunpack.c.l.b16 %v1764
      %v1916 = vunpack.c.l.b16 %v1765
      %v1917 = vunpack.c.l.b16 %v1766
      %v1918 = vunpack.c.l.b16 %v1767
      %v1919 = vunpack.c.l.b16 %v1768
      %v1920 = vunpack.c.l.b16 %v1769
      %v1921 = vunpack.c.l.b16 %v1770
      %v1922 = vunpack.c.l.b16 %v1771
      %v1923 = vunpack.c.l.b16 %v1772
      %v1924 = vunpack.c.l.b16 %v1773
      %v1925 = vunpack.c.l.b16 %v1774
      %v1926 = vunpack.c.l.b16 %v1775
      %v1927 = vunpack.c.l.b16 %v1776
      %v1928 = vunpack.c.l.b16 %v1777
      %v1929 = vunpack.c.l.b16 %v1778
      %v1930 = vunpack.c.l.b16 %v1779
      %v1931 = vunpack.c.l.b16 %v1780
      %v1932 = vunpack.c.l.b16 %v1781
      %v1933 = vunpack.c.l.b16 %v1782
      %v1934 = vunpack.c.l.b16 %v1783
      %v1935 = vunpack.c.l.b16 %v1784
      %v1936 = vunpack.c.l.b16 %v1785
      %v1937 = vunpack.c.l.b16 %v1786
      %v1938 = vunpack.c.l.b16 %v1787
      %v1939 = vunpack.c.l.b16 %v1788
      %v1940 = vunpack.c.l.b16 %v1789
      %v1941 = vunpack.c.l.b16 %v1790
      %v1942 = vunpack.c.l.b16 %v1791
      %v1943 = vunpack.c.l.b16 %v1792
      %v1944 = vunpack.c.l.b16 %v1793
      %v1945 = vunpack.c.l.b16 %v1794
      %v1946 = vunpack.c.l.b16 %v1795
      %v1947 = vunpack.c.l.b16 %v1796
      %v1948 = vunpack.c.l.b16 %v1797
      %v1949 = vunpack.c.l.b16 %v1798
      %v1950 = vunpack.c.l.b16 %v1799
      %v1951 = vunpack.c.l.b16 %v1800
      %v1952 = vunpack.c.l.b16 %v1801
      %v1953 = vunpack.c.l.b16 %v1802
      %v1954 = vunpack.c.l.b16 %v1803
      %v1955 = vunpack.c.l.b16 %v1804
      %v1956 = vunpack.c.l.b16 %v1805
      %v1957 = vunpack.c.l.b16 %v1806
      %v1958 = vunpack.c.l.b16 %v1807
      %v1959 = vunpack.c.l.b16 %v1808
      %v1960 = vunpack.c.l.b16 %v1809
      %v1961 = vunpack.c.l.b16 %v1810
      %v1962 = vunpack.c.l.b16 %v1811
      %v1963 = vunpack.c.l.b16 %v1812
      %v1964 = vunpack.c.l.b16 %v1813
      %v1965 = vunpack.c.l.b16 %v1814
      %v1966 = vunpack.c.l.b16 %v1815
      %v1967 = vunpack.c.l.b16 %v1816
      %v1968 = vunpack.c.l.b16 %v1817
      %v1969 = vunpack.c.l.b16 %v1818
      %v1970 = vunpack.c.l.b16 %v1819
      %v1971 = vpack.c.b16 %v1900, %v1899
      %v1972 = vpack.c.b16 %v1902, %v1901
      %v1973 = vpack.c.b16 %v1904, %v1903
      %v1974 = vpack.c.b16 %v1906, %v1905
      %v1975 = vpack.c.b16 %v1908, %v1907
      %v1976 = vpack.c.b16 %v1910, %v1909
      %v1977 = vpack.c.b16 %v1912, %v1911
      %v1978 = vpack.c.b16 %v1914, %v1913
      %v1979 = vpack.c.b16 %v1916, %v1915
      %v1980 = vpack.c.b16 %v1918, %v1917
      %v1981 = vpack.c.b16 %v1920, %v1919
      %v1982 = vpack.c.b16 %v1922, %v1921
      %v1983 = vpack.c.b16 %v1924, %v1923
      %v1984 = vpack.c.b16 %v1926, %v1925
      %v1985 = vpack.c.b16 %v1928, %v1927
      %v1986 = vpack.c.b16 %v1930, %v1929
      %v1987 = vpack.c.b16 %v1932, %v1931
      %v1988 = vpack.c.b16 %v1934, %v1933
      %v1989 = vpack.c.b16 %v1936, %v1935
      %v1990 = vpack.c.b16 %v1938, %v1937
      %v1991 = vpack.c.b16 %v1940, %v1939
      %v1992 = vpack.c.b16 %v1942, %v1941
      %v1993 = vpack.c.b16 %v1944, %v1943
      %v1994 = vpack.c.b16 %v1946, %v1945
      %v1995 = vpack.c.b16 %v1948, %v1947
      %v1996 = vpack.c.b16 %v1950, %v1949
      %v1997 = vpack.c.b16 %v1952, %v1951
      %v1998 = vpack.c.b16 %v1954, %v1953
      %v1999 = vpack.c.b16 %v1956, %v1955
      %v2000 = vpack.c.b16 %v1958, %v1957
      %v2001 = vpack.c.b16 %v1960, %v1959
      %v2002 = vpack.c.b16 %v1962, %v1961
      %v2003 = vpack.c.b16 %v1964, %v1963
      %v2004 = vpack.c.b16 %v1966, %v1965
      %v2005 = vpack.c.b16 %v1968, %v1967
      %v2006 = vpack.c.b16 %v1970, %v1969
      %vm2043 = vcmask 523264
      %v2045 = vsel %vm2043, %v1632, 0
      %v2048 = vsel %vm2043, %v1637, 0
      %v2051 = vsel %vm2043, %v1642, 0
      %v2054 = vsel %vm2043, %v1647, 0
      %v2057 = vsel %vm2043, %v1652, 0
      %v2060 = vsel %vm2043, %v1657, 0
      %v2063 = vsel %vm2043, %v1662, 0
      %v2066 = vsel %vm2043, %v1667, 0
      %v2069 = vsel %vm2043, %v1672, 0
      %v2072 = vsel %vm2043, %v1677, 0
      %v2075 = vsel %vm2043, %v1682, 0
      %v2078 = vsel %vm2043, %v1687, 0
      %v2081 = vsel %vm2043, %v1692, 0
      %v2084 = vsel %vm2043, %v1697, 0
      %v2087 = vsel %vm2043, %v1702, 0
      %v2090 = vsel %vm2043, %v1707, 0
      %v2093 = vsel %vm2043, %v1712, 0
      %v2096 = vsel %vm2043, %v1717, 0
      %v2099 = vsel %vm2043, %v1722, 0
      %v2102 = vsel %vm2043, %v1727, 0
      %v2105 = vsel %vm2043, %v1732, 0
      %v2108 = vsel %vm2043, %v1737, 0
      %v2111 = vsel %vm2043, %v1742, 0
      %v2114 = vsel %vm2043, %v1747, 0
      %2116 = vmatprep.subr.bf16.mxu0 0
      %2117 = vmatpush1.bf16.msra.mxu0 %v1971
      %2118 = vmatprep.subr.bf16.mxu0 0
      %2119 = vmatpush1.bf16.msra.mxu0 %v1972
      %2120 = vmatprep.subr.bf16.mxu0 0
      %2121 = vmatpush1.bf16.msra.mxu0 %v1973
      %2122 = vmatprep.subr.bf16.mxu0 0
      %2123 = vmatpush1.bf16.msra.mxu0 %v1974
      %2124 = vmatprep.subr.bf16.mxu0 0
      %2125 = vmatpush1.bf16.msra.mxu0 %v1975
      %2126 = vmatprep.subr.bf16.mxu0 0
      %2127 = vmatpush1.bf16.msra.mxu0 %v1976
      %2128 = vmatprep.subr.bf16.mxu0 0
      %2129 = vmatpush1.bf16.msra.mxu0 %v1977
      %2130 = vmatprep.subr.bf16.mxu0 0
      %2131 = vmatpush1.bf16.msra.mxu0 %v1978
      %2132 = vmatprep.subr.bf16.mxu0 0
      %2133 = vmatpush1.bf16.msra.mxu0 %v1979
      %2134 = vmatprep.subr.bf16.mxu0 0
      %2135 = vmatpush1.bf16.msra.mxu0 %v1980
      %2136 = vmatprep.subr.bf16.mxu0 0
      %2137 = vmatpush1.bf16.msra.mxu0 %v1981
      %2138 = vmatprep.subr.bf16.mxu0 0
      %2139 = vmatpush1.bf16.msra.mxu0 %v1982
      %2140 = vmatprep.subr.bf16.mxu0 0
      %2141 = vmatpush1.bf16.msra.mxu0 %v1983
      %2142 = vmatprep.subr.bf16.mxu0 0
      %2143 = vmatpush1.bf16.msra.mxu0 %v1984
      %2144 = vmatprep.subr.bf16.mxu0 0
      %2145 = vmatpush1.bf16.msra.mxu0 %v1985
      %2146 = vmatprep.subr.bf16.mxu0 0
      %2147 = vmatpush1.bf16.msra.mxu0 %v1986
      %2148 = vmatprep.mubr.bf16.mxu0 %v1629
      %2149 = vmatmul.mubr.bf16.gmra.mrb[0].mxu0 %v1628
      %v2150 = vpop.f32.mrb[0].mxu0
      %v2151 = vadd.f32 %v1825, %v2150
      %v2152 = vpop.f32.mrb[0].mxu0
      %v2153 = vpop.f32.mrb[0].mxu0
      %v2154 = vadd.f32 %v1825, %v2153
      %v2155 = vpop.f32.mrb[0].mxu0
      %2156 = vmatprep.mubr.bf16.mxu0 %v1634
      %2157 = vmatmul.mubr.bf16.gmra.mrb[0].mxu0 %v1633
      %v2158 = vpop.f32.mrb[0].mxu0
      %v2159 = vadd.f32 %v1825, %v2158
      %v2160 = vpop.f32.mrb[0].mxu0
      %v2161 = vpop.f32.mrb[0].mxu0
      %v2162 = vadd.f32 %v1825, %v2161
      %v2163 = vpop.f32.mrb[0].mxu0
      %2164 = vmatprep.mubr.bf16.mxu0 %v1639
      %2165 = vmatmul.mubr.bf16.gmra.mrb[0].mxu0 %v1638
      %v2166 = vpop.f32.mrb[0].mxu0
      %v2167 = vadd.f32 %v1825, %v2166
      %v2168 = vpop.f32.mrb[0].mxu0
      %v2169 = vpop.f32.mrb[0].mxu0
      %v2170 = vadd.f32 %v1825, %v2169
      %v2171 = vpop.f32.mrb[0].mxu0
      %2172 = vmatprep.mubr.bf16.mxu0 %v1644
      %2173 = vmatmul.mubr.bf16.gmra.mrb[0].mxu0 %v1643
      %v2174 = vpop.f32.mrb[0].mxu0
      %v2175 = vadd.f32 %v1825, %v2174
      %v2176 = vpop.f32.mrb[0].mxu0
      %v2177 = vpop.f32.mrb[0].mxu0
      %v2178 = vadd.f32 %v1825, %v2177
      %v2179 = vpop.f32.mrb[0].mxu0
      %2180 = vmatprep.mubr.bf16.mxu0 %v1649
      %2181 = vmatmul.mubr.bf16.gmra.mrb[0].mxu0 %v1648
      %v2182 = vpop.f32.mrb[0].mxu0
      %v2183 = vadd.f32 %v1825, %v2182
      %v2184 = vpop.f32.mrb[0].mxu0
      %v2185 = vpop.f32.mrb[0].mxu0
      %v2186 = vadd.f32 %v1825, %v2185
      %v2187 = vpop.f32.mrb[0].mxu0
      %2188 = vmatprep.mubr.bf16.mxu0 %v1654
      %2189 = vmatmul.mubr.bf16.gmra.mrb[0].mxu0 %v1653
      %v2190 = vpop.f32.mrb[0].mxu0
      %v2191 = vadd.f32 %v1825, %v2190
      %v2192 = vpop.f32.mrb[0].mxu0
      %v2193 = vpop.f32.mrb[0].mxu0
      %v2194 = vadd.f32 %v1825, %v2193
      %v2195 = vpop.f32.mrb[0].mxu0
      %2196 = vmatprep.mubr.bf16.mxu0 %v1659
      %2197 = vmatmul.mubr.bf16.gmra.mrb[0].mxu0 %v1658
      %v2198 = vpop.f32.mrb[0].mxu0
      %v2199 = vadd.f32 %v1825, %v2198
      %v2200 = vpop.f32.mrb[0].mxu0
      %v2201 = vpop.f32.mrb[0].mxu0
      %v2202 = vadd.f32 %v1825, %v2201
      %v2203 = vpop.f32.mrb[0].mxu0
      %2204 = vmatprep.mubr.bf16.mxu0 %v1664
      %2205 = vmatmul.mubr.bf16.gmra.mrb[0].mxu0 %v1663
      %v2206 = vpop.f32.mrb[0].mxu0
      %v2207 = vadd.f32 %v1825, %v2206
      %v2208 = vpop.f32.mrb[0].mxu0
      %v2209 = vpop.f32.mrb[0].mxu0
      %v2210 = vadd.f32 %v1825, %v2209
      %v2211 = vpop.f32.mrb[0].mxu0
      %2212 = vmatprep.mubr.bf16.mxu0 %v1669
      %2213 = vmatmul.mubr.bf16.gmra.mrb[0].mxu0 %v1668
      %v2214 = vpop.f32.mrb[0].mxu0
      %v2215 = vadd.f32 %v1825, %v2214
      %v2216 = vpop.f32.mrb[0].mxu0
      %v2217 = vpop.f32.mrb[0].mxu0
      %v2218 = vadd.f32 %v1825, %v2217
      %v2219 = vpop.f32.mrb[0].mxu0
      %2220 = vmatprep.mubr.bf16.mxu0 %v1674
      %2221 = vmatmul.mubr.bf16.gmra.mrb[0].mxu0 %v1673
      %v2222 = vpop.f32.mrb[0].mxu0
      %v2223 = vadd.f32 %v1825, %v2222
      %v2224 = vpop.f32.mrb[0].mxu0
      %v2225 = vpop.f32.mrb[0].mxu0
      %v2226 = vadd.f32 %v1825, %v2225
      %v2227 = vpop.f32.mrb[0].mxu0
      %2228 = vmatprep.mubr.bf16.mxu0 %v1679
      %2229 = vmatmul.mubr.bf16.gmra.mrb[0].mxu0 %v1678
      %v2230 = vpop.f32.mrb[0].mxu0
      %v2231 = vadd.f32 %v1825, %v2230
      %v2232 = vpop.f32.mrb[0].mxu0
      %v2233 = vpop.f32.mrb[0].mxu0
      %v2234 = vadd.f32 %v1825, %v2233
      %v2235 = vpop.f32.mrb[0].mxu0
      %2236 = vmatprep.mubr.bf16.mxu0 %v1684
      %2237 = vmatmul.mubr.bf16.gmra.mrb[0].mxu0 %v1683
      %v2238 = vpop.f32.mrb[0].mxu0
      %v2239 = vadd.f32 %v1825, %v2238
      %v2240 = vpop.f32.mrb[0].mxu0
      %v2241 = vpop.f32.mrb[0].mxu0
      %v2242 = vadd.f32 %v1825, %v2241
      %v2243 = vpop.f32.mrb[0].mxu0
      %2244 = vmatprep.mubr.bf16.mxu0 %v1689
      %2245 = vmatmul.mubr.bf16.gmra.mrb[0].mxu0 %v1688
      %v2246 = vpop.f32.mrb[0].mxu0
      %v2247 = vadd.f32 %v1825, %v2246
      %v2248 = vpop.f32.mrb[0].mxu0
      %v2249 = vpop.f32.mrb[0].mxu0
      %v2250 = vadd.f32 %v1825, %v2249
      %v2251 = vpop.f32.mrb[0].mxu0
      %2252 = vmatprep.mubr.bf16.mxu0 %v1694
      %2253 = vmatmul.mubr.bf16.gmra.mrb[0].mxu0 %v1693
      %v2254 = vpop.f32.mrb[0].mxu0
      %v2255 = vadd.f32 %v1825, %v2254
      %v2256 = vpop.f32.mrb[0].mxu0
      %v2257 = vpop.f32.mrb[0].mxu0
      %v2258 = vadd.f32 %v1825, %v2257
      %v2259 = vpop.f32.mrb[0].mxu0
      %2260 = vmatprep.mubr.bf16.mxu0 %v1699
      %2261 = vmatmul.mubr.bf16.gmra.mrb[0].mxu0 %v1698
      %v2262 = vpop.f32.mrb[0].mxu0
      %v2263 = vadd.f32 %v1825, %v2262
      %v2264 = vpop.f32.mrb[0].mxu0
      %v2265 = vpop.f32.mrb[0].mxu0
      %v2266 = vadd.f32 %v1825, %v2265
      %v2267 = vpop.f32.mrb[0].mxu0
      %2268 = vmatprep.mubr.bf16.mxu0 %v1704
      %2269 = vmatmul.mubr.bf16.gmra.mrb[0].mxu0 %v1703
      %v2270 = vpop.f32.mrb[0].mxu0
      %v2271 = vadd.f32 %v1825, %v2270
      %v2272 = vpop.f32.mrb[0].mxu0
      %v2273 = vpop.f32.mrb[0].mxu0
      %v2274 = vadd.f32 %v1825, %v2273
      %v2275 = vpop.f32.mrb[0].mxu0
      %2276 = vmatprep.mubr.bf16.mxu0 %v1709
      %2277 = vmatmul.mubr.bf16.gmra.mrb[0].mxu0 %v1708
      %v2278 = vpop.f32.mrb[0].mxu0
      %v2279 = vadd.f32 %v1825, %v2278
      %v2280 = vpop.f32.mrb[0].mxu0
      %v2281 = vpop.f32.mrb[0].mxu0
      %v2282 = vadd.f32 %v1825, %v2281
      %v2283 = vpop.f32.mrb[0].mxu0
      %2284 = vmatprep.mubr.bf16.mxu0 %v1714
      %2285 = vmatmul.mubr.bf16.gmra.mrb[0].mxu0 %v1713
      %v2286 = vpop.f32.mrb[0].mxu0
      %v2287 = vadd.f32 %v1825, %v2286
      %v2288 = vpop.f32.mrb[0].mxu0
      %v2289 = vpop.f32.mrb[0].mxu0
      %v2290 = vadd.f32 %v1825, %v2289
      %v2291 = vpop.f32.mrb[0].mxu0
      %2292 = vmatprep.mubr.bf16.mxu0 %v1719
      %2293 = vmatmul.mubr.bf16.gmra.mrb[0].mxu0 %v1718
      %v2294 = vpop.f32.mrb[0].mxu0
      %v2295 = vadd.f32 %v1825, %v2294
      %v2296 = vpop.f32.mrb[0].mxu0
      %v2297 = vpop.f32.mrb[0].mxu0
      %v2298 = vadd.f32 %v1825, %v2297
      %v2299 = vpop.f32.mrb[0].mxu0
      %2300 = vmatprep.mubr.bf16.mxu0 %v1724
      %2301 = vmatmul.mubr.bf16.gmra.mrb[0].mxu0 %v1723
      %v2302 = vpop.f32.mrb[0].mxu0
      %v2303 = vadd.f32 %v1825, %v2302
      %v2304 = vpop.f32.mrb[0].mxu0
      %v2305 = vpop.f32.mrb[0].mxu0
      %v2306 = vadd.f32 %v1825, %v2305
      %v2307 = vpop.f32.mrb[0].mxu0
      %2308 = vmatprep.mubr.bf16.mxu0 %v1729
      %2309 = vmatmul.mubr.bf16.gmra.mrb[0].mxu0 %v1728
      %v2310 = vpop.f32.mrb[0].mxu0
      %v2311 = vadd.f32 %v1825, %v2310
      %v2312 = vpop.f32.mrb[0].mxu0
      %v2313 = vpop.f32.mrb[0].mxu0
      %v2314 = vadd.f32 %v1825, %v2313
      %v2315 = vpop.f32.mrb[0].mxu0
      %2316 = vmatprep.mubr.bf16.mxu0 %v1734
      %2317 = vmatmul.mubr.bf16.gmra.mrb[0].mxu0 %v1733
      %v2318 = vpop.f32.mrb[0].mxu0
      %v2319 = vadd.f32 %v1825, %v2318
      %v2320 = vpop.f32.mrb[0].mxu0
      %v2321 = vpop.f32.mrb[0].mxu0
      %v2322 = vadd.f32 %v1825, %v2321
      %v2323 = vpop.f32.mrb[0].mxu0
      %2324 = vmatprep.mubr.bf16.mxu0 %v1739
      %2325 = vmatmul.mubr.bf16.gmra.mrb[0].mxu0 %v1738
      %v2326 = vpop.f32.mrb[0].mxu0
      %v2327 = vadd.f32 %v1825, %v2326
      %v2328 = vpop.f32.mrb[0].mxu0
      %v2329 = vpop.f32.mrb[0].mxu0
      %v2330 = vadd.f32 %v1825, %v2329
      %v2331 = vpop.f32.mrb[0].mxu0
      %2332 = vmatprep.mubr.bf16.mxu0 %v1744
      %2333 = vmatmul.mubr.bf16.gmra.mrb[0].mxu0 %v1743
      %v2334 = vpop.f32.mrb[0].mxu0
      %v2335 = vadd.f32 %v1825, %v2334
      %v2336 = vpop.f32.mrb[0].mxu0
      %v2337 = vpop.f32.mrb[0].mxu0
      %v2338 = vadd.f32 %v1825, %v2337
      %v2339 = vpop.f32.mrb[0].mxu0
      %2340 = vdwg.mxu0
      %2341 = vmatprep.subr.bf16.mxu0 0
      %2342 = vmatpush1.bf16.msra.mxu0 %v1987
      %2343 = vmatprep.subr.bf16.mxu0 0
      %2344 = vmatpush1.bf16.msra.mxu0 %v1988
      %2345 = vmatprep.subr.bf16.mxu0 0
      %2346 = vmatpush1.bf16.msra.mxu0 %v1989
      %2347 = vmatprep.subr.bf16.mxu0 0
      %2348 = vmatpush1.bf16.msra.mxu0 %v1990
      %2349 = vmatprep.subr.bf16.mxu0 0
      %2350 = vmatpush1.bf16.msra.mxu0 %v1991
      %2351 = vmatprep.subr.bf16.mxu0 0
      %2352 = vmatpush1.bf16.msra.mxu0 %v1992
      %2353 = vmatprep.subr.bf16.mxu0 0
      %2354 = vmatpush1.bf16.msra.mxu0 %v1993
      %2355 = vmatprep.subr.bf16.mxu0 0
      %2356 = vmatpush1.bf16.msra.mxu0 %v1994
      %2357 = vmatprep.subr.bf16.mxu0 0
      %2358 = vmatpush1.bf16.msra.mxu0 %v1995
      %2359 = vmatprep.subr.bf16.mxu0 0
      %2360 = vmatpush1.bf16.msra.mxu0 %v1996
      %2361 = vmatprep.subr.bf16.mxu0 0
      %2362 = vmatpush1.bf16.msra.mxu0 %v1997
      %2363 = vmatprep.subr.bf16.mxu0 0
      %2364 = vmatpush1.bf16.msra.mxu0 %v1998
      %2365 = vmatprep.subr.bf16.mxu0 0
      %2366 = vmatpush1.bf16.msra.mxu0 %v1999
      %2367 = vmatprep.subr.bf16.mxu0 0
      %2368 = vmatpush1.bf16.msra.mxu0 %v2000
      %2369 = vmatprep.subr.bf16.mxu0 0
      %2370 = vmatpush1.bf16.msra.mxu0 %v2001
      %2371 = vmatprep.subr.bf16.mxu0 0
      %2372 = vmatpush1.bf16.msra.mxu0 %v2002
      %2373 = vmatprep.mubr.bf16.mxu0 %v1631
      %2374 = vmatmul.mubr.bf16.gmra.mrb[0].mxu0 %v1630
      %v2375 = vpop.f32.mrb[0].mxu0
      %v2376 = vadd.f32 %v2151, %v2375
      %v2377 = vpop.f32.mrb[0].mxu0
      %v2378 = vpop.f32.mrb[0].mxu0
      %v2379 = vadd.f32 %v2154, %v2378
      %v2380 = vpop.f32.mrb[0].mxu0
      %2381 = vmatprep.mubr.bf16.mxu0 %v1636
      %2382 = vmatmul.mubr.bf16.gmra.mrb[0].mxu0 %v1635
      %v2383 = vpop.f32.mrb[0].mxu0
      %v2384 = vadd.f32 %v2159, %v2383
      %v2385 = vpop.f32.mrb[0].mxu0
      %v2386 = vpop.f32.mrb[0].mxu0
      %v2387 = vadd.f32 %v2162, %v2386
      %v2388 = vpop.f32.mrb[0].mxu0
      %2389 = vmatprep.mubr.bf16.mxu0 %v1641
      %2390 = vmatmul.mubr.bf16.gmra.mrb[0].mxu0 %v1640
      %v2391 = vpop.f32.mrb[0].mxu0
      %v2392 = vadd.f32 %v2167, %v2391
      %v2393 = vpop.f32.mrb[0].mxu0
      %v2394 = vpop.f32.mrb[0].mxu0
      %v2395 = vadd.f32 %v2170, %v2394
      %v2396 = vpop.f32.mrb[0].mxu0
      %2397 = vmatprep.mubr.bf16.mxu0 %v1646
      %2398 = vmatmul.mubr.bf16.gmra.mrb[0].mxu0 %v1645
      %v2399 = vpop.f32.mrb[0].mxu0
      %v2400 = vadd.f32 %v2175, %v2399
      %v2401 = vpop.f32.mrb[0].mxu0
      %v2402 = vpop.f32.mrb[0].mxu0
      %v2403 = vadd.f32 %v2178, %v2402
      %v2404 = vpop.f32.mrb[0].mxu0
      %2405 = vmatprep.mubr.bf16.mxu0 %v1651
      %2406 = vmatmul.mubr.bf16.gmra.mrb[0].mxu0 %v1650
      %v2407 = vpop.f32.mrb[0].mxu0
      %v2408 = vadd.f32 %v2183, %v2407
      %v2409 = vpop.f32.mrb[0].mxu0
      %v2410 = vpop.f32.mrb[0].mxu0
      %v2411 = vadd.f32 %v2186, %v2410
      %v2412 = vpop.f32.mrb[0].mxu0
      %2413 = vmatprep.mubr.bf16.mxu0 %v1656
      %2414 = vmatmul.mubr.bf16.gmra.mrb[0].mxu0 %v1655
      %v2415 = vpop.f32.mrb[0].mxu0
      %v2416 = vadd.f32 %v2191, %v2415
      %v2417 = vpop.f32.mrb[0].mxu0
      %v2418 = vpop.f32.mrb[0].mxu0
      %v2419 = vadd.f32 %v2194, %v2418
      %v2420 = vpop.f32.mrb[0].mxu0
      %2421 = vmatprep.mubr.bf16.mxu0 %v1661
      %2422 = vmatmul.mubr.bf16.gmra.mrb[0].mxu0 %v1660
      %v2423 = vpop.f32.mrb[0].mxu0
      %v2424 = vadd.f32 %v2199, %v2423
      %v2425 = vpop.f32.mrb[0].mxu0
      %v2426 = vpop.f32.mrb[0].mxu0
      %v2427 = vadd.f32 %v2202, %v2426
      %v2428 = vpop.f32.mrb[0].mxu0
      %2429 = vmatprep.mubr.bf16.mxu0 %v1666
      %2430 = vmatmul.mubr.bf16.gmra.mrb[0].mxu0 %v1665
      %v2431 = vpop.f32.mrb[0].mxu0
      %v2432 = vadd.f32 %v2207, %v2431
      %v2433 = vpop.f32.mrb[0].mxu0
      %v2434 = vpop.f32.mrb[0].mxu0
      %v2435 = vadd.f32 %v2210, %v2434
      %v2436 = vpop.f32.mrb[0].mxu0
      %2437 = vmatprep.mubr.bf16.mxu0 %v1671
      %2438 = vmatmul.mubr.bf16.gmra.mrb[0].mxu0 %v1670
      %v2439 = vpop.f32.mrb[0].mxu0
      %v2440 = vadd.f32 %v2215, %v2439
      %v2441 = vpop.f32.mrb[0].mxu0
      %v2442 = vpop.f32.mrb[0].mxu0
      %v2443 = vadd.f32 %v2218, %v2442
      %v2444 = vpop.f32.mrb[0].mxu0
      %2445 = vmatprep.mubr.bf16.mxu0 %v1676
      %2446 = vmatmul.mubr.bf16.gmra.mrb[0].mxu0 %v1675
      %v2447 = vpop.f32.mrb[0].mxu0
      %v2448 = vadd.f32 %v2223, %v2447
      %v2449 = vpop.f32.mrb[0].mxu0
      %v2450 = vpop.f32.mrb[0].mxu0
      %v2451 = vadd.f32 %v2226, %v2450
      %v2452 = vpop.f32.mrb[0].mxu0
      %2453 = vmatprep.mubr.bf16.mxu0 %v1681
      %2454 = vmatmul.mubr.bf16.gmra.mrb[0].mxu0 %v1680
      %v2455 = vpop.f32.mrb[0].mxu0
      %v2456 = vadd.f32 %v2231, %v2455
      %v2457 = vpop.f32.mrb[0].mxu0
      %v2458 = vpop.f32.mrb[0].mxu0
      %v2459 = vadd.f32 %v2234, %v2458
      %v2460 = vpop.f32.mrb[0].mxu0
      %2461 = vmatprep.mubr.bf16.mxu0 %v1686
      %2462 = vmatmul.mubr.bf16.gmra.mrb[0].mxu0 %v1685
      %v2463 = vpop.f32.mrb[0].mxu0
      %v2464 = vadd.f32 %v2239, %v2463
      %v2465 = vpop.f32.mrb[0].mxu0
      %v2466 = vpop.f32.mrb[0].mxu0
      %v2467 = vadd.f32 %v2242, %v2466
      %v2468 = vpop.f32.mrb[0].mxu0
      %2469 = vmatprep.mubr.bf16.mxu0 %v1691
      %2470 = vmatmul.mubr.bf16.gmra.mrb[0].mxu0 %v1690
      %v2471 = vpop.f32.mrb[0].mxu0
      %v2472 = vadd.f32 %v2247, %v2471
      %v2473 = vpop.f32.mrb[0].mxu0
      %v2474 = vpop.f32.mrb[0].mxu0
      %v2475 = vadd.f32 %v2250, %v2474
      %v2476 = vpop.f32.mrb[0].mxu0
      %2477 = vmatprep.mubr.bf16.mxu0 %v1696
      %2478 = vmatmul.mubr.bf16.gmra.mrb[0].mxu0 %v1695
      %v2479 = vpop.f32.mrb[0].mxu0
      %v2480 = vadd.f32 %v2255, %v2479
      %v2481 = vpop.f32.mrb[0].mxu0
      %v2482 = vpop.f32.mrb[0].mxu0
      %v2483 = vadd.f32 %v2258, %v2482
      %v2484 = vpop.f32.mrb[0].mxu0
      %2485 = vmatprep.mubr.bf16.mxu0 %v1701
      %2486 = vmatmul.mubr.bf16.gmra.mrb[0].mxu0 %v1700
      %v2487 = vpop.f32.mrb[0].mxu0
      %v2488 = vadd.f32 %v2263, %v2487
      %v2489 = vpop.f32.mrb[0].mxu0
      %v2490 = vpop.f32.mrb[0].mxu0
      %v2491 = vadd.f32 %v2266, %v2490
      %v2492 = vpop.f32.mrb[0].mxu0
      %2493 = vmatprep.mubr.bf16.mxu0 %v1706
      %2494 = vmatmul.mubr.bf16.gmra.mrb[0].mxu0 %v1705
      %v2495 = vpop.f32.mrb[0].mxu0
      %v2496 = vadd.f32 %v2271, %v2495
      %v2497 = vpop.f32.mrb[0].mxu0
      %v2498 = vpop.f32.mrb[0].mxu0
      %v2499 = vadd.f32 %v2274, %v2498
      %v2500 = vpop.f32.mrb[0].mxu0
      %2501 = vmatprep.mubr.bf16.mxu0 %v1711
      %2502 = vmatmul.mubr.bf16.gmra.mrb[0].mxu0 %v1710
      %v2503 = vpop.f32.mrb[0].mxu0
      %v2504 = vadd.f32 %v2279, %v2503
      %v2505 = vpop.f32.mrb[0].mxu0
      %v2506 = vpop.f32.mrb[0].mxu0
      %v2507 = vadd.f32 %v2282, %v2506
      %v2508 = vpop.f32.mrb[0].mxu0
      %2509 = vmatprep.mubr.bf16.mxu0 %v1716
      %2510 = vmatmul.mubr.bf16.gmra.mrb[0].mxu0 %v1715
      %v2511 = vpop.f32.mrb[0].mxu0
      %v2512 = vadd.f32 %v2287, %v2511
      %v2513 = vpop.f32.mrb[0].mxu0
      %v2514 = vpop.f32.mrb[0].mxu0
      %v2515 = vadd.f32 %v2290, %v2514
      %v2516 = vpop.f32.mrb[0].mxu0
      %2517 = vmatprep.mubr.bf16.mxu0 %v1721
      %2518 = vmatmul.mubr.bf16.gmra.mrb[0].mxu0 %v1720
      %v2519 = vpop.f32.mrb[0].mxu0
      %v2520 = vadd.f32 %v2295, %v2519
      %v2521 = vpop.f32.mrb[0].mxu0
      %v2522 = vpop.f32.mrb[0].mxu0
      %v2523 = vadd.f32 %v2298, %v2522
      %v2524 = vpop.f32.mrb[0].mxu0
      %2525 = vmatprep.mubr.bf16.mxu0 %v1726
      %2526 = vmatmul.mubr.bf16.gmra.mrb[0].mxu0 %v1725
      %v2527 = vpop.f32.mrb[0].mxu0
      %v2528 = vadd.f32 %v2303, %v2527
      %v2529 = vpop.f32.mrb[0].mxu0
      %v2530 = vpop.f32.mrb[0].mxu0
      %v2531 = vadd.f32 %v2306, %v2530
      %v2532 = vpop.f32.mrb[0].mxu0
      %2533 = vmatprep.mubr.bf16.mxu0 %v1731
      %2534 = vmatmul.mubr.bf16.gmra.mrb[0].mxu0 %v1730
      %v2535 = vpop.f32.mrb[0].mxu0
      %v2536 = vadd.f32 %v2311, %v2535
      %v2537 = vpop.f32.mrb[0].mxu0
      %v2538 = vpop.f32.mrb[0].mxu0
      %v2539 = vadd.f32 %v2314, %v2538
      %v2540 = vpop.f32.mrb[0].mxu0
      %2541 = vmatprep.mubr.bf16.mxu0 %v1736
      %2542 = vmatmul.mubr.bf16.gmra.mrb[0].mxu0 %v1735
      %v2543 = vpop.f32.mrb[0].mxu0
      %v2544 = vadd.f32 %v2319, %v2543
      %v2545 = vpop.f32.mrb[0].mxu0
      %v2546 = vpop.f32.mrb[0].mxu0
      %v2547 = vadd.f32 %v2322, %v2546
      %v2548 = vpop.f32.mrb[0].mxu0
      %2549 = vmatprep.mubr.bf16.mxu0 %v1741
      %2550 = vmatmul.mubr.bf16.gmra.mrb[0].mxu0 %v1740
      %v2551 = vpop.f32.mrb[0].mxu0
      %v2552 = vadd.f32 %v2327, %v2551
      %v2553 = vpop.f32.mrb[0].mxu0
      %v2554 = vpop.f32.mrb[0].mxu0
      %v2555 = vadd.f32 %v2330, %v2554
      %v2556 = vpop.f32.mrb[0].mxu0
      %2557 = vmatprep.mubr.bf16.mxu0 %v1746
      %2558 = vmatmul.mubr.bf16.gmra.mrb[0].mxu0 %v1745
      %v2559 = vpop.f32.mrb[0].mxu0
      %v2560 = vadd.f32 %v2335, %v2559
      %v2561 = vpop.f32.mrb[0].mxu0
      %v2562 = vpop.f32.mrb[0].mxu0
      %v2563 = vadd.f32 %v2338, %v2562
      %v2564 = vpop.f32.mrb[0].mxu0
      %2565 = vdwg.mxu0
      %2566 = vmatprep.subr.bf16.mxu0 0
      %2567 = vmatpush1.bf16.msra.mxu0 %v2003
      %2568 = vmatprep.subr.bf16.mxu0 0
      %2569 = vmatpush1.bf16.msra.mxu0 %v2004
      %2570 = vmatprep.subr.bf16.mxu0 0
      %2571 = vmatpush1.bf16.msra.mxu0 %v2005
      %2572 = vmatprep.subr.bf16.mxu0 0
      %2573 = vmatpush1.bf16.msra.mxu0 %v2006
      %2574 = vmatprep.subr.bf16.mxu0 0
      %2575 = vmatpush1.bf16.msra.mxu0 0
      %2576 = vmatprep.subr.bf16.mxu0 0
      %2577 = vmatpush1.bf16.msra.mxu0 0
      %2578 = vmatprep.subr.bf16.mxu0 0
      %2579 = vmatpush1.bf16.msra.mxu0 0
      %2580 = vmatprep.subr.bf16.mxu0 0
      %2581 = vmatpush1.bf16.msra.mxu0 0
      %2582 = vmatprep.subr.bf16.mxu0 0
      %2583 = vmatpush1.bf16.msra.mxu0 0
      %2584 = vmatprep.subr.bf16.mxu0 0
      %2585 = vmatpush1.bf16.msra.mxu0 0
      %2586 = vmatprep.subr.bf16.mxu0 0
      %2587 = vmatpush1.bf16.msra.mxu0 0
      %2588 = vmatprep.subr.bf16.mxu0 0
      %2589 = vmatpush1.bf16.msra.mxu0 0
      %2590 = vmatprep.subr.bf16.mxu0 0
      %2591 = vmatpush1.bf16.msra.mxu0 0
      %2592 = vmatprep.subr.bf16.mxu0 0
      %2593 = vmatpush1.bf16.msra.mxu0 0
      %2594 = vmatprep.subr.bf16.mxu0 0
      %2595 = vmatpush1.bf16.msra.mxu0 0
      %2596 = vmatprep.subr.bf16.mxu0 0
      %2597 = vmatpush1.bf16.msra.mxu0 0
      %2598 = vmatprep.mubr.bf16.mxu0 0
      %2599 = vmatmul.mubr.bf16.gmra.mrb[0].mxu0 %v2045
      %v2600 = vpop.f32.mrb[0].mxu0
      %v2601 = vadd.f32 %v2376, %v2600
      %v2602 = vpop.f32.mrb[0].mxu0
      %v2603 = vpop.f32.mrb[0].mxu0
      %v2604 = vadd.f32 %v2379, %v2603
      %v2605 = vpop.f32.mrb[0].mxu0
      %2606 = vmatprep.mubr.bf16.mxu0 0
      %2607 = vmatmul.mubr.bf16.gmra.mrb[0].mxu0 %v2048
      %v2608 = vpop.f32.mrb[0].mxu0
      %v2609 = vadd.f32 %v2384, %v2608
      %v2610 = vpop.f32.mrb[0].mxu0
      %v2611 = vpop.f32.mrb[0].mxu0
      %v2612 = vadd.f32 %v2387, %v2611
      %v2613 = vpop.f32.mrb[0].mxu0
      %2614 = vmatprep.mubr.bf16.mxu0 0
      %2615 = vmatmul.mubr.bf16.gmra.mrb[0].mxu0 %v2051
      %v2616 = vpop.f32.mrb[0].mxu0
      %v2617 = vadd.f32 %v2392, %v2616
      %v2618 = vpop.f32.mrb[0].mxu0
      %v2619 = vpop.f32.mrb[0].mxu0
      %v2620 = vadd.f32 %v2395, %v2619
      %v2621 = vpop.f32.mrb[0].mxu0
      %2622 = vmatprep.mubr.bf16.mxu0 0
      %2623 = vmatmul.mubr.bf16.gmra.mrb[0].mxu0 %v2054
      %v2624 = vpop.f32.mrb[0].mxu0
      %v2625 = vadd.f32 %v2400, %v2624
      %v2626 = vpop.f32.mrb[0].mxu0
      %v2627 = vpop.f32.mrb[0].mxu0
      %v2628 = vadd.f32 %v2403, %v2627
      %v2629 = vpop.f32.mrb[0].mxu0
      %2630 = vmatprep.mubr.bf16.mxu0 0
      %2631 = vmatmul.mubr.bf16.gmra.mrb[0].mxu0 %v2057
      %v2632 = vpop.f32.mrb[0].mxu0
      %v2633 = vadd.f32 %v2408, %v2632
      %v2634 = vpop.f32.mrb[0].mxu0
      %v2635 = vpop.f32.mrb[0].mxu0
      %v2636 = vadd.f32 %v2411, %v2635
      %v2637 = vpop.f32.mrb[0].mxu0
      %2638 = vmatprep.mubr.bf16.mxu0 0
      %2639 = vmatmul.mubr.bf16.gmra.mrb[0].mxu0 %v2060
      %v2640 = vpop.f32.mrb[0].mxu0
      %v2641 = vadd.f32 %v2416, %v2640
      %v2642 = vpop.f32.mrb[0].mxu0
      %v2643 = vpop.f32.mrb[0].mxu0
      %v2644 = vadd.f32 %v2419, %v2643
      %v2645 = vpop.f32.mrb[0].mxu0
      %2646 = vmatprep.mubr.bf16.mxu0 0
      %2647 = vmatmul.mubr.bf16.gmra.mrb[0].mxu0 %v2063
      %v2648 = vpop.f32.mrb[0].mxu0
      %v2649 = vadd.f32 %v2424, %v2648
      %v2650 = vpop.f32.mrb[0].mxu0
      %v2651 = vpop.f32.mrb[0].mxu0
      %v2652 = vadd.f32 %v2427, %v2651
      %v2653 = vpop.f32.mrb[0].mxu0
      %2654 = vmatprep.mubr.bf16.mxu0 0
      %2655 = vmatmul.mubr.bf16.gmra.mrb[0].mxu0 %v2066
      %v2656 = vpop.f32.mrb[0].mxu0
      %v2657 = vadd.f32 %v2432, %v2656
      %v2658 = vpop.f32.mrb[0].mxu0
      %v2659 = vpop.f32.mrb[0].mxu0
      %v2660 = vadd.f32 %v2435, %v2659
      %v2661 = vpop.f32.mrb[0].mxu0
      %2662 = vmatprep.mubr.bf16.mxu0 0
      %2663 = vmatmul.mubr.bf16.gmra.mrb[0].mxu0 %v2069
      %v2664 = vpop.f32.mrb[0].mxu0
      %v2665 = vadd.f32 %v2440, %v2664
      %v2666 = vpop.f32.mrb[0].mxu0
      %v2667 = vpop.f32.mrb[0].mxu0
      %v2668 = vadd.f32 %v2443, %v2667
      %v2669 = vpop.f32.mrb[0].mxu0
      %2670 = vmatprep.mubr.bf16.mxu0 0
      %2671 = vmatmul.mubr.bf16.gmra.mrb[0].mxu0 %v2072
      %v2672 = vpop.f32.mrb[0].mxu0
      %v2673 = vadd.f32 %v2448, %v2672
      %v2674 = vpop.f32.mrb[0].mxu0
      %v2675 = vpop.f32.mrb[0].mxu0
      %v2676 = vadd.f32 %v2451, %v2675
      %v2677 = vpop.f32.mrb[0].mxu0
      %2678 = vmatprep.mubr.bf16.mxu0 0
      %2679 = vmatmul.mubr.bf16.gmra.mrb[0].mxu0 %v2075
      %v2680 = vpop.f32.mrb[0].mxu0
      %v2681 = vadd.f32 %v2456, %v2680
      %v2682 = vpop.f32.mrb[0].mxu0
      %v2683 = vpop.f32.mrb[0].mxu0
      %v2684 = vadd.f32 %v2459, %v2683
      %v2685 = vpop.f32.mrb[0].mxu0
      %2686 = vmatprep.mubr.bf16.mxu0 0
      %2687 = vmatmul.mubr.bf16.gmra.mrb[0].mxu0 %v2078
      %v2688 = vpop.f32.mrb[0].mxu0
      %v2689 = vadd.f32 %v2464, %v2688
      %v2690 = vpop.f32.mrb[0].mxu0
      %v2691 = vpop.f32.mrb[0].mxu0
      %v2692 = vadd.f32 %v2467, %v2691
      %v2693 = vpop.f32.mrb[0].mxu0
      %2694 = vmatprep.mubr.bf16.mxu0 0
      %2695 = vmatmul.mubr.bf16.gmra.mrb[0].mxu0 %v2081
      %v2696 = vpop.f32.mrb[0].mxu0
      %v2697 = vadd.f32 %v2472, %v2696
      %v2698 = vpop.f32.mrb[0].mxu0
      %v2699 = vpop.f32.mrb[0].mxu0
      %v2700 = vadd.f32 %v2475, %v2699
      %v2701 = vpop.f32.mrb[0].mxu0
      %2702 = vmatprep.mubr.bf16.mxu0 0
      %2703 = vmatmul.mubr.bf16.gmra.mrb[0].mxu0 %v2084
      %v2704 = vpop.f32.mrb[0].mxu0
      %v2705 = vadd.f32 %v2480, %v2704
      %v2706 = vpop.f32.mrb[0].mxu0
      %v2707 = vpop.f32.mrb[0].mxu0
      %v2708 = vadd.f32 %v2483, %v2707
      %v2709 = vpop.f32.mrb[0].mxu0
      %2710 = vmatprep.mubr.bf16.mxu0 0
      %2711 = vmatmul.mubr.bf16.gmra.mrb[0].mxu0 %v2087
      %v2712 = vpop.f32.mrb[0].mxu0
      %v2713 = vadd.f32 %v2488, %v2712
      %v2714 = vpop.f32.mrb[0].mxu0
      %v2715 = vpop.f32.mrb[0].mxu0
      %v2716 = vadd.f32 %v2491, %v2715
      %v2717 = vpop.f32.mrb[0].mxu0
      %2718 = vmatprep.mubr.bf16.mxu0 0
      %2719 = vmatmul.mubr.bf16.gmra.mrb[0].mxu0 %v2090
      %v2720 = vpop.f32.mrb[0].mxu0
      %v2721 = vadd.f32 %v2496, %v2720
      %v2722 = vpop.f32.mrb[0].mxu0
      %v2723 = vpop.f32.mrb[0].mxu0
      %v2724 = vadd.f32 %v2499, %v2723
      %v2725 = vpop.f32.mrb[0].mxu0
      %2726 = vmatprep.mubr.bf16.mxu0 0
      %2727 = vmatmul.mubr.bf16.gmra.mrb[0].mxu0 %v2093
      %v2728 = vpop.f32.mrb[0].mxu0
      %v2729 = vadd.f32 %v2504, %v2728
      %v2730 = vpop.f32.mrb[0].mxu0
      %v2731 = vpop.f32.mrb[0].mxu0
      %v2732 = vadd.f32 %v2507, %v2731
      %v2733 = vpop.f32.mrb[0].mxu0
      %2734 = vmatprep.mubr.bf16.mxu0 0
      %2735 = vmatmul.mubr.bf16.gmra.mrb[0].mxu0 %v2096
      %v2736 = vpop.f32.mrb[0].mxu0
      %v2737 = vadd.f32 %v2512, %v2736
      %v2738 = vpop.f32.mrb[0].mxu0
      %v2739 = vpop.f32.mrb[0].mxu0
      %v2740 = vadd.f32 %v2515, %v2739
      %v2741 = vpop.f32.mrb[0].mxu0
      %2742 = vmatprep.mubr.bf16.mxu0 0
      %2743 = vmatmul.mubr.bf16.gmra.mrb[0].mxu0 %v2099
      %v2744 = vpop.f32.mrb[0].mxu0
      %v2745 = vadd.f32 %v2520, %v2744
      %v2746 = vpop.f32.mrb[0].mxu0
      %v2747 = vpop.f32.mrb[0].mxu0
      %v2748 = vadd.f32 %v2523, %v2747
      %v2749 = vpop.f32.mrb[0].mxu0
      %2750 = vmatprep.mubr.bf16.mxu0 0
      %2751 = vmatmul.mubr.bf16.gmra.mrb[0].mxu0 %v2102
      %v2752 = vpop.f32.mrb[0].mxu0
      %v2753 = vadd.f32 %v2528, %v2752
      %v2754 = vpop.f32.mrb[0].mxu0
      %v2755 = vpop.f32.mrb[0].mxu0
      %v2756 = vadd.f32 %v2531, %v2755
      %v2757 = vpop.f32.mrb[0].mxu0
      %2758 = vmatprep.mubr.bf16.mxu0 0
      %2759 = vmatmul.mubr.bf16.gmra.mrb[0].mxu0 %v2105
      %v2760 = vpop.f32.mrb[0].mxu0
      %v2761 = vadd.f32 %v2536, %v2760
      %v2762 = vpop.f32.mrb[0].mxu0
      %v2763 = vpop.f32.mrb[0].mxu0
      %v2764 = vadd.f32 %v2539, %v2763
      %v2765 = vpop.f32.mrb[0].mxu0
      %2766 = vmatprep.mubr.bf16.mxu0 0
      %2767 = vmatmul.mubr.bf16.gmra.mrb[0].mxu0 %v2108
      %v2768 = vpop.f32.mrb[0].mxu0
      %v2769 = vadd.f32 %v2544, %v2768
      %v2770 = vpop.f32.mrb[0].mxu0
      %v2771 = vpop.f32.mrb[0].mxu0
      %v2772 = vadd.f32 %v2547, %v2771
      %v2773 = vpop.f32.mrb[0].mxu0
      %2774 = vmatprep.mubr.bf16.mxu0 0
      %2775 = vmatmul.mubr.bf16.gmra.mrb[0].mxu0 %v2111
      %v2776 = vpop.f32.mrb[0].mxu0
      %v2777 = vadd.f32 %v2552, %v2776
      %v2778 = vpop.f32.mrb[0].mxu0
      %v2779 = vpop.f32.mrb[0].mxu0
      %v2780 = vadd.f32 %v2555, %v2779
      %v2781 = vpop.f32.mrb[0].mxu0
      %2782 = vmatprep.mubr.bf16.mxu0 0
      %2783 = vmatmul.mubr.bf16.gmra.mrb[0].mxu0 %v2114
      %v2784 = vpop.f32.mrb[0].mxu0
      %v2785 = vadd.f32 %v2560, %v2784
      %v2786 = vpop.f32.mrb[0].mxu0
      %v2787 = vpop.f32.mrb[0].mxu0
      %v2788 = vadd.f32 %v2563, %v2787
      %v2789 = vpop.f32.mrb[0].mxu0
      %2790 = vdwg.mxu0
      %v2791 = vmax.f32 %v2601, 0.0
      %v2792 = vmax.f32 %v2604, 0.0
      %v2793 = vmax.f32 %v2609, 0.0
      %v2794 = vmax.f32 %v2612, 0.0
      %v2795 = vmax.f32 %v2617, 0.0
      %v2796 = vmax.f32 %v2620, 0.0
      %v2797 = vmax.f32 %v2625, 0.0
      %v2798 = vmax.f32 %v2628, 0.0
      %v2799 = vmax.f32 %v2633, 0.0
      %v2800 = vmax.f32 %v2636, 0.0
      %v2801 = vmax.f32 %v2641, 0.0
      %v2802 = vmax.f32 %v2644, 0.0
      %v2803 = vmax.f32 %v2649, 0.0
      %v2804 = vmax.f32 %v2652, 0.0
      %v2805 = vmax.f32 %v2657, 0.0
      %v2806 = vmax.f32 %v2660, 0.0
      %v2807 = vmax.f32 %v2665, 0.0
      %v2808 = vmax.f32 %v2668, 0.0
      %v2809 = vmax.f32 %v2673, 0.0
      %v2810 = vmax.f32 %v2676, 0.0
      %v2811 = vmax.f32 %v2681, 0.0
      %v2812 = vmax.f32 %v2684, 0.0
      %v2813 = vmax.f32 %v2689, 0.0
      %v2814 = vmax.f32 %v2692, 0.0
      %v2815 = vmax.f32 %v2697, 0.0
      %v2816 = vmax.f32 %v2700, 0.0
      %v2817 = vmax.f32 %v2705, 0.0
      %v2818 = vmax.f32 %v2708, 0.0
      %v2819 = vmax.f32 %v2713, 0.0
      %v2820 = vmax.f32 %v2716, 0.0
      %v2821 = vmax.f32 %v2721, 0.0
      %v2822 = vmax.f32 %v2724, 0.0
      %v2823 = vmax.f32 %v2729, 0.0
      %v2824 = vmax.f32 %v2732, 0.0
      %v2825 = vmax.f32 %v2737, 0.0
      %v2826 = vmax.f32 %v2740, 0.0
      %v2827 = vmax.f32 %v2745, 0.0
      %v2828 = vmax.f32 %v2748, 0.0
      %v2829 = vmax.f32 %v2753, 0.0
      %v2830 = vmax.f32 %v2756, 0.0
      %v2831 = vmax.f32 %v2761, 0.0
      %v2832 = vmax.f32 %v2764, 0.0
      %v2833 = vmax.f32 %v2769, 0.0
      %v2834 = vmax.f32 %v2772, 0.0
      %v2835 = vmax.f32 %v2777, 0.0
      %v2836 = vmax.f32 %v2780, 0.0
      %v2837 = vmax.f32 %v2785, 0.0
      %v2838 = vmax.f32 %v2788, 0.0
      %v2839 = vpack.c.bf16 %v2792, %v2791
      %v2840 = vpack.c.bf16 %v2794, %v2793
      %v2841 = vpack.c.bf16 %v2796, %v2795
      %v2842 = vpack.c.bf16 %v2798, %v2797
      %v2843 = vpack.c.bf16 %v2800, %v2799
      %v2844 = vpack.c.bf16 %v2802, %v2801
      %v2845 = vpack.c.bf16 %v2804, %v2803
      %v2846 = vpack.c.bf16 %v2806, %v2805
      %v2847 = vpack.c.bf16 %v2808, %v2807
      %v2848 = vpack.c.bf16 %v2810, %v2809
      %v2849 = vpack.c.bf16 %v2812, %v2811
      %v2850 = vpack.c.bf16 %v2814, %v2813
      %v2851 = vpack.c.bf16 %v2816, %v2815
      %v2852 = vpack.c.bf16 %v2818, %v2817
      %v2853 = vpack.c.bf16 %v2820, %v2819
      %v2854 = vpack.c.bf16 %v2822, %v2821
      %v2855 = vpack.c.bf16 %v2824, %v2823
      %v2856 = vpack.c.bf16 %v2826, %v2825
      %v2857 = vpack.c.bf16 %v2828, %v2827
      %v2858 = vpack.c.bf16 %v2830, %v2829
      %v2859 = vpack.c.bf16 %v2832, %v2831
      %v2860 = vpack.c.bf16 %v2834, %v2833
      %v2861 = vpack.c.bf16 %v2836, %v2835
      %v2862 = vpack.c.bf16 %v2838, %v2837
      %v2863 = vld [vmem:[%s5] sm:$0xf]
      %v2864 = vld [vmem:[%s5 + $0x4] sm:$0xf]
      %v2865 = vld [vmem:[%s5 + $0x8] sm:$0xf]
      %v2866 = vld [vmem:[%s5 + $0xc] sm:$0xf]
      %v2867 = vld [vmem:[%s5 + $0x10] sm:$0xf]
      %v2868 = vld [vmem:[%s5 + $0x14] sm:$0xf]
      %v2869 = vld [vmem:[%s5 + $0x18] sm:$0xf]
      %v2870 = vld [vmem:[%s5 + $0x1c] sm:$0xf]
      %v2871 = vld [vmem:[%s5 + $0x20] sm:$0xf]
      %v2872 = vld [vmem:[%s5 + $0x24] sm:$0xf]
      %v2873 = vld [vmem:[#allocation2] sm:$0x1]
      %v2875 = vlaneseq
      %v2876 = vshrl.u32 %v2875, 7
      %v2877 = vsub.s32 0, %v2876
      %v2878 = vrot.slane %v2873, %v2877
      %v2890 = vunpack.c.l.b16 %v2863
      %v2891 = vunpack.c.l.b16 %v2864
      %v2892 = vunpack.c.l.b16 %v2865
      %v2893 = vunpack.c.l.b16 %v2866
      %v2894 = vunpack.c.l.b16 %v2867
      %v2895 = vunpack.c.l.b16 %v2868
      %v2896 = vunpack.c.l.b16 %v2869
      %v2897 = vunpack.c.l.b16 %v2870
      %v2898 = vunpack.c.l.b16 %v2871
      %v2899 = vunpack.c.l.b16 %v2872
      %v2900 = vpack.c.b16 %v2891, %v2890
      %v2901 = vpack.c.b16 %v2893, %v2892
      %v2902 = vpack.c.b16 %v2895, %v2894
      %v2903 = vpack.c.b16 %v2897, %v2896
      %v2904 = vpack.c.b16 %v2899, %v2898
      %vm2910 = vcmask 654336
      %v2912 = vsel %vm2910, %v2839, 0
      %v2915 = vsel %vm2910, %v2840, 0
      %v2918 = vsel %vm2910, %v2841, 0
      %v2921 = vsel %vm2910, %v2842, 0
      %v2924 = vsel %vm2910, %v2843, 0
      %v2927 = vsel %vm2910, %v2844, 0
      %v2930 = vsel %vm2910, %v2845, 0
      %v2933 = vsel %vm2910, %v2846, 0
      %v2936 = vsel %vm2910, %v2847, 0
      %v2939 = vsel %vm2910, %v2848, 0
      %v2942 = vsel %vm2910, %v2849, 0
      %v2945 = vsel %vm2910, %v2850, 0
      %v2948 = vsel %vm2910, %v2851, 0
      %v2951 = vsel %vm2910, %v2852, 0
      %v2954 = vsel %vm2910, %v2853, 0
      %v2957 = vsel %vm2910, %v2854, 0
      %v2960 = vsel %vm2910, %v2855, 0
      %v2963 = vsel %vm2910, %v2856, 0
      %v2966 = vsel %vm2910, %v2857, 0
      %v2969 = vsel %vm2910, %v2858, 0
      %v2972 = vsel %vm2910, %v2859, 0
      %v2975 = vsel %vm2910, %v2860, 0
      %v2978 = vsel %vm2910, %v2861, 0
      %v2981 = vsel %vm2910, %v2862, 0
      %2983 = vmatprep.subr.bf16.mxu0 0
      %2984 = vmatpush1.bf16.msra.mxu0 %v2900
      %2985 = vmatprep.subr.bf16.mxu0 0
      %2986 = vmatpush1.bf16.msra.mxu0 %v2901
      %2987 = vmatprep.subr.bf16.mxu0 0
      %2988 = vmatpush1.bf16.msra.mxu0 %v2902
      %2989 = vmatprep.subr.bf16.mxu0 0
      %2990 = vmatpush1.bf16.msra.mxu0 %v2903
      %2991 = vmatprep.subr.bf16.mxu0 0
      %2992 = vmatpush1.bf16.msra.mxu0 %v2904
      %2993 = vmatprep.subr.bf16.mxu0 0
      %2994 = vmatpush1.bf16.msra.mxu0 0
      %2995 = vmatprep.subr.bf16.mxu0 0
      %2996 = vmatpush1.bf16.msra.mxu0 0
      %2997 = vmatprep.subr.bf16.mxu0 0
      %2998 = vmatpush1.bf16.msra.mxu0 0
      %2999 = vmatprep.subr.bf16.mxu0 0
      %3000 = vmatpush1.bf16.msra.mxu0 0
      %3001 = vmatprep.subr.bf16.mxu0 0
      %3002 = vmatpush1.bf16.msra.mxu0 0
      %3003 = vmatprep.subr.bf16.mxu0 0
      %3004 = vmatpush1.bf16.msra.mxu0 0
      %3005 = vmatprep.subr.bf16.mxu0 0
      %3006 = vmatpush1.bf16.msra.mxu0 0
      %3007 = vmatprep.subr.bf16.mxu0 0
      %3008 = vmatpush1.bf16.msra.mxu0 0
      %3009 = vmatprep.subr.bf16.mxu0 0
      %3010 = vmatpush1.bf16.msra.mxu0 0
      %3011 = vmatprep.subr.bf16.mxu0 0
      %3012 = vmatpush1.bf16.msra.mxu0 0
      %3013 = vmatprep.subr.bf16.mxu0 0
      %3014 = vmatpush1.bf16.msra.mxu0 0
      %3015 = vmatprep.mubr.bf16.mxu0 0
      %3016 = vmatmul.mubr.bf16.gmra.mrb[0].mxu0 %v2912
      %v3017 = vpop.f32.mrb[0].mxu0
      %v3018 = vadd.f32 %v2878, %v3017
      %v3019 = vpop.f32.mrb[0].mxu0
      %v3020 = vpop.f32.mrb[0].mxu0
      %v3021 = vadd.f32 %v2878, %v3020
      %v3022 = vpop.f32.mrb[0].mxu0
      %3023 = vmatprep.mubr.bf16.mxu0 0
      %3024 = vmatmul.mubr.bf16.gmra.mrb[0].mxu0 %v2915
      %v3025 = vpop.f32.mrb[0].mxu0
      %v3026 = vadd.f32 %v2878, %v3025
      %v3027 = vpop.f32.mrb[0].mxu0
      %v3028 = vpop.f32.mrb[0].mxu0
      %v3029 = vadd.f32 %v2878, %v3028
      %v3030 = vpop.f32.mrb[0].mxu0
      %3031 = vmatprep.mubr.bf16.mxu0 0
      %3032 = vmatmul.mubr.bf16.gmra.mrb[0].mxu0 %v2918
      %v3033 = vpop.f32.mrb[0].mxu0
      %v3034 = vadd.f32 %v2878, %v3033
      %v3035 = vpop.f32.mrb[0].mxu0
      %v3036 = vpop.f32.mrb[0].mxu0
      %v3037 = vadd.f32 %v2878, %v3036
      %v3038 = vpop.f32.mrb[0].mxu0
      %3039 = vmatprep.mubr.bf16.mxu0 0
      %3040 = vmatmul.mubr.bf16.gmra.mrb[0].mxu0 %v2921
      %v3041 = vpop.f32.mrb[0].mxu0
      %v3042 = vadd.f32 %v2878, %v3041
      %v3043 = vpop.f32.mrb[0].mxu0
      %v3044 = vpop.f32.mrb[0].mxu0
      %v3045 = vadd.f32 %v2878, %v3044
      %v3046 = vpop.f32.mrb[0].mxu0
      %3047 = vmatprep.mubr.bf16.mxu0 0
      %3048 = vmatmul.mubr.bf16.gmra.mrb[0].mxu0 %v2924
      %v3049 = vpop.f32.mrb[0].mxu0
      %v3050 = vadd.f32 %v2878, %v3049
      %v3051 = vpop.f32.mrb[0].mxu0
      %v3052 = vpop.f32.mrb[0].mxu0
      %v3053 = vadd.f32 %v2878, %v3052
      %v3054 = vpop.f32.mrb[0].mxu0
      %3055 = vmatprep.mubr.bf16.mxu0 0
      %3056 = vmatmul.mubr.bf16.gmra.mrb[0].mxu0 %v2927
      %v3057 = vpop.f32.mrb[0].mxu0
      %v3058 = vadd.f32 %v2878, %v3057
      %v3059 = vpop.f32.mrb[0].mxu0
      %v3060 = vpop.f32.mrb[0].mxu0
      %v3061 = vadd.f32 %v2878, %v3060
      %v3062 = vpop.f32.mrb[0].mxu0
      %3063 = vmatprep.mubr.bf16.mxu0 0
      %3064 = vmatmul.mubr.bf16.gmra.mrb[0].mxu0 %v2930
      %v3065 = vpop.f32.mrb[0].mxu0
      %v3066 = vadd.f32 %v2878, %v3065
      %v3067 = vpop.f32.mrb[0].mxu0
      %v3068 = vpop.f32.mrb[0].mxu0
      %v3069 = vadd.f32 %v2878, %v3068
      %v3070 = vpop.f32.mrb[0].mxu0
      %3071 = vmatprep.mubr.bf16.mxu0 0
      %3072 = vmatmul.mubr.bf16.gmra.mrb[0].mxu0 %v2933
      %v3073 = vpop.f32.mrb[0].mxu0
      %v3074 = vadd.f32 %v2878, %v3073
      %v3075 = vpop.f32.mrb[0].mxu0
      %v3076 = vpop.f32.mrb[0].mxu0
      %v3077 = vadd.f32 %v2878, %v3076
      %v3078 = vpop.f32.mrb[0].mxu0
      %3079 = vmatprep.mubr.bf16.mxu0 0
      %3080 = vmatmul.mubr.bf16.gmra.mrb[0].mxu0 %v2936
      %v3081 = vpop.f32.mrb[0].mxu0
      %v3082 = vadd.f32 %v2878, %v3081
      %v3083 = vpop.f32.mrb[0].mxu0
      %v3084 = vpop.f32.mrb[0].mxu0
      %v3085 = vadd.f32 %v2878, %v3084
      %v3086 = vpop.f32.mrb[0].mxu0
      %3087 = vmatprep.mubr.bf16.mxu0 0
      %3088 = vmatmul.mubr.bf16.gmra.mrb[0].mxu0 %v2939
      %v3089 = vpop.f32.mrb[0].mxu0
      %v3090 = vadd.f32 %v2878, %v3089
      %v3091 = vpop.f32.mrb[0].mxu0
      %v3092 = vpop.f32.mrb[0].mxu0
      %v3093 = vadd.f32 %v2878, %v3092
      %v3094 = vpop.f32.mrb[0].mxu0
      %3095 = vmatprep.mubr.bf16.mxu0 0
      %3096 = vmatmul.mubr.bf16.gmra.mrb[0].mxu0 %v2942
      %v3097 = vpop.f32.mrb[0].mxu0
      %v3098 = vadd.f32 %v2878, %v3097
      %v3099 = vpop.f32.mrb[0].mxu0
      %v3100 = vpop.f32.mrb[0].mxu0
      %v3101 = vadd.f32 %v2878, %v3100
      %v3102 = vpop.f32.mrb[0].mxu0
      %3103 = vmatprep.mubr.bf16.mxu0 0
      %3104 = vmatmul.mubr.bf16.gmra.mrb[0].mxu0 %v2945
      %v3105 = vpop.f32.mrb[0].mxu0
      %v3106 = vadd.f32 %v2878, %v3105
      %v3107 = vpop.f32.mrb[0].mxu0
      %v3108 = vpop.f32.mrb[0].mxu0
      %v3109 = vadd.f32 %v2878, %v3108
      %v3110 = vpop.f32.mrb[0].mxu0
      %3111 = vmatprep.mubr.bf16.mxu0 0
      %3112 = vmatmul.mubr.bf16.gmra.mrb[0].mxu0 %v2948
      %v3113 = vpop.f32.mrb[0].mxu0
      %v3114 = vadd.f32 %v2878, %v3113
      %v3115 = vpop.f32.mrb[0].mxu0
      %v3116 = vpop.f32.mrb[0].mxu0
      %v3117 = vadd.f32 %v2878, %v3116
      %v3118 = vpop.f32.mrb[0].mxu0
      %3119 = vmatprep.mubr.bf16.mxu0 0
      %3120 = vmatmul.mubr.bf16.gmra.mrb[0].mxu0 %v2951
      %v3121 = vpop.f32.mrb[0].mxu0
      %v3122 = vadd.f32 %v2878, %v3121
      %v3123 = vpop.f32.mrb[0].mxu0
      %v3124 = vpop.f32.mrb[0].mxu0
      %v3125 = vadd.f32 %v2878, %v3124
      %v3126 = vpop.f32.mrb[0].mxu0
      %3127 = vmatprep.mubr.bf16.mxu0 0
      %3128 = vmatmul.mubr.bf16.gmra.mrb[0].mxu0 %v2954
      %v3129 = vpop.f32.mrb[0].mxu0
      %v3130 = vadd.f32 %v2878, %v3129
      %v3131 = vpop.f32.mrb[0].mxu0
      %v3132 = vpop.f32.mrb[0].mxu0
      %v3133 = vadd.f32 %v2878, %v3132
      %v3134 = vpop.f32.mrb[0].mxu0
      %3135 = vmatprep.mubr.bf16.mxu0 0
      %3136 = vmatmul.mubr.bf16.gmra.mrb[0].mxu0 %v2957
      %v3137 = vpop.f32.mrb[0].mxu0
      %v3138 = vadd.f32 %v2878, %v3137
      %v3139 = vpop.f32.mrb[0].mxu0
      %v3140 = vpop.f32.mrb[0].mxu0
      %v3141 = vadd.f32 %v2878, %v3140
      %v3142 = vpop.f32.mrb[0].mxu0
      %3143 = vmatprep.mubr.bf16.mxu0 0
      %3144 = vmatmul.mubr.bf16.gmra.mrb[0].mxu0 %v2960
      %v3145 = vpop.f32.mrb[0].mxu0
      %v3146 = vadd.f32 %v2878, %v3145
      %v3147 = vpop.f32.mrb[0].mxu0
      %v3148 = vpop.f32.mrb[0].mxu0
      %v3149 = vadd.f32 %v2878, %v3148
      %v3150 = vpop.f32.mrb[0].mxu0
      %3151 = vmatprep.mubr.bf16.mxu0 0
      %3152 = vmatmul.mubr.bf16.gmra.mrb[0].mxu0 %v2963
      %v3153 = vpop.f32.mrb[0].mxu0
      %v3154 = vadd.f32 %v2878, %v3153
      %v3155 = vpop.f32.mrb[0].mxu0
      %v3156 = vpop.f32.mrb[0].mxu0
      %v3157 = vadd.f32 %v2878, %v3156
      %v3158 = vpop.f32.mrb[0].mxu0
      %3159 = vmatprep.mubr.bf16.mxu0 0
      %3160 = vmatmul.mubr.bf16.gmra.mrb[0].mxu0 %v2966
      %v3161 = vpop.f32.mrb[0].mxu0
      %v3162 = vadd.f32 %v2878, %v3161
      %v3163 = vpop.f32.mrb[0].mxu0
      %v3164 = vpop.f32.mrb[0].mxu0
      %v3165 = vadd.f32 %v2878, %v3164
      %v3166 = vpop.f32.mrb[0].mxu0
      %3167 = vmatprep.mubr.bf16.mxu0 0
      %3168 = vmatmul.mubr.bf16.gmra.mrb[0].mxu0 %v2969
      %v3169 = vpop.f32.mrb[0].mxu0
      %v3170 = vadd.f32 %v2878, %v3169
      %v3171 = vpop.f32.mrb[0].mxu0
      %v3172 = vpop.f32.mrb[0].mxu0
      %v3173 = vadd.f32 %v2878, %v3172
      %v3174 = vpop.f32.mrb[0].mxu0
      %3175 = vmatprep.mubr.bf16.mxu0 0
      %3176 = vmatmul.mubr.bf16.gmra.mrb[0].mxu0 %v2972
      %v3177 = vpop.f32.mrb[0].mxu0
      %v3178 = vadd.f32 %v2878, %v3177
      %v3179 = vpop.f32.mrb[0].mxu0
      %v3180 = vpop.f32.mrb[0].mxu0
      %v3181 = vadd.f32 %v2878, %v3180
      %v3182 = vpop.f32.mrb[0].mxu0
      %3183 = vmatprep.mubr.bf16.mxu0 0
      %3184 = vmatmul.mubr.bf16.gmra.mrb[0].mxu0 %v2975
      %v3185 = vpop.f32.mrb[0].mxu0
      %v3186 = vadd.f32 %v2878, %v3185
      %v3187 = vpop.f32.mrb[0].mxu0
      %v3188 = vpop.f32.mrb[0].mxu0
      %v3189 = vadd.f32 %v2878, %v3188
      %v3190 = vpop.f32.mrb[0].mxu0
      %3191 = vmatprep.mubr.bf16.mxu0 0
      %3192 = vmatmul.mubr.bf16.gmra.mrb[0].mxu0 %v2978
      %v3193 = vpop.f32.mrb[0].mxu0
      %v3194 = vadd.f32 %v2878, %v3193
      %v3195 = vpop.f32.mrb[0].mxu0
      %v3196 = vpop.f32.mrb[0].mxu0
      %v3197 = vadd.f32 %v2878, %v3196
      %v3198 = vpop.f32.mrb[0].mxu0
      %3199 = vmatprep.mubr.bf16.mxu0 0
      %3200 = vmatmul.mubr.bf16.gmra.mrb[0].mxu0 %v2981
      %v3201 = vpop.f32.mrb[0].mxu0
      %v3202 = vadd.f32 %v2878, %v3201
      %v3203 = vpop.f32.mrb[0].mxu0
      %v3204 = vpop.f32.mrb[0].mxu0
      %v3205 = vadd.f32 %v2878, %v3204
      %v3206 = vpop.f32.mrb[0].mxu0
      %3207 = vdwg.mxu0
      %v3208 = vxor.u32 %v3018, 2147483648
      %v3209 = vxor.u32 %v3021, 2147483648
      %v3210 = vxor.u32 %v3026, 2147483648
      %v3211 = vxor.u32 %v3029, 2147483648
      %v3212 = vxor.u32 %v3034, 2147483648
      %v3213 = vxor.u32 %v3037, 2147483648
      %v3214 = vxor.u32 %v3042, 2147483648
      %v3215 = vxor.u32 %v3045, 2147483648
      %v3216 = vxor.u32 %v3050, 2147483648
      %v3217 = vxor.u32 %v3053, 2147483648
      %v3218 = vxor.u32 %v3058, 2147483648
      %v3219 = vxor.u32 %v3061, 2147483648
      %v3220 = vxor.u32 %v3066, 2147483648
      %v3221 = vxor.u32 %v3069, 2147483648
      %v3222 = vxor.u32 %v3074, 2147483648
      %v3223 = vxor.u32 %v3077, 2147483648
      %v3224 = vxor.u32 %v3082, 2147483648
      %v3225 = vxor.u32 %v3085, 2147483648
      %v3226 = vxor.u32 %v3090, 2147483648
      %v3227 = vxor.u32 %v3093, 2147483648
      %v3228 = vxor.u32 %v3098, 2147483648
      %v3229 = vxor.u32 %v3101, 2147483648
      %v3230 = vxor.u32 %v3106, 2147483648
      %v3231 = vxor.u32 %v3109, 2147483648
      %v3232 = vxor.u32 %v3114, 2147483648
      %v3233 = vxor.u32 %v3117, 2147483648
      %v3234 = vxor.u32 %v3122, 2147483648
      %v3235 = vxor.u32 %v3125, 2147483648
      %v3236 = vxor.u32 %v3130, 2147483648
      %v3237 = vxor.u32 %v3133, 2147483648
      %v3238 = vxor.u32 %v3138, 2147483648
      %v3239 = vxor.u32 %v3141, 2147483648
      %v3240 = vxor.u32 %v3146, 2147483648
      %v3241 = vxor.u32 %v3149, 2147483648
      %v3242 = vxor.u32 %v3154, 2147483648
      %v3243 = vxor.u32 %v3157, 2147483648
      %v3244 = vxor.u32 %v3162, 2147483648
      %v3245 = vxor.u32 %v3165, 2147483648
      %v3246 = vxor.u32 %v3170, 2147483648
      %v3247 = vxor.u32 %v3173, 2147483648
      %v3248 = vxor.u32 %v3178, 2147483648
      %v3249 = vxor.u32 %v3181, 2147483648
      %v3250 = vxor.u32 %v3186, 2147483648
      %v3251 = vxor.u32 %v3189, 2147483648
      %v3252 = vxor.u32 %v3194, 2147483648
      %v3253 = vxor.u32 %v3197, 2147483648
      %v3254 = vxor.u32 %v3202, 2147483648
      %v3255 = vxor.u32 %v3205, 2147483648
      %v3256 = vmul.f32 %v3208, 1.442695
      %v3257 = vpow.pop %v3256
      %v3258 = vmul.f32 %v3209, 1.442695
      %v3259 = vpow.pop %v3258
      %v3260 = vmul.f32 %v3210, 1.442695
      %v3261 = vpow.pop %v3260
      %v3262 = vmul.f32 %v3211, 1.442695
      %v3263 = vpow.pop %v3262
      %v3264 = vmul.f32 %v3212, 1.442695
      %v3265 = vpow.pop %v3264
      %v3266 = vmul.f32 %v3213, 1.442695
      %v3267 = vpow.pop %v3266
      %v3268 = vmul.f32 %v3214, 1.442695
      %v3269 = vpow.pop %v3268
      %v3270 = vmul.f32 %v3215, 1.442695
      %v3271 = vpow.pop %v3270
      %v3272 = vmul.f32 %v3216, 1.442695
      %v3273 = vpow.pop %v3272
      %v3274 = vmul.f32 %v3217, 1.442695
      %v3275 = vpow.pop %v3274
      %v3276 = vmul.f32 %v3218, 1.442695
      %v3277 = vpow.pop %v3276
      %v3278 = vmul.f32 %v3219, 1.442695
      %v3279 = vpow.pop %v3278
      %v3280 = vmul.f32 %v3220, 1.442695
      %v3281 = vpow.pop %v3280
      %v3282 = vmul.f32 %v3221, 1.442695
      %v3283 = vpow.pop %v3282
      %v3284 = vmul.f32 %v3222, 1.442695
      %v3285 = vpow.pop %v3284
      %v3286 = vmul.f32 %v3223, 1.442695
      %v3287 = vpow.pop %v3286
      %v3288 = vmul.f32 %v3224, 1.442695
      %v3289 = vpow.pop %v3288
      %v3290 = vmul.f32 %v3225, 1.442695
      %v3291 = vpow.pop %v3290
      %v3292 = vmul.f32 %v3226, 1.442695
      %v3293 = vpow.pop %v3292
      %v3294 = vmul.f32 %v3227, 1.442695
      %v3295 = vpow.pop %v3294
      %v3296 = vmul.f32 %v3228, 1.442695
      %v3297 = vpow.pop %v3296
      %v3298 = vmul.f32 %v3229, 1.442695
      %v3299 = vpow.pop %v3298
      %v3300 = vmul.f32 %v3230, 1.442695
      %v3301 = vpow.pop %v3300
      %v3302 = vmul.f32 %v3231, 1.442695
      %v3303 = vpow.pop %v3302
      %v3304 = vmul.f32 %v3232, 1.442695
      %v3305 = vpow.pop %v3304
      %v3306 = vmul.f32 %v3233, 1.442695
      %v3307 = vpow.pop %v3306
      %v3308 = vmul.f32 %v3234, 1.442695
      %v3309 = vpow.pop %v3308
      %v3310 = vmul.f32 %v3235, 1.442695
      %v3311 = vpow.pop %v3310
      %v3312 = vmul.f32 %v3236, 1.442695
      %v3313 = vpow.pop %v3312
      %v3314 = vmul.f32 %v3237, 1.442695
      %v3315 = vpow.pop %v3314
      %v3316 = vmul.f32 %v3238, 1.442695
      %v3317 = vpow.pop %v3316
      %v3318 = vmul.f32 %v3239, 1.442695
      %v3319 = vpow.pop %v3318
      %v3320 = vmul.f32 %v3240, 1.442695
      %v3321 = vpow.pop %v3320
      %v3322 = vmul.f32 %v3241, 1.442695
      %v3323 = vpow.pop %v3322
      %v3324 = vmul.f32 %v3242, 1.442695
      %v3325 = vpow.pop %v3324
      %v3326 = vmul.f32 %v3243, 1.442695
      %v3327 = vpow.pop %v3326
      %v3328 = vmul.f32 %v3244, 1.442695
      %v3329 = vpow.pop %v3328
      %v3330 = vmul.f32 %v3245, 1.442695
      %v3331 = vpow.pop %v3330
      %v3332 = vmul.f32 %v3246, 1.442695
      %v3333 = vpow.pop %v3332
      %v3334 = vmul.f32 %v3247, 1.442695
      %v3335 = vpow.pop %v3334
      %v3336 = vmul.f32 %v3248, 1.442695
      %v3337 = vpow.pop %v3336
      %v3338 = vmul.f32 %v3249, 1.442695
      %v3339 = vpow.pop %v3338
      %v3340 = vmul.f32 %v3250, 1.442695
      %v3341 = vpow.pop %v3340
      %v3342 = vmul.f32 %v3251, 1.442695
      %v3343 = vpow.pop %v3342
      %v3344 = vmul.f32 %v3252, 1.442695
      %v3345 = vpow.pop %v3344
      %v3346 = vmul.f32 %v3253, 1.442695
      %v3347 = vpow.pop %v3346
      %v3348 = vmul.f32 %v3254, 1.442695
      %v3349 = vpow.pop %v3348
      %v3350 = vmul.f32 %v3255, 1.442695
      %v3351 = vpow.pop %v3350
      %v3352 = vadd.f32 %v3257, 1.0
      %v3353 = vadd.f32 %v3259, 1.0
      %v3354 = vadd.f32 %v3261, 1.0
      %v3355 = vadd.f32 %v3263, 1.0
      %v3356 = vadd.f32 %v3265, 1.0
      %v3357 = vadd.f32 %v3267, 1.0
      %v3358 = vadd.f32 %v3269, 1.0
      %v3359 = vadd.f32 %v3271, 1.0
      %v3360 = vadd.f32 %v3273, 1.0
      %v3361 = vadd.f32 %v3275, 1.0
      %v3362 = vadd.f32 %v3277, 1.0
      %v3363 = vadd.f32 %v3279, 1.0
      %v3364 = vadd.f32 %v3281, 1.0
      %v3365 = vadd.f32 %v3283, 1.0
      %v3366 = vadd.f32 %v3285, 1.0
      %v3367 = vadd.f32 %v3287, 1.0
      %v3368 = vadd.f32 %v3289, 1.0
      %v3369 = vadd.f32 %v3291, 1.0
      %v3370 = vadd.f32 %v3293, 1.0
      %v3371 = vadd.f32 %v3295, 1.0
      %v3372 = vadd.f32 %v3297, 1.0
      %v3373 = vadd.f32 %v3299, 1.0
      %v3374 = vadd.f32 %v3301, 1.0
      %v3375 = vadd.f32 %v3303, 1.0
      %v3376 = vadd.f32 %v3305, 1.0
      %v3377 = vadd.f32 %v3307, 1.0
      %v3378 = vadd.f32 %v3309, 1.0
      %v3379 = vadd.f32 %v3311, 1.0
      %v3380 = vadd.f32 %v3313, 1.0
      %v3381 = vadd.f32 %v3315, 1.0
      %v3382 = vadd.f32 %v3317, 1.0
      %v3383 = vadd.f32 %v3319, 1.0
      %v3384 = vadd.f32 %v3321, 1.0
      %v3385 = vadd.f32 %v3323, 1.0
      %v3386 = vadd.f32 %v3325, 1.0
      %v3387 = vadd.f32 %v3327, 1.0
      %v3388 = vadd.f32 %v3329, 1.0
      %v3389 = vadd.f32 %v3331, 1.0
      %v3390 = vadd.f32 %v3333, 1.0
      %v3391 = vadd.f32 %v3335, 1.0
      %v3392 = vadd.f32 %v3337, 1.0
      %v3393 = vadd.f32 %v3339, 1.0
      %v3394 = vadd.f32 %v3341, 1.0
      %v3395 = vadd.f32 %v3343, 1.0
      %v3396 = vadd.f32 %v3345, 1.0
      %v3397 = vadd.f32 %v3347, 1.0
      %v3398 = vadd.f32 %v3349, 1.0
      %v3399 = vadd.f32 %v3351, 1.0
      %v3400 = vrcp.pop %v3352
      %v3401 = vmul.f32 1.0, %v3400
      %v3402 = vrcp.pop %v3353
      %v3403 = vmul.f32 1.0, %v3402
      %v3404 = vrcp.pop %v3354
      %v3405 = vmul.f32 1.0, %v3404
      %v3406 = vrcp.pop %v3355
      %v3407 = vmul.f32 1.0, %v3406
      %v3408 = vrcp.pop %v3356
      %v3409 = vmul.f32 1.0, %v3408
      %v3410 = vrcp.pop %v3357
      %v3411 = vmul.f32 1.0, %v3410
      %v3412 = vrcp.pop %v3358
      %v3413 = vmul.f32 1.0, %v3412
      %v3414 = vrcp.pop %v3359
      %v3415 = vmul.f32 1.0, %v3414
      %v3416 = vrcp.pop %v3360
      %v3417 = vmul.f32 1.0, %v3416
      %v3418 = vrcp.pop %v3361
      %v3419 = vmul.f32 1.0, %v3418
      %v3420 = vrcp.pop %v3362
      %v3421 = vmul.f32 1.0, %v3420
      %v3422 = vrcp.pop %v3363
      %v3423 = vmul.f32 1.0, %v3422
      %v3424 = vrcp.pop %v3364
      %v3425 = vmul.f32 1.0, %v3424
      %v3426 = vrcp.pop %v3365
      %v3427 = vmul.f32 1.0, %v3426
      %v3428 = vrcp.pop %v3366
      %v3429 = vmul.f32 1.0, %v3428
      %v3430 = vrcp.pop %v3367
      %v3431 = vmul.f32 1.0, %v3430
      %v3432 = vrcp.pop %v3368
      %v3433 = vmul.f32 1.0, %v3432
      %v3434 = vrcp.pop %v3369
      %v3435 = vmul.f32 1.0, %v3434
      %v3436 = vrcp.pop %v3370
      %v3437 = vmul.f32 1.0, %v3436
      %v3438 = vrcp.pop %v3371
      %v3439 = vmul.f32 1.0, %v3438
      %v3440 = vrcp.pop %v3372
      %v3441 = vmul.f32 1.0, %v3440
      %v3442 = vrcp.pop %v3373
      %v3443 = vmul.f32 1.0, %v3442
      %v3444 = vrcp.pop %v3374
      %v3445 = vmul.f32 1.0, %v3444
      %v3446 = vrcp.pop %v3375
      %v3447 = vmul.f32 1.0, %v3446
      %v3448 = vrcp.pop %v3376
      %v3449 = vmul.f32 1.0, %v3448
      %v3450 = vrcp.pop %v3377
      %v3451 = vmul.f32 1.0, %v3450
      %v3452 = vrcp.pop %v3378
      %v3453 = vmul.f32 1.0, %v3452
      %v3454 = vrcp.pop %v3379
      %v3455 = vmul.f32 1.0, %v3454
      %v3456 = vrcp.pop %v3380
      %v3457 = vmul.f32 1.0, %v3456
      %v3458 = vrcp.pop %v3381
      %v3459 = vmul.f32 1.0, %v3458
      %v3460 = vrcp.pop %v3382
      %v3461 = vmul.f32 1.0, %v3460
      %v3462 = vrcp.pop %v3383
      %v3463 = vmul.f32 1.0, %v3462
      %v3464 = vrcp.pop %v3384
      %v3465 = vmul.f32 1.0, %v3464
      %v3466 = vrcp.pop %v3385
      %v3467 = vmul.f32 1.0, %v3466
      %v3468 = vrcp.pop %v3386
      %v3469 = vmul.f32 1.0, %v3468
      %v3470 = vrcp.pop %v3387
      %v3471 = vmul.f32 1.0, %v3470
      %v3472 = vrcp.pop %v3388
      %v3473 = vmul.f32 1.0, %v3472
      %v3474 = vrcp.pop %v3389
      %v3475 = vmul.f32 1.0, %v3474
      %v3476 = vrcp.pop %v3390
      %v3477 = vmul.f32 1.0, %v3476
      %v3478 = vrcp.pop %v3391
      %v3479 = vmul.f32 1.0, %v3478
      %v3480 = vrcp.pop %v3392
      %v3481 = vmul.f32 1.0, %v3480
      %v3482 = vrcp.pop %v3393
      %v3483 = vmul.f32 1.0, %v3482
      %v3484 = vrcp.pop %v3394
      %v3485 = vmul.f32 1.0, %v3484
      %v3486 = vrcp.pop %v3395
      %v3487 = vmul.f32 1.0, %v3486
      %v3488 = vrcp.pop %v3396
      %v3489 = vmul.f32 1.0, %v3488
      %v3490 = vrcp.pop %v3397
      %v3491 = vmul.f32 1.0, %v3490
      %v3492 = vrcp.pop %v3398
      %v3493 = vmul.f32 1.0, %v3492
      %v3494 = vrcp.pop %v3399
      %v3495 = vmul.f32 1.0, %v3494
      %vm3496 = vcmask 7168
      %3497 = vst.msk [vmem:[%s282] sm:$0xff] %vm3496, %v3401
      %3498 = vst.msk [vmem:[%s282 + $0x8] sm:$0xff] %vm3496, %v3403
      %3499 = vst.msk [vmem:[%s282 + $0x10] sm:$0xff] %vm3496, %v3405
      %3500 = vst.msk [vmem:[%s282 + $0x18] sm:$0xff] %vm3496, %v3407
      %3501 = vst.msk [vmem:[%s282 + $0x20] sm:$0xff] %vm3496, %v3409
      %3502 = vst.msk [vmem:[%s282 + $0x28] sm:$0xff] %vm3496, %v3411
      %3503 = vst.msk [vmem:[%s282 + $0x30] sm:$0xff] %vm3496, %v3413
      %3504 = vst.msk [vmem:[%s282 + $0x38] sm:$0xff] %vm3496, %v3415
      %3505 = vst.msk [vmem:[%s282 + $0x40] sm:$0xff] %vm3496, %v3417
      %3506 = vst.msk [vmem:[%s282 + $0x48] sm:$0xff] %vm3496, %v3419
      %3507 = vst.msk [vmem:[%s282 + $0x50] sm:$0xff] %vm3496, %v3421
      %3508 = vst.msk [vmem:[%s282 + $0x58] sm:$0xff] %vm3496, %v3423
      %3509 = vst.msk [vmem:[%s282 + $0x60] sm:$0xff] %vm3496, %v3425
      %3510 = vst.msk [vmem:[%s282 + $0x68] sm:$0xff] %vm3496, %v3427
      %3511 = vst.msk [vmem:[%s282 + $0x70] sm:$0xff] %vm3496, %v3429
      %3512 = vst.msk [vmem:[%s282 + $0x78] sm:$0xff] %vm3496, %v3431
      %3513 = vst.msk [vmem:[%s282 + $0x80] sm:$0xff] %vm3496, %v3433
      %3514 = vst.msk [vmem:[%s282 + $0x88] sm:$0xff] %vm3496, %v3435
      %3515 = vst.msk [vmem:[%s282 + $0x90] sm:$0xff] %vm3496, %v3437
      %3516 = vst.msk [vmem:[%s282 + $0x98] sm:$0xff] %vm3496, %v3439
      %3517 = vst.msk [vmem:[%s282 + $0xa0] sm:$0xff] %vm3496, %v3441
      %3518 = vst.msk [vmem:[%s282 + $0xa8] sm:$0xff] %vm3496, %v3443
      %3519 = vst.msk [vmem:[%s282 + $0xb0] sm:$0xff] %vm3496, %v3445
      %3520 = vst.msk [vmem:[%s282 + $0xb8] sm:$0xff] %vm3496, %v3447
      %3521 = vst.msk [vmem:[%s282 + $0xc0] sm:$0xff] %vm3496, %v3449
      %3522 = vst.msk [vmem:[%s282 + $0xc8] sm:$0xff] %vm3496, %v3451
      %3523 = vst.msk [vmem:[%s282 + $0xd0] sm:$0xff] %vm3496, %v3453
      %3524 = vst.msk [vmem:[%s282 + $0xd8] sm:$0xff] %vm3496, %v3455
      %3525 = vst.msk [vmem:[%s282 + $0xe0] sm:$0xff] %vm3496, %v3457
      %3526 = vst.msk [vmem:[%s282 + $0xe8] sm:$0xff] %vm3496, %v3459
      %3527 = vst.msk [vmem:[%s282 + $0xf0] sm:$0xff] %vm3496, %v3461
      %3528 = vst.msk [vmem:[%s282 + $0xf8] sm:$0xff] %vm3496, %v3463
      %3529 = vst.msk [vmem:[%s282 + $0x100] sm:$0xff] %vm3496, %v3465
      %3530 = vst.msk [vmem:[%s282 + $0x108] sm:$0xff] %vm3496, %v3467
      %3531 = vst.msk [vmem:[%s282 + $0x110] sm:$0xff] %vm3496, %v3469
      %3532 = vst.msk [vmem:[%s282 + $0x118] sm:$0xff] %vm3496, %v3471
      %3533 = vst.msk [vmem:[%s282 + $0x120] sm:$0xff] %vm3496, %v3473
      %3534 = vst.msk [vmem:[%s282 + $0x128] sm:$0xff] %vm3496, %v3475
      %3535 = vst.msk [vmem:[%s282 + $0x130] sm:$0xff] %vm3496, %v3477
      %3536 = vst.msk [vmem:[%s282 + $0x138] sm:$0xff] %vm3496, %v3479
      %3537 = vst.msk [vmem:[%s282 + $0x140] sm:$0xff] %vm3496, %v3481
      %3538 = vst.msk [vmem:[%s282 + $0x148] sm:$0xff] %vm3496, %v3483
      %3539 = vst.msk [vmem:[%s282 + $0x150] sm:$0xff] %vm3496, %v3485
      %3540 = vst.msk [vmem:[%s282 + $0x158] sm:$0xff] %vm3496, %v3487
      %3541 = vst.msk [vmem:[%s282 + $0x160] sm:$0xff] %vm3496, %v3489
      %3542 = vst.msk [vmem:[%s282 + $0x168] sm:$0xff] %vm3496, %v3491
      %3543 = vst.msk [vmem:[%s282 + $0x170] sm:$0xff] %vm3496, %v3493
      %3544 = vst.msk [vmem:[%s282 + $0x178] sm:$0xff] %vm3496, %v3495
      %s3545 = smul.u32 48, %s20
      %p3546 = scmp.lt.s32.totalorder %s3545, 95
      %s3547 = scalar_select %p3546, %s3545, 95
      %s3548 = smul.addr %s3547, 8
      %s3549 = scalar_lea.vmem %s7, %s3548
      // Predicated region
      $region49: #{tpu_custom_call.1} parent=47 // pred_check
        %p3550 = pneg %p190
      $region50: #{tpu_custom_call.1} parent=47 // pred_check_branch
        %3552 = sbr.rel (%p3550) target = $region52
      $region51: #{tpu_custom_call.1} parent=47 // pred_region
        %s3553 = smul.u32 48, %s20
      $region52: #{tpu_custom_call.1} parent=47 // pred_fallthru
        _
    $region48: #{tpu_custom_call.1} parent=5 // pred_fallthru
      _
    %p3554 = scmp.le.s32.totalorder 2, %s15
    // Predicated region
    $region53: #{tpu_custom_call.1} parent=5 // pred_check
      %p3555 = pneg %p3554
    $region54: #{tpu_custom_call.1} parent=5 // pred_check_branch
      %3557 = sbr.rel (%p3555) target = $region56
    $region55: #{tpu_custom_call.1} parent=5 // pred_region
      %s3558 = ssub.s32 %s15, 2
      // Predicated region
      $region57: #{tpu_custom_call.1} parent=55 // pred_check
        %p3559 = pneg %p196
      $region58: #{tpu_custom_call.1} parent=55 // pred_check_branch
        %3561 = sbr.rel (%p3559) target = $region60
      $region59: #{tpu_custom_call.1} parent=55 // pred_region
        %s3562 = smul.u32 48, %s21
        %p3563 = scmp.lt.s32.totalorder %s3562, 95
        %s3564 = scalar_select %p3563, %s3562, 95
        %s3565 = smul.addr %s3564, 8
        %s3566 = scalar_lea.vmem %s7, %s3565
      $region60: #{tpu_custom_call.1} parent=55 // pred_fallthru
        _
    $region56: #{tpu_custom_call.1} parent=5 // pred_fallthru
      _
  $region6: #{tpu_custom_call.1} parent=0 // loop_footer
    %s19 = sadd.s32 1, %s15
  $region7: #{tpu_custom_call.1} parent=0 // loop_footer_branch
    %14 = sbr.rel target = $region3
  $region8: #{tpu_custom_call.1} parent=0 // loop_exit
    _

</llo_original>
